<compile_context>
chip_gen: v5e
topology: v5e:2x2
jax: 0.10.0
libtpu: 0.0.40
codegen_flags: <defaults>
</compile_context>

<pallas_src>
import math

import jax
import jax.numpy as jnp
from jax import lax
from jax.experimental import pallas as pl
from jax.experimental.pallas import tpu as pltpu

LN_EPS = 1e-5  # nn.LayerNorm default


def _num_tensorcores_per_chip() -> int:
    """Best-effort: 2 on v7x-class chips (2 TC/chip), else 1.  Safe fallback = 1."""
    try:
        kind = jax.devices()[0].device_kind.lower()
    except Exception:
        return 1
    return 2 if ("v7" in kind or "7x" in kind) else 1


# ----------------------------------------------------------------------------
# Fused Block forward (Pallas)
# ----------------------------------------------------------------------------
def block_forward(x, params, num_heads, batch_block=None):
    """x: (B, S, D) float32 -> (B, S, D) float32."""
    B, S, D = x.shape
    (g1, be1, wqkv, bqkv, wo_w, bo, g2, be2, w1, bm1, w2, bm2) = params
    I = w1.shape[1]
    assert D % num_heads == 0
    hd = D // num_heads
    sm_scale = 1.0 / math.sqrt(hd)

    if batch_block is None:
        # 2-way parallel grid only where there are 2 TensorCores to feed (v7x);
        # otherwise collapse the whole batch into one fat slab of matmul rows.
        tc = _num_tensorcores_per_chip()
        batch_block = B // 2 if (tc >= 2 and B >= 2 and B % 2 == 0) else B
    B_blk = batch_block
    assert B % B_blk == 0
    n_blocks = B // B_blk
    R = B_blk * S                       # matmul rows per grid step
    N = B_blk * num_heads               # batched-attention "n" dimension

    def kernel(x_ref, g1_ref, be1_ref, wqkv_ref, bqkv_ref, wo_ref, bo_ref,
               g2_ref, be2_ref, w1_ref, bm1_ref, w2_ref, bm2_ref, o_ref):
        xb = x_ref[...].reshape(R, D)                           # (R, D) f32

        def layer_norm(v, g, b):
            mu = jnp.mean(v, axis=-1, keepdims=True)
            c = v - mu
            var = jnp.mean(c * c, axis=-1, keepdims=True)
            return c * lax.rsqrt(var + LN_EPS) * g + b

        # ---- attention branch: LN1 -> fused QKV (one fat matmul) ----
        h1 = layer_norm(xb, g1_ref[...], be1_ref[...])
        qkv = jnp.dot(h1.astype(jnp.bfloat16), wqkv_ref[...],
                      preferred_element_type=jnp.float32) + bqkv_ref[...]   # (R, 3D) f32

        def to_heads(m):                                        # (R, D) -> (N, S, hd) bf16
            m4 = m.reshape(B_blk, S, num_heads, hd)
            m4 = jnp.transpose(m4, (0, 2, 1, 3))                # (B_blk, H, S, hd)
            return m4.reshape(N, S, hd).astype(jnp.bfloat16)

        q = to_heads(qkv[:, :D])                                # lane-aligned 128-wide slices
        k = to_heads(qkv[:, D:2 * D])
        v = to_heads(qkv[:, 2 * D:])

        # ---- head-batched scaled-dot-product attention (two einsums total) ----
        s = jnp.einsum('nqd,nkd->nqk', q, k,
                       preferred_element_type=jnp.float32) * sm_scale       # (N, S, S) f32
        s = s - jnp.max(s, axis=-1, keepdims=True)
        p = jnp.exp(s)
        p = p * pl.reciprocal(jnp.sum(p, axis=-1, keepdims=True), approx=True)
        ctx = jnp.einsum('nqk,nkd->nqd', p.astype(jnp.bfloat16), v,
                         preferred_element_type=jnp.float32)                # (N, S, hd) f32

        # re-assemble heads into (R, D) and run ONE full-width output projection
        ctx = ctx.reshape(B_blk, num_heads, S, hd)
        ctx = jnp.transpose(ctx, (0, 2, 1, 3)).reshape(R, D)
        attn = jnp.dot(ctx.astype(jnp.bfloat16), wo_ref[...],
                       preferred_element_type=jnp.float32) + bo_ref[...]    # (R, D) f32
        x1 = xb + attn                                          # residual 1

        # ---- MLP branch: LN2 -> dense -> NewGELU(tanh) -> dense ----
        h2 = layer_norm(x1, g2_ref[...], be2_ref[...])
        z = jnp.dot(h2.astype(jnp.bfloat16), w1_ref[...],
                    preferred_element_type=jnp.float32) + bm1_ref[...]      # (R, I) f32
        z = 0.5 * z * (1.0 + jnp.tanh(0.7978845608028654 * (z + 0.044715 * z * z * z)))
        mlp = jnp.dot(z.astype(jnp.bfloat16), w2_ref[...],
                      preferred_element_type=jnp.float32) + bm2_ref[...]    # (R, D) f32

        o_ref[...] = (x1 + mlp).reshape(B_blk, S, D)            # residual 2, lane-dense store

    def full_spec(shape):
        return pl.BlockSpec(shape, lambda i: (0,) * len(shape))

    # VMEM budget derived from actual buffer sizes (weights double-buffered by the
    # pipeline, generous headroom for f32 intermediates), clamped below v7x's 64 MiB.
    w_bytes = 2 * (D * 3 * D + D * D + D * I + I * D)                       # bf16 weights
    a_bytes = 4 * R * (10 * D + 2 * I) + 4 * N * S * S * 3                  # f32 activations
    vmem_limit = int(min(64 << 20, max(8 << 20, 2 * w_bytes + 4 * a_bytes + (4 << 20))))

    return pl.pallas_call(
        kernel,
        out_shape=jax.ShapeDtypeStruct((B, S, D), jnp.float32),
        grid=(n_blocks,),
        in_specs=[
            pl.BlockSpec((B_blk, S, D), lambda i: (i, 0, 0)),   # x (per-block slab)
            full_spec((1, D)), full_spec((1, D)),               # LN1 gamma/beta
            full_spec((D, 3 * D)), full_spec((1, 3 * D)),       # fused QKV weight/bias
            full_spec((D, D)), full_spec((1, D)),               # output projection
            full_spec((1, D)), full_spec((1, D)),               # LN2 gamma/beta
            full_spec((D, I)), full_spec((1, I)),               # MLP dense_1
            full_spec((I, D)), full_spec((1, D)),               # MLP dense_2
        ],
        out_specs=pl.BlockSpec((B_blk, S, D), lambda i: (i, 0, 0)),
        compiler_params=pltpu.CompilerParams(
            dimension_semantics=("parallel",),
            vmem_limit_bytes=vmem_limit,
        ),
    )(x, g1, be1, wqkv, bqkv, wo_w, bo, g2, be2, w1, bm1, w2, bm2)


# ----------------------------------------------------------------------------
# Pure-JAX f32 reference (mirrors the PyTorch module) for a tolerance check
# ----------------------------------------------------------------------------
def block_reference(x, params, num_heads):
    (g1, be1, wqkv, bqkv, wo_w, bo, g2, be2, w1, bm1, w2, bm2) = params
    B, S, D = x.shape
    hd = D // num_heads
    f32 = jnp.float32

    def ln(v, g, b):
        mu = v.mean(-1, keepdims=True)
        var = ((v - mu) ** 2).mean(-1, keepdims=True)
        return (v - mu) / jnp.sqrt(var + LN_EPS) * g + b

    h = ln(x, g1, be1)
    qkv = h @ wqkv.astype(f32) + bqkv
    q, k, v = jnp.split(qkv, 3, axis=-1)
    q = q.reshape(B, S, num_heads, hd).transpose(0, 2, 1, 3)
    k = k.reshape(B, S, num_heads, hd).transpose(0, 2, 1, 3)
    v = v.reshape(B, S, num_heads, hd).transpose(0, 2, 1, 3)
    s = jnp.einsum('bhqd,bhkd->bhqk', q, k) / math.sqrt(hd)
    p = jax.nn.softmax(s, axis=-1)
    ctx = jnp.einsum('bhqk,bhkd->bhqd', p, v).transpose(0, 2, 1, 3).reshape(B, S, D)
    x1 = x + ctx @ wo_w.astype(f32) + bo
    h2 = ln(x1, g2, be2)
    z = h2 @ w1.astype(f32) + bm1
    z = 0.5 * z * (1.0 + jnp.tanh(math.sqrt(2.0 / math.pi) * (z + 0.044715 * z ** 3)))
    return x1 + z @ w2.astype(f32) + bm2


# ----------------------------------------------------------------------------
# Deterministic parameter construction (mirrors nn.Module shapes; weights in bf16)
# ----------------------------------------------------------------------------
def make_params(key, emb, inter):
    ks = jax.random.split(key, 12)

    def lin_w(k, fan_in, shape):
        w = jax.random.normal(k, shape, jnp.float32) * (1.0 / math.sqrt(fan_in))
        return w.astype(jnp.bfloat16)              # MXU-native storage

    g1 = 1.0 + 0.05 * jax.random.normal(ks[0], (1, emb), jnp.float32)
    be1 = 0.05 * jax.random.normal(ks[1], (1, emb), jnp.float32)
    wqkv = lin_w(ks[2], emb, (emb, 3 * emb))
    bqkv = 0.02 * jax.random.normal(ks[3], (1, 3 * emb), jnp.float32)
    wo_w = lin_w(ks[4], emb, (emb, emb))
    bo = 0.02 * jax.random.normal(ks[5], (1, emb), jnp.float32)
    g2 = 1.0 + 0.05 * jax.random.normal(ks[6], (1, emb), jnp.float32)
    be2 = 0.05 * jax.random.normal(ks[7], (1, emb), jnp.float32)
    w1 = lin_w(ks[8], emb, (emb, inter))
    bm1 = 0.02 * jax.random.normal(ks[9], (1, inter), jnp.float32)
    w2 = lin_w(ks[10], inter, (inter, emb))
    bm2 = 0.02 * jax.random.normal(ks[11], (1, emb), jnp.float32)
    return (g1, be1, wqkv, bqkv, wo_w, bo, g2, be2, w1, bm1, w2, bm2)


# ----------------------------------------------------------------------------
if __name__ == "__main__":
    BATCH, SEQ, EMB, HEADS, INTER = 2, 16, 128, 4, 256   # emb divisible by heads; lane-dense

    key = jax.random.PRNGKey(0)
    k_params, k_input = jax.random.split(key)

    params = make_params(k_params, EMB, INTER)
    x = jax.random.normal(k_input, (BATCH, SEQ, EMB), jnp.float32)

    out = jax.block_until_ready(block_forward(x, params, HEADS))

    assert out.shape == (BATCH, SEQ, EMB), out.shape
    assert bool(jnp.all(jnp.isfinite(out)))

    # bf16-MXU kernel vs f32 reference (same bf16-rounded weights) — loose tolerance.
    ref = block_reference(x, params, HEADS)
    max_err = float(jnp.max(jnp.abs(out - ref)))
    assert max_err < 1e-1, f"max abs err vs reference: {max_err}"

    print("KERNEL_OK")
</pallas_src>

<mosaic_0001>
module attributes {stable_mosaic.version = 11 : i64} {
  func.func @kernel(%arg0: i32, %arg1: memref<2x16x128xf32, #tpu.memory_space<vmem>>, %arg2: memref<1x128xf32, #tpu.memory_space<vmem>>, %arg3: memref<1x128xf32, #tpu.memory_space<vmem>>, %arg4: memref<128x384xbf16, #tpu.memory_space<vmem>>, %arg5: memref<1x384xf32, #tpu.memory_space<vmem>>, %arg6: memref<128x128xbf16, #tpu.memory_space<vmem>>, %arg7: memref<1x128xf32, #tpu.memory_space<vmem>>, %arg8: memref<1x128xf32, #tpu.memory_space<vmem>>, %arg9: memref<1x128xf32, #tpu.memory_space<vmem>>, %arg10: memref<128x256xbf16, #tpu.memory_space<vmem>>, %arg11: memref<1x256xf32, #tpu.memory_space<vmem>>, %arg12: memref<256x128xbf16, #tpu.memory_space<vmem>>, %arg13: memref<1x128xf32, #tpu.memory_space<vmem>>, %arg14: memref<2x16x128xf32, #tpu.memory_space<vmem>>) attributes {dimension_semantics = [#tpu.dimension_semantics<parallel>], iteration_bounds = array<i64: 1>, scalar_prefetch = 0 : i64, scratch_operands = 0 : i64, tpu.core_type = #tpu.core_type<tc>, window_params = [{transform_indices = @transform_0, window_bounds = array<i64: 2, 16, 128>}, {pipeline_mode = #tpu.pipeline_mode<synchronous>, transform_indices = @transform_1, window_bounds = array<i64: 1, 128>}, {pipeline_mode = #tpu.pipeline_mode<synchronous>, transform_indices = @transform_2, window_bounds = array<i64: 1, 128>}, {pipeline_mode = #tpu.pipeline_mode<synchronous>, transform_indices = @transform_3, window_bounds = array<i64: 128, 384>}, {pipeline_mode = #tpu.pipeline_mode<synchronous>, transform_indices = @transform_4, window_bounds = array<i64: 1, 384>}, {pipeline_mode = #tpu.pipeline_mode<synchronous>, transform_indices = @transform_5, window_bounds = array<i64: 128, 128>}, {pipeline_mode = #tpu.pipeline_mode<synchronous>, transform_indices = @transform_6, window_bounds = array<i64: 1, 128>}, {pipeline_mode = #tpu.pipeline_mode<synchronous>, transform_indices = @transform_7, window_bounds = array<i64: 1, 128>}, {pipeline_mode = #tpu.pipeline_mode<synchronous>, transform_indices = @transform_8, window_bounds = array<i64: 1, 128>}, {pipeline_mode = #tpu.pipeline_mode<synchronous>, transform_indices = @transform_9, window_bounds = array<i64: 128, 256>}, {pipeline_mode = #tpu.pipeline_mode<synchronous>, transform_indices = @transform_10, window_bounds = array<i64: 1, 256>}, {pipeline_mode = #tpu.pipeline_mode<synchronous>, transform_indices = @transform_11, window_bounds = array<i64: 256, 128>}, {pipeline_mode = #tpu.pipeline_mode<synchronous>, transform_indices = @transform_12, window_bounds = array<i64: 1, 128>}, {transform_indices = @transform_13, window_bounds = array<i64: 2, 16, 128>}]} {
    %c0 = arith.constant 0 : index
    %c0_0 = arith.constant 0 : index
    %c0_1 = arith.constant 0 : index
    %0 = vector.load %arg1[%c0, %c0_0, %c0_1] : memref<2x16x128xf32, #tpu.memory_space<vmem>>, vector<2x16x128xf32>
    %1 = vector.shape_cast %0 : vector<2x16x128xf32> to vector<32x128xf32>
    %c0_2 = arith.constant 0 : index
    %c0_3 = arith.constant 0 : index
    %2 = vector.load %arg2[%c0_2, %c0_3] : memref<1x128xf32, #tpu.memory_space<vmem>>, vector<1x128xf32>
    %c0_4 = arith.constant 0 : index
    %c0_5 = arith.constant 0 : index
    %3 = vector.load %arg3[%c0_4, %c0_5] : memref<1x128xf32, #tpu.memory_space<vmem>>, vector<1x128xf32>
    %cst = arith.constant dense<0.000000e+00> : vector<32xf32>
    %4 = vector.multi_reduction <add>, %1, %cst [1] : vector<32x128xf32> to vector<32xf32>
    %5 = vector.shape_cast %4 : vector<32xf32> to vector<32x1xf32>
    %cst_6 = arith.constant 1.280000e+02 : f32
    %6 = vector.broadcast %cst_6 : f32 to vector<32x1xf32>
    %7 = arith.divf %5, %6 : vector<32x1xf32>
    %8 = vector.broadcast %7 : vector<32x1xf32> to vector<32x128xf32>
    %9 = arith.subf %1, %8 : vector<32x128xf32>
    %10 = arith.mulf %9, %9 : vector<32x128xf32>
    %cst_7 = arith.constant dense<0.000000e+00> : vector<32xf32>
    %11 = vector.multi_reduction <add>, %10, %cst_7 [1] : vector<32x128xf32> to vector<32xf32>
    %12 = vector.shape_cast %11 : vector<32xf32> to vector<32x1xf32>
    %cst_8 = arith.constant 1.280000e+02 : f32
    %13 = vector.broadcast %cst_8 : f32 to vector<32x1xf32>
    %14 = arith.divf %12, %13 : vector<32x1xf32>
    %cst_9 = arith.constant 9.99999974E-6 : f32
    %15 = vector.broadcast %cst_9 : f32 to vector<32x1xf32>
    %16 = arith.addf %14, %15 : vector<32x1xf32>
    %17 = math.rsqrt %16 : vector<32x1xf32>
    %18 = vector.broadcast %17 : vector<32x1xf32> to vector<32x128xf32>
    %19 = arith.mulf %9, %18 : vector<32x128xf32>
    %20 = vector.broadcast %2 : vector<1x128xf32> to vector<32x128xf32>
    %21 = arith.mulf %19, %20 : vector<32x128xf32>
    %22 = vector.broadcast %3 : vector<1x128xf32> to vector<32x128xf32>
    %23 = arith.addf %21, %22 : vector<32x128xf32>
    %24 = arith.truncf %23 : vector<32x128xf32> to vector<32x128xbf16>
    %c0_10 = arith.constant 0 : index
    %c0_11 = arith.constant 0 : index
    %25 = vector.load %arg4[%c0_10, %c0_11] : memref<128x384xbf16, #tpu.memory_space<vmem>>, vector<128x384xbf16>
    %cst_12 = arith.constant dense<0.000000e+00> : vector<32x384xf32>
    %26 = tpu.matmul %24, %25, %cst_12 {dimension_numbers = #tpu.dot_dimension_numbers<[1], [0], [0], [1], [0, 0, 1, 1], [], []>} : vector<32x128xbf16>, vector<128x384xbf16>, vector<32x384xf32> -> vector<32x384xf32>
    %c0_13 = arith.constant 0 : index
    %c0_14 = arith.constant 0 : index
    %27 = vector.load %arg5[%c0_13, %c0_14] : memref<1x384xf32, #tpu.memory_space<vmem>>, vector<1x384xf32>
    %28 = vector.broadcast %27 : vector<1x384xf32> to vector<32x384xf32>
    %29 = arith.addf %26, %28 : vector<32x384xf32>
    %30 = vector.extract_strided_slice %29 {offsets = [0, 0], sizes = [32, 128], strides = [1, 1]} : vector<32x384xf32> to vector<32x128xf32>
    %31 = vector.shape_cast %30 : vector<32x128xf32> to vector<2x16x4x32xf32>
    %32 = tpu.transpose %31, [0, 2, 1, 3] : vector<2x16x4x32xf32> -> vector<2x4x16x32xf32>
    %33 = vector.shape_cast %32 : vector<2x4x16x32xf32> to vector<8x16x32xf32>
    %34 = arith.truncf %33 : vector<8x16x32xf32> to vector<8x16x32xbf16>
    %35 = vector.extract_strided_slice %29 {offsets = [0, 128], sizes = [32, 128], strides = [1, 1]} : vector<32x384xf32> to vector<32x128xf32>
    %36 = vector.shape_cast %35 : vector<32x128xf32> to vector<2x16x4x32xf32>
    %37 = tpu.transpose %36, [0, 2, 1, 3] : vector<2x16x4x32xf32> -> vector<2x4x16x32xf32>
    %38 = vector.shape_cast %37 : vector<2x4x16x32xf32> to vector<8x16x32xf32>
    %39 = arith.truncf %38 : vector<8x16x32xf32> to vector<8x16x32xbf16>
    %40 = vector.extract_strided_slice %29 {offsets = [0, 256], sizes = [32, 128], strides = [1, 1]} : vector<32x384xf32> to vector<32x128xf32>
    %41 = vector.shape_cast %40 : vector<32x128xf32> to vector<2x16x4x32xf32>
    %42 = tpu.transpose %41, [0, 2, 1, 3] : vector<2x16x4x32xf32> -> vector<2x4x16x32xf32>
    %43 = vector.shape_cast %42 : vector<2x4x16x32xf32> to vector<8x16x32xf32>
    %44 = arith.truncf %43 : vector<8x16x32xf32> to vector<8x16x32xbf16>
    "tpu.trace_start"() <{level = 10 : i32, message = "nqd,nkd->nqk"}> : () -> ()
    %cst_15 = arith.constant dense<0.000000e+00> : vector<8x16x16xf32>
    %45 = tpu.matmul %34, %39, %cst_15 {dimension_numbers = #tpu.dot_dimension_numbers<[2], [2], [1], [1], [0, 0, 0, 1, 1, 1], [0], [0]>} : vector<8x16x32xbf16>, vector<8x16x32xbf16>, vector<8x16x16xf32> -> vector<8x16x16xf32>
    "tpu.trace_stop"() : () -> ()
    %cst_16 = arith.constant 0.176776692 : f32
    %46 = vector.broadcast %cst_16 : f32 to vector<8x16x16xf32>
    %47 = arith.mulf %45, %46 : vector<8x16x16xf32>
    %cst_17 = arith.constant dense<0xFF800000> : vector<8x16xf32>
    %48 = vector.multi_reduction <maximumf>, %47, %cst_17 [2] : vector<8x16x16xf32> to vector<8x16xf32>
    %49 = vector.shape_cast %48 : vector<8x16xf32> to vector<8x16x1xf32>
    %50 = vector.broadcast %49 : vector<8x16x1xf32> to vector<8x16x16xf32>
    %51 = arith.subf %47, %50 : vector<8x16x16xf32>
    %52 = math.exp %51 : vector<8x16x16xf32>
    %cst_18 = arith.constant dense<0.000000e+00> : vector<8x16xf32>
    %53 = vector.multi_reduction <add>, %52, %cst_18 [2] : vector<8x16x16xf32> to vector<8x16xf32>
    %54 = vector.shape_cast %53 : vector<8x16xf32> to vector<8x16x1xf32>
    %55 = tpu.reciprocal %54 {approx = true} : vector<8x16x1xf32> -> vector<8x16x1xf32>
    %56 = vector.broadcast %55 : vector<8x16x1xf32> to vector<8x16x16xf32>
    %57 = arith.mulf %52, %56 : vector<8x16x16xf32>
    %58 = arith.truncf %57 : vector<8x16x16xf32> to vector<8x16x16xbf16>
    "tpu.trace_start"() <{level = 10 : i32, message = "nqk,nkd->nqd"}> : () -> ()
    %cst_19 = arith.constant dense<0.000000e+00> : vector<8x16x32xf32>
    %59 = tpu.matmul %58, %44, %cst_19 {dimension_numbers = #tpu.dot_dimension_numbers<[2], [1], [1], [2], [0, 0, 0, 1, 1, 2], [0], [0]>} : vector<8x16x16xbf16>, vector<8x16x32xbf16>, vector<8x16x32xf32> -> vector<8x16x32xf32>
    "tpu.trace_stop"() : () -> ()
    %60 = vector.shape_cast %59 : vector<8x16x32xf32> to vector<2x4x16x32xf32>
    %61 = tpu.transpose %60, [0, 2, 1, 3] : vector<2x4x16x32xf32> -> vector<2x16x4x32xf32>
    %62 = vector.shape_cast %61 : vector<2x16x4x32xf32> to vector<32x128xf32>
    %63 = arith.truncf %62 : vector<32x128xf32> to vector<32x128xbf16>
    %c0_20 = arith.constant 0 : index
    %c0_21 = arith.constant 0 : index
    %64 = vector.load %arg6[%c0_20, %c0_21] : memref<128x128xbf16, #tpu.memory_space<vmem>>, vector<128x128xbf16>
    %cst_22 = arith.constant dense<0.000000e+00> : vector<32x128xf32>
    %65 = tpu.matmul %63, %64, %cst_22 {dimension_numbers = #tpu.dot_dimension_numbers<[1], [0], [0], [1], [0, 0, 1, 1], [], []>} : vector<32x128xbf16>, vector<128x128xbf16>, vector<32x128xf32> -> vector<32x128xf32>
    %c0_23 = arith.constant 0 : index
    %c0_24 = arith.constant 0 : index
    %66 = vector.load %arg7[%c0_23, %c0_24] : memref<1x128xf32, #tpu.memory_space<vmem>>, vector<1x128xf32>
    %67 = vector.broadcast %66 : vector<1x128xf32> to vector<32x128xf32>
    %68 = arith.addf %65, %67 : vector<32x128xf32>
    %69 = arith.addf %1, %68 : vector<32x128xf32>
    %c0_25 = arith.constant 0 : index
    %c0_26 = arith.constant 0 : index
    %70 = vector.load %arg8[%c0_25, %c0_26] : memref<1x128xf32, #tpu.memory_space<vmem>>, vector<1x128xf32>
    %c0_27 = arith.constant 0 : index
    %c0_28 = arith.constant 0 : index
    %71 = vector.load %arg9[%c0_27, %c0_28] : memref<1x128xf32, #tpu.memory_space<vmem>>, vector<1x128xf32>
    %cst_29 = arith.constant dense<0.000000e+00> : vector<32xf32>
    %72 = vector.multi_reduction <add>, %69, %cst_29 [1] : vector<32x128xf32> to vector<32xf32>
    %73 = vector.shape_cast %72 : vector<32xf32> to vector<32x1xf32>
    %cst_30 = arith.constant 1.280000e+02 : f32
    %74 = vector.broadcast %cst_30 : f32 to vector<32x1xf32>
    %75 = arith.divf %73, %74 : vector<32x1xf32>
    %76 = vector.broadcast %75 : vector<32x1xf32> to vector<32x128xf32>
    %77 = arith.subf %69, %76 : vector<32x128xf32>
    %78 = arith.mulf %77, %77 : vector<32x128xf32>
    %cst_31 = arith.constant dense<0.000000e+00> : vector<32xf32>
    %79 = vector.multi_reduction <add>, %78, %cst_31 [1] : vector<32x128xf32> to vector<32xf32>
    %80 = vector.shape_cast %79 : vector<32xf32> to vector<32x1xf32>
    %cst_32 = arith.constant 1.280000e+02 : f32
    %81 = vector.broadcast %cst_32 : f32 to vector<32x1xf32>
    %82 = arith.divf %80, %81 : vector<32x1xf32>
    %cst_33 = arith.constant 9.99999974E-6 : f32
    %83 = vector.broadcast %cst_33 : f32 to vector<32x1xf32>
    %84 = arith.addf %82, %83 : vector<32x1xf32>
    %85 = math.rsqrt %84 : vector<32x1xf32>
    %86 = vector.broadcast %85 : vector<32x1xf32> to vector<32x128xf32>
    %87 = arith.mulf %77, %86 : vector<32x128xf32>
    %88 = vector.broadcast %70 : vector<1x128xf32> to vector<32x128xf32>
    %89 = arith.mulf %87, %88 : vector<32x128xf32>
    %90 = vector.broadcast %71 : vector<1x128xf32> to vector<32x128xf32>
    %91 = arith.addf %89, %90 : vector<32x128xf32>
    %92 = arith.truncf %91 : vector<32x128xf32> to vector<32x128xbf16>
    %c0_34 = arith.constant 0 : index
    %c0_35 = arith.constant 0 : index
    %93 = vector.load %arg10[%c0_34, %c0_35] : memref<128x256xbf16, #tpu.memory_space<vmem>>, vector<128x256xbf16>
    %cst_36 = arith.constant dense<0.000000e+00> : vector<32x256xf32>
    %94 = tpu.matmul %92, %93, %cst_36 {dimension_numbers = #tpu.dot_dimension_numbers<[1], [0], [0], [1], [0, 0, 1, 1], [], []>} : vector<32x128xbf16>, vector<128x256xbf16>, vector<32x256xf32> -> vector<32x256xf32>
    %c0_37 = arith.constant 0 : index
    %c0_38 = arith.constant 0 : index
    %95 = vector.load %arg11[%c0_37, %c0_38] : memref<1x256xf32, #tpu.memory_space<vmem>>, vector<1x256xf32>
    %96 = vector.broadcast %95 : vector<1x256xf32> to vector<32x256xf32>
    %97 = arith.addf %94, %96 : vector<32x256xf32>
    %cst_39 = arith.constant 5.000000e-01 : f32
    %98 = vector.broadcast %cst_39 : f32 to vector<32x256xf32>
    %99 = arith.mulf %98, %97 : vector<32x256xf32>
    %cst_40 = arith.constant 4.471500e-02 : f32
    %100 = vector.broadcast %cst_40 : f32 to vector<32x256xf32>
    %101 = arith.mulf %100, %97 : vector<32x256xf32>
    %102 = arith.mulf %101, %97 : vector<32x256xf32>
    %103 = arith.mulf %102, %97 : vector<32x256xf32>
    %104 = arith.addf %97, %103 : vector<32x256xf32>
    %cst_41 = arith.constant 0.797884583 : f32
    %105 = vector.broadcast %cst_41 : f32 to vector<32x256xf32>
    %106 = arith.mulf %105, %104 : vector<32x256xf32>
    %107 = math.tanh %106 : vector<32x256xf32>
    %cst_42 = arith.constant 1.000000e+00 : f32
    %108 = vector.broadcast %cst_42 : f32 to vector<32x256xf32>
    %109 = arith.addf %108, %107 : vector<32x256xf32>
    %110 = arith.mulf %99, %109 : vector<32x256xf32>
    %111 = arith.truncf %110 : vector<32x256xf32> to vector<32x256xbf16>
    %c0_43 = arith.constant 0 : index
    %c0_44 = arith.constant 0 : index
    %112 = vector.load %arg12[%c0_43, %c0_44] : memref<256x128xbf16, #tpu.memory_space<vmem>>, vector<256x128xbf16>
    %cst_45 = arith.constant dense<0.000000e+00> : vector<32x128xf32>
    %113 = tpu.matmul %111, %112, %cst_45 {dimension_numbers = #tpu.dot_dimension_numbers<[1], [0], [0], [1], [0, 0, 1, 1], [], []>} : vector<32x256xbf16>, vector<256x128xbf16>, vector<32x128xf32> -> vector<32x128xf32>
    %c0_46 = arith.constant 0 : index
    %c0_47 = arith.constant 0 : index
    %114 = vector.load %arg13[%c0_46, %c0_47] : memref<1x128xf32, #tpu.memory_space<vmem>>, vector<1x128xf32>
    %115 = vector.broadcast %114 : vector<1x128xf32> to vector<32x128xf32>
    %116 = arith.addf %113, %115 : vector<32x128xf32>
    %117 = arith.addf %69, %116 : vector<32x128xf32>
    %118 = vector.shape_cast %117 : vector<32x128xf32> to vector<2x16x128xf32>
    %c0_48 = arith.constant 0 : index
    %c0_49 = arith.constant 0 : index
    %c0_50 = arith.constant 0 : index
    %119 = vector.load %arg14[%c0_48, %c0_49, %c0_50] : memref<2x16x128xf32, #tpu.memory_space<vmem>>, vector<2x16x128xf32>
    tpu.vector_store %arg14[%c0_48, %c0_49, %c0_50], %118 {strides = array<i32>} : memref<2x16x128xf32, #tpu.memory_space<vmem>>, vector<2x16x128xf32>,
    return
  }
  func.func @transform_0(%arg0: i32) -> (i32, i32, i32) {
    %c0_i32 = arith.constant 0 : i32
    %c0_i32_0 = arith.constant 0 : i32
    %c0_i32_1 = arith.constant 0 : i32
    return %arg0, %c0_i32, %c0_i32_0 : i32, i32, i32
  }
  func.func @transform_1(%arg0: i32) -> (i32, i32) {
    %c0_i32 = arith.constant 0 : i32
    %c0_i32_0 = arith.constant 0 : i32
    %c0_i32_1 = arith.constant 0 : i32
    return %c0_i32, %c0_i32_0 : i32, i32
  }
  func.func @transform_2(%arg0: i32) -> (i32, i32) {
    %c0_i32 = arith.constant 0 : i32
    %c0_i32_0 = arith.constant 0 : i32
    %c0_i32_1 = arith.constant 0 : i32
    return %c0_i32, %c0_i32_0 : i32, i32
  }
  func.func @transform_3(%arg0: i32) -> (i32, i32) {
    %c0_i32 = arith.constant 0 : i32
    %c0_i32_0 = arith.constant 0 : i32
    %c0_i32_1 = arith.constant 0 : i32
    return %c0_i32, %c0_i32_0 : i32, i32
  }
  func.func @transform_4(%arg0: i32) -> (i32, i32) {
    %c0_i32 = arith.constant 0 : i32
    %c0_i32_0 = arith.constant 0 : i32
    %c0_i32_1 = arith.constant 0 : i32
    return %c0_i32, %c0_i32_0 : i32, i32
  }
  func.func @transform_5(%arg0: i32) -> (i32, i32) {
    %c0_i32 = arith.constant 0 : i32
    %c0_i32_0 = arith.constant 0 : i32
    %c0_i32_1 = arith.constant 0 : i32
    return %c0_i32, %c0_i32_0 : i32, i32
  }
  func.func @transform_6(%arg0: i32) -> (i32, i32) {
    %c0_i32 = arith.constant 0 : i32
    %c0_i32_0 = arith.constant 0 : i32
    %c0_i32_1 = arith.constant 0 : i32
    return %c0_i32, %c0_i32_0 : i32, i32
  }
  func.func @transform_7(%arg0: i32) -> (i32, i32) {
    %c0_i32 = arith.constant 0 : i32
    %c0_i32_0 = arith.constant 0 : i32
    %c0_i32_1 = arith.constant 0 : i32
    return %c0_i32, %c0_i32_0 : i32, i32
  }
  func.func @transform_8(%arg0: i32) -> (i32, i32) {
    %c0_i32 = arith.constant 0 : i32
    %c0_i32_0 = arith.constant 0 : i32
    %c0_i32_1 = arith.constant 0 : i32
    return %c0_i32, %c0_i32_0 : i32, i32
  }
  func.func @transform_9(%arg0: i32) -> (i32, i32) {
    %c0_i32 = arith.constant 0 : i32
    %c0_i32_0 = arith.constant 0 : i32
    %c0_i32_1 = arith.constant 0 : i32
    return %c0_i32, %c0_i32_0 : i32, i32
  }
  func.func @transform_10(%arg0: i32) -> (i32, i32) {
    %c0_i32 = arith.constant 0 : i32
    %c0_i32_0 = arith.constant 0 : i32
    %c0_i32_1 = arith.constant 0 : i32
    return %c0_i32, %c0_i32_0 : i32, i32
  }
  func.func @transform_11(%arg0: i32) -> (i32, i32) {
    %c0_i32 = arith.constant 0 : i32
    %c0_i32_0 = arith.constant 0 : i32
    %c0_i32_1 = arith.constant 0 : i32
    return %c0_i32, %c0_i32_0 : i32, i32
  }
  func.func @transform_12(%arg0: i32) -> (i32, i32) {
    %c0_i32 = arith.constant 0 : i32
    %c0_i32_0 = arith.constant 0 : i32
    %c0_i32_1 = arith.constant 0 : i32
    return %c0_i32, %c0_i32_0 : i32, i32
  }
  func.func @transform_13(%arg0: i32) -> (i32, i32, i32) {
    %c0_i32 = arith.constant 0 : i32
    %c0_i32_0 = arith.constant 0 : i32
    %c0_i32_1 = arith.constant 0 : i32
    return %arg0, %c0_i32, %c0_i32_0 : i32, i32, i32
  }
}

</mosaic_0001>

<llo_original>
// kernel: tpu_custom_call.1
$region0: #{tpu_custom_call.1}
  #allocation0 [shape = 'u32[]', space=smem, size = 0x4, offset = 0x4, fixed_abs, tag = 'smem constant byte address 0x4 - core index']
  #allocation1 [shape = 'u32[72,128]{1,0:T(1,128)}', space=vmem, size = 0x9000, scoped, tag = 'internal scratch']
  %s0 = inlined_call_operand.hbm [shape: f32[2,16,128], index: 0, kind: input, shape index: {}]
  %s1 = inlined_call_operand.hbm [shape: f32[1,128], index: 1, kind: input, shape index: {}]
  %s2 = inlined_call_operand.hbm [shape: f32[1,128], index: 2, kind: input, shape index: {}]
  %s3 = inlined_call_operand.hbm [shape: bf16[128,384], index: 3, kind: input, shape index: {}]
  %s4 = inlined_call_operand.vmem [shape: f32[1,384], index: 4, kind: input, shape index: {}]
  %s5 = inlined_call_operand.hbm [shape: bf16[128,128], index: 5, kind: input, shape index: {}]
  %s6 = inlined_call_operand.hbm [shape: f32[1,128], index: 6, kind: input, shape index: {}]
  %s7 = inlined_call_operand.vmem [shape: f32[1,128], index: 7, kind: input, shape index: {}]
  %s8 = inlined_call_operand.vmem [shape: f32[1,128], index: 8, kind: input, shape index: {}]
  %s9 = inlined_call_operand.hbm [shape: bf16[128,256], index: 9, kind: input, shape index: {}]
  %s10 = inlined_call_operand.vmem [shape: f32[1,256], index: 10, kind: input, shape index: {}]
  %s11 = inlined_call_operand.hbm [shape: bf16[256,128], index: 11, kind: input, shape index: {}]
  %s12 = inlined_call_operand.vmem [shape: f32[1,128], index: 12, kind: input, shape index: {}]
  %s13 = inlined_call_operand.hbm [shape: f32[2,16,128], index: 13, kind: output, shape index: {}]
  %s14 = sld [smem:[#allocation0]]
  $region94: #{tpu_custom_call.1} parent=0
    _
  %s16 = ssub.s32 1, %s14
  %s17 = scalar_select 0, %s16, %s14
  $region1: #{tpu_custom_call.1} parent=0
    #allocation2 [shape = 'u8[16384]{0}', space=vmem, size = 0x4000, scoped, tag = 'input window, operand 0, single buffered']
    #allocation3 [shape = 's32[1]{0}', space=sflag, size = 0x4, scoped, tag = 'scoped memory for tpu_custom_call.1']
    #allocation4 [shape = 's32[1]{0}', space=sflag, size = 0x4, scoped, tag = 'scoped memory for tpu_custom_call.1']
    #allocation5 [shape = 'u8[512]{0}', space=vmem, size = 0x400, scoped, tag = 'input window, operand 1, single buffered']
    #allocation6 [shape = 's32[1]{0}', space=sflag, size = 0x4, scoped, tag = 'scoped memory for tpu_custom_call.1']
    #allocation7 [shape = 'u8[512]{0}', space=vmem, size = 0x400, scoped, tag = 'input window, operand 2, single buffered']
    #allocation8 [shape = 'u8[98304]{0}', space=vmem, size = 0x18000, scoped, tag = 'input window, operand 3, single buffered']
    #allocation9 [shape = 's32[1]{0}', space=sflag, size = 0x4, scoped, tag = 'scoped memory for tpu_custom_call.1']
    #allocation10 [shape = 'u8[32768]{0}', space=vmem, size = 0x8000, scoped, tag = 'input window, operand 5, single buffered']
    #allocation11 [shape = 'u8[512]{0}', space=vmem, size = 0x400, scoped, tag = 'input window, operand 6, single buffered']
    #allocation12 [shape = 's32[1]{0}', space=sflag, size = 0x4, scoped, tag = 'scoped memory for tpu_custom_call.1']
    #allocation13 [shape = 'u8[65536]{0}', space=vmem, size = 0x10000, scoped, tag = 'input window, operand 9, single buffered']
    #allocation14 [shape = 'u8[65536]{0}', space=vmem, size = 0x10000, scoped, tag = 'input window, operand 11, single buffered']
    #allocation15 [shape = 's32[1]{0}', space=sflag, size = 0x4, scoped, tag = 'scoped memory for tpu_custom_call.1']
    #allocation16 [shape = 'u8[16384]{0}', space=vmem, size = 0x4000, scoped, tag = 'output window, operand 0, single buffered']
    %18 = vsyncpa [#allocation3], 0
    %19 = vsyncpa [#allocation6], 0
    %20 = vsyncpa [#allocation9], 0
    %21 = vsyncpa [#allocation12], 0
    %22 = vsyncpa [#allocation15], 0
    %23 = vsyncpa [#allocation4], 0
    // Predicated region
    $region2: #{tpu_custom_call.1} parent=1 // pred_check
      _
    $region3: #{tpu_custom_call.1} parent=1 // pred_check_branch
      %25 = sbr.rel (0) target = $region5
    $region4: #{tpu_custom_call.1} parent=1 // pred_region
      %27 = vsyncadd [#allocation3], 0
      %s28 = sshll.u32 %s0, 4
      %s29 = int_to_ptr.hbm [resolvable:$true] %s28
      %s30 = sshll.u32 [#allocation2], 4
      %s31 = int_to_ptr.vmem [resolvable:$true] %s30
      %36 = dma.hbm_to_vmem [thread:$0]  %s29, 512, %s31, [#allocation3], 128, 128, 8
    $region5: #{tpu_custom_call.1} parent=1 // pred_fallthru
      _
    // Predicated region
    $region6: #{tpu_custom_call.1} parent=1 // pred_check
      _
    $region7: #{tpu_custom_call.1} parent=1 // pred_check_branch
      %38 = sbr.rel (0) target = $region9
    $region8: #{tpu_custom_call.1} parent=1 // pred_region
      %40 = vsyncadd [#allocation6], 0
      %s42 = sshll.u32 %s1, 4
      %s43 = int_to_ptr.hbm [resolvable:$true] %s42
      %s44 = sshll.u32 [#allocation5], 4
      %s45 = int_to_ptr.vmem [resolvable:$true] %s44
      %47 = dma.hbm_to_vmem [thread:$0]  %s43, 16, %s45, [#allocation6]
    $region9: #{tpu_custom_call.1} parent=1 // pred_fallthru
      _
    // Predicated region
    $region10: #{tpu_custom_call.1} parent=1 // pred_check
      _
    $region11: #{tpu_custom_call.1} parent=1 // pred_check_branch
      %49 = sbr.rel (0) target = $region13
    $region12: #{tpu_custom_call.1} parent=1 // pred_region
      %51 = vsyncadd [#allocation6], 0
      %s53 = sshll.u32 %s2, 4
      %s54 = int_to_ptr.hbm [resolvable:$true] %s53
      %s55 = sshll.u32 [#allocation7], 4
      %s56 = int_to_ptr.vmem [resolvable:$true] %s55
      %58 = dma.hbm_to_vmem [thread:$0]  %s54, 16, %s56, [#allocation6]
    $region13: #{tpu_custom_call.1} parent=1 // pred_fallthru
      _
    // Predicated region
    $region14: #{tpu_custom_call.1} parent=1 // pred_check
      _
    $region15: #{tpu_custom_call.1} parent=1 // pred_check_branch
      %60 = sbr.rel (0) target = $region17
    $region16: #{tpu_custom_call.1} parent=1 // pred_region
      %62 = vsyncadd [#allocation9], 0
      %s63 = sshll.u32 %s3, 4
      %s64 = int_to_ptr.hbm [resolvable:$true] %s63
      %s65 = sshll.u32 [#allocation8], 4
      %s66 = int_to_ptr.vmem [resolvable:$true] %s65
      %71 = dma.hbm_to_vmem [thread:$0]  %s64, 3072, %s66, [#allocation9], 192, 192, 12
    $region17: #{tpu_custom_call.1} parent=1 // pred_fallthru
      _
    // Predicated region
    $region18: #{tpu_custom_call.1} parent=1 // pred_check
      _
    $region19: #{tpu_custom_call.1} parent=1 // pred_check_branch
      %73 = sbr.rel (0) target = $region21
    $region20: #{tpu_custom_call.1} parent=1 // pred_region
      _
    $region21: #{tpu_custom_call.1} parent=1 // pred_fallthru
      _
    // Predicated region
    $region22: #{tpu_custom_call.1} parent=1 // pred_check
      _
    $region23: #{tpu_custom_call.1} parent=1 // pred_check_branch
      %75 = sbr.rel (0) target = $region25
    $region24: #{tpu_custom_call.1} parent=1 // pred_region
      %77 = vsyncadd [#allocation9], 0
      %s78 = sshll.u32 %s5, 4
      %s79 = int_to_ptr.hbm [resolvable:$true] %s78
      %s80 = sshll.u32 [#allocation10], 4
      %s81 = int_to_ptr.vmem [resolvable:$true] %s80
      %86 = dma.hbm_to_vmem [thread:$0]  %s79, 1024, %s81, [#allocation9], 64, 64, 4
    $region25: #{tpu_custom_call.1} parent=1 // pred_fallthru
      _
    // Predicated region
    $region26: #{tpu_custom_call.1} parent=1 // pred_check
      _
    $region27: #{tpu_custom_call.1} parent=1 // pred_check_branch
      %88 = sbr.rel (0) target = $region29
    $region28: #{tpu_custom_call.1} parent=1 // pred_region
      %90 = vsyncadd [#allocation12], 0
      %s92 = sshll.u32 %s6, 4
      %s93 = int_to_ptr.hbm [resolvable:$true] %s92
      %s94 = sshll.u32 [#allocation11], 4
      %s95 = int_to_ptr.vmem [resolvable:$true] %s94
      %97 = dma.hbm_to_vmem [thread:$0]  %s93, 16, %s95, [#allocation12]
    $region29: #{tpu_custom_call.1} parent=1 // pred_fallthru
      _
    // Predicated region
    $region30: #{tpu_custom_call.1} parent=1 // pred_check
      _
    $region31: #{tpu_custom_call.1} parent=1 // pred_check_branch
      %99 = sbr.rel (0) target = $region33
    $region32: #{tpu_custom_call.1} parent=1 // pred_region
      _
    $region33: #{tpu_custom_call.1} parent=1 // pred_fallthru
      _
    // Predicated region
    $region34: #{tpu_custom_call.1} parent=1 // pred_check
      _
    $region35: #{tpu_custom_call.1} parent=1 // pred_check_branch
      %101 = sbr.rel (0) target = $region37
    $region36: #{tpu_custom_call.1} parent=1 // pred_region
      _
    $region37: #{tpu_custom_call.1} parent=1 // pred_fallthru
      _
    // Predicated region
    $region38: #{tpu_custom_call.1} parent=1 // pred_check
      _
    $region39: #{tpu_custom_call.1} parent=1 // pred_check_branch
      %103 = sbr.rel (0) target = $region41
    $region40: #{tpu_custom_call.1} parent=1 // pred_region
      %105 = vsyncadd [#allocation12], 0
      %s106 = sshll.u32 %s9, 4
      %s107 = int_to_ptr.hbm [resolvable:$true] %s106
      %s108 = sshll.u32 [#allocation13], 4
      %s109 = int_to_ptr.vmem [resolvable:$true] %s108
      %114 = dma.hbm_to_vmem [thread:$0]  %s107, 2048, %s109, [#allocation12], 128, 128, 8
    $region41: #{tpu_custom_call.1} parent=1 // pred_fallthru
      _
    // Predicated region
    $region42: #{tpu_custom_call.1} parent=1 // pred_check
      _
    $region43: #{tpu_custom_call.1} parent=1 // pred_check_branch
      %116 = sbr.rel (0) target = $region45
    $region44: #{tpu_custom_call.1} parent=1 // pred_region
      _
    $region45: #{tpu_custom_call.1} parent=1 // pred_fallthru
      _
    // Predicated region
    $region46: #{tpu_custom_call.1} parent=1 // pred_check
      _
    $region47: #{tpu_custom_call.1} parent=1 // pred_check_branch
      %118 = sbr.rel (0) target = $region49
    $region48: #{tpu_custom_call.1} parent=1 // pred_region
      %120 = vsyncadd [#allocation15], 0
      %s121 = sshll.u32 %s11, 4
      %s122 = int_to_ptr.hbm [resolvable:$true] %s121
      %s123 = sshll.u32 [#allocation14], 4
      %s124 = int_to_ptr.vmem [resolvable:$true] %s123
      %129 = dma.hbm_to_vmem [thread:$0]  %s122, 2048, %s124, [#allocation15], 64, 64, 4
    $region49: #{tpu_custom_call.1} parent=1 // pred_fallthru
      _
    // Predicated region
    $region50: #{tpu_custom_call.1} parent=1 // pred_check
      _
    $region51: #{tpu_custom_call.1} parent=1 // pred_check_branch
      %131 = sbr.rel (0) target = $region53
    $region52: #{tpu_custom_call.1} parent=1 // pred_region
      _
    $region53: #{tpu_custom_call.1} parent=1 // pred_fallthru
      _
    // Predicated region
    $region54: #{tpu_custom_call.1} parent=1 // pred_check
      _
    $region55: #{tpu_custom_call.1} parent=1 // pred_check_branch
      %133 = sbr.rel (0) target = $region57
    $region56: #{tpu_custom_call.1} parent=1 // pred_region
      %135 = dma.done [#allocation3], 512
    $region57: #{tpu_custom_call.1} parent=1 // pred_fallthru
      _
    // Predicated region
    $region58: #{tpu_custom_call.1} parent=1 // pred_check
      _
    $region59: #{tpu_custom_call.1} parent=1 // pred_check_branch
      %137 = sbr.rel (0) target = $region61
    $region60: #{tpu_custom_call.1} parent=1 // pred_region
      %139 = dma.done [#allocation6], 16
    $region61: #{tpu_custom_call.1} parent=1 // pred_fallthru
      _
    // Predicated region
    $region62: #{tpu_custom_call.1} parent=1 // pred_check
      _
    $region63: #{tpu_custom_call.1} parent=1 // pred_check_branch
      %141 = sbr.rel (0) target = $region65
    $region64: #{tpu_custom_call.1} parent=1 // pred_region
      %143 = dma.done [#allocation6], 16
    $region65: #{tpu_custom_call.1} parent=1 // pred_fallthru
      _
    // Predicated region
    $region66: #{tpu_custom_call.1} parent=1 // pred_check
      _
    $region67: #{tpu_custom_call.1} parent=1 // pred_check_branch
      %145 = sbr.rel (0) target = $region69
    $region68: #{tpu_custom_call.1} parent=1 // pred_region
      %147 = dma.done [#allocation9], 3072
    $region69: #{tpu_custom_call.1} parent=1 // pred_fallthru
      _
    // Predicated region
    $region70: #{tpu_custom_call.1} parent=1 // pred_check
      _
    $region71: #{tpu_custom_call.1} parent=1 // pred_check_branch
      %149 = sbr.rel (0) target = $region73
    $region72: #{tpu_custom_call.1} parent=1 // pred_region
      %151 = dma.done [#allocation9], 1024
    $region73: #{tpu_custom_call.1} parent=1 // pred_fallthru
      _
    // Predicated region
    $region74: #{tpu_custom_call.1} parent=1 // pred_check
      _
    $region75: #{tpu_custom_call.1} parent=1 // pred_check_branch
      %153 = sbr.rel (0) target = $region77
    $region76: #{tpu_custom_call.1} parent=1 // pred_region
      %155 = dma.done [#allocation12], 16
    $region77: #{tpu_custom_call.1} parent=1 // pred_fallthru
      _
    // Predicated region
    $region78: #{tpu_custom_call.1} parent=1 // pred_check
      _
    $region79: #{tpu_custom_call.1} parent=1 // pred_check_branch
      %157 = sbr.rel (0) target = $region81
    $region80: #{tpu_custom_call.1} parent=1 // pred_region
      %159 = dma.done [#allocation12], 2048
    $region81: #{tpu_custom_call.1} parent=1 // pred_fallthru
      _
    // Predicated region
    $region82: #{tpu_custom_call.1} parent=1 // pred_check
      _
    $region83: #{tpu_custom_call.1} parent=1 // pred_check_branch
      %161 = sbr.rel (0) target = $region85
    $region84: #{tpu_custom_call.1} parent=1 // pred_region
      %163 = dma.done [#allocation15], 2048
    $region85: #{tpu_custom_call.1} parent=1 // pred_fallthru
      _
    %v165 = vld [vmem:[#allocation2] sm:$0xff]
    %v166 = vld [vmem:[#allocation2 + $0x8] sm:$0xff]
    %v167 = vld [vmem:[#allocation2 + $0x10] sm:$0xff]
    %v168 = vld [vmem:[#allocation2 + $0x18] sm:$0xff]
    %v169 = vld [vmem:[#allocation5] sm:$0x1]
    %v170 = vld [vmem:[#allocation7] sm:$0x1]
    %171 = vadd.xlane.f32.xlu0 %v165
    %v172 = vpop.xlane.xlu0 %171
    %173 = vadd.xlane.f32.xlu0 %v166
    %v174 = vpop.xlane.xlu0 %173
    %175 = vadd.xlane.f32.xlu0 %v167
    %v176 = vpop.xlane.xlu0 %175
    %177 = vadd.xlane.f32.xlu0 %v168
    %v178 = vpop.xlane.xlu0 %177
    %v179 = vrcp.pop 128.0
    %v180 = vmul.f32 128.0, %v179
    %v181 = vsub.f32 1.0, %v180
    %v182 = vmul.f32 %v179, %v181
    %v183 = vadd.f32 %v179, %v182
    %vm184 = vweird.f32 %v179
    %v185 = vsel %vm184, %v179, %v183
    %v186 = vmul.f32 %v172, %v185
    %v187 = vmul.f32 %v174, %v185
    %v188 = vmul.f32 %v176, %v185
    %v189 = vmul.f32 %v178, %v185
    %v190 = vsub.f32 %v165, %v186
    %v191 = vsub.f32 %v166, %v187
    %v192 = vsub.f32 %v167, %v188
    %v193 = vsub.f32 %v168, %v189
    %v194 = vmul.f32 %v190, %v190
    %v195 = vmul.f32 %v191, %v191
    %v196 = vmul.f32 %v192, %v192
    %v197 = vmul.f32 %v193, %v193
    %198 = vadd.xlane.f32.xlu0 %v194
    %v199 = vpop.xlane.xlu0 %198
    %200 = vadd.xlane.f32.xlu0 %v195
    %v201 = vpop.xlane.xlu0 %200
    %202 = vadd.xlane.f32.xlu0 %v196
    %v203 = vpop.xlane.xlu0 %202
    %204 = vadd.xlane.f32.xlu0 %v197
    %v205 = vpop.xlane.xlu0 %204
    %v206 = vmul.f32 %v199, %v185
    %v207 = vmul.f32 %v201, %v185
    %v208 = vmul.f32 %v203, %v185
    %v209 = vmul.f32 %v205, %v185
    %v210 = vadd.f32 %v206, 1e-05
    %v211 = vadd.f32 %v207, 1e-05
    %v212 = vadd.f32 %v208, 1e-05
    %v213 = vadd.f32 %v209, 1e-05
    %v214 = vrsqrt.pop %v210
    %v215 = vmul.f32 %v214, %v210
    %v216 = vmul.f32 %v215, %v214
    %v217 = vmul.f32 0.5, %v216
    %v218 = vsub.f32 1.5, %v217
    %v219 = vmul.f32 %v214, %v218
    %vm220 = vweird.f32 %v210
    %vm221 = vweird.f32 %v214
    %vm222 = vmor %vm220, %vm221
    %v223 = vsel %vm222, %v214, %v219
    %v224 = vrsqrt.pop %v211
    %v225 = vmul.f32 %v224, %v211
    %v226 = vmul.f32 %v225, %v224
    %v227 = vmul.f32 0.5, %v226
    %v228 = vsub.f32 1.5, %v227
    %v229 = vmul.f32 %v224, %v228
    %vm230 = vweird.f32 %v211
    %vm231 = vweird.f32 %v224
    %vm232 = vmor %vm230, %vm231
    %v233 = vsel %vm232, %v224, %v229
    %v234 = vrsqrt.pop %v212
    %v235 = vmul.f32 %v234, %v212
    %v236 = vmul.f32 %v235, %v234
    %v237 = vmul.f32 0.5, %v236
    %v238 = vsub.f32 1.5, %v237
    %v239 = vmul.f32 %v234, %v238
    %vm240 = vweird.f32 %v212
    %vm241 = vweird.f32 %v234
    %vm242 = vmor %vm240, %vm241
    %v243 = vsel %vm242, %v234, %v239
    %v244 = vrsqrt.pop %v213
    %v245 = vmul.f32 %v244, %v213
    %v246 = vmul.f32 %v245, %v244
    %v247 = vmul.f32 0.5, %v246
    %v248 = vsub.f32 1.5, %v247
    %v249 = vmul.f32 %v244, %v248
    %vm250 = vweird.f32 %v213
    %vm251 = vweird.f32 %v244
    %vm252 = vmor %vm250, %vm251
    %v253 = vsel %vm252, %v244, %v249
    %v254 = vmul.f32 %v190, %v223
    %v255 = vmul.f32 %v191, %v233
    %v256 = vmul.f32 %v192, %v243
    %v257 = vmul.f32 %v193, %v253
    %v259 = vperm.slane %v169, 0
    %v261 = vmul.f32 %v254, %v259
    %v262 = vmul.f32 %v255, %v259
    %v263 = vmul.f32 %v256, %v259
    %v264 = vmul.f32 %v257, %v259
    %v266 = vperm.slane %v170, 0
    %v268 = vadd.f32 %v261, %v266
    %v269 = vadd.f32 %v262, %v266
    %v270 = vadd.f32 %v263, %v266
    %v271 = vadd.f32 %v264, %v266
    %v272 = vpack.c.bf16 %v269, %v268
    %v273 = vpack.c.bf16 %v271, %v270
    %v274 = vld [vmem:[#allocation8] sm:$0xff]
    %v275 = vld [vmem:[#allocation8 + $0x8] sm:$0xf]
    %v276 = vld [vmem:[#allocation8 + $0xc] sm:$0xff]
    %v277 = vld [vmem:[#allocation8 + $0x14] sm:$0xf]
    %v278 = vld [vmem:[#allocation8 + $0x18] sm:$0xff]
    %v279 = vld [vmem:[#allocation8 + $0x20] sm:$0xf]
    %v280 = vld [vmem:[#allocation8 + $0x24] sm:$0xff]
    %v281 = vld [vmem:[#allocation8 + $0x2c] sm:$0xf]
    %v282 = vld [vmem:[#allocation8 + $0x30] sm:$0xff]
    %v283 = vld [vmem:[#allocation8 + $0x38] sm:$0xf]
    %v284 = vld [vmem:[#allocation8 + $0x3c] sm:$0xff]
    %v285 = vld [vmem:[#allocation8 + $0x44] sm:$0xf]
    %v286 = vld [vmem:[#allocation8 + $0x48] sm:$0xff]
    %v287 = vld [vmem:[#allocation8 + $0x50] sm:$0xf]
    %v288 = vld [vmem:[#allocation8 + $0x54] sm:$0xff]
    %v289 = vld [vmem:[#allocation8 + $0x5c] sm:$0xf]
    %v290 = vld [vmem:[#allocation8 + $0x60] sm:$0xff]
    %v291 = vld [vmem:[#allocation8 + $0x68] sm:$0xf]
    %v292 = vld [vmem:[#allocation8 + $0x6c] sm:$0xff]
    %v293 = vld [vmem:[#allocation8 + $0x74] sm:$0xf]
    %v294 = vld [vmem:[#allocation8 + $0x78] sm:$0xff]
    %v295 = vld [vmem:[#allocation8 + $0x80] sm:$0xf]
    %v296 = vld [vmem:[#allocation8 + $0x84] sm:$0xff]
    %v297 = vld [vmem:[#allocation8 + $0x8c] sm:$0xf]
    %v298 = vld [vmem:[#allocation8 + $0x90] sm:$0xff]
    %v299 = vld [vmem:[#allocation8 + $0x98] sm:$0xf]
    %v300 = vld [vmem:[#allocation8 + $0x9c] sm:$0xff]
    %v301 = vld [vmem:[#allocation8 + $0xa4] sm:$0xf]
    %v302 = vld [vmem:[#allocation8 + $0xa8] sm:$0xff]
    %v303 = vld [vmem:[#allocation8 + $0xb0] sm:$0xf]
    %v304 = vld [vmem:[#allocation8 + $0xb4] sm:$0xff]
    %v305 = vld [vmem:[#allocation8 + $0xbc] sm:$0xf]
    %v306 = vld [vmem:[%s4] sm:$0x7]
    %v308 = vperm.slane %v306, 0
    %v309 = vperm.slane %v306, 1
    %v310 = vperm.slane %v306, 2
    %v346 = vunpack.c.l.b16 %v274
    %v347 = vunpack.c.h.b16 %v274
    %v348 = vunpack.c.l.b16 %v275
    %v349 = vunpack.c.l.b16 %v276
    %v350 = vunpack.c.h.b16 %v276
    %v351 = vunpack.c.l.b16 %v277
    %v352 = vunpack.c.l.b16 %v278
    %v353 = vunpack.c.h.b16 %v278
    %v354 = vunpack.c.l.b16 %v279
    %v355 = vunpack.c.l.b16 %v280
    %v356 = vunpack.c.h.b16 %v280
    %v357 = vunpack.c.l.b16 %v281
    %v358 = vunpack.c.l.b16 %v282
    %v359 = vunpack.c.h.b16 %v282
    %v360 = vunpack.c.l.b16 %v283
    %v361 = vunpack.c.l.b16 %v284
    %v362 = vunpack.c.h.b16 %v284
    %v363 = vunpack.c.l.b16 %v285
    %v364 = vunpack.c.l.b16 %v286
    %v365 = vunpack.c.h.b16 %v286
    %v366 = vunpack.c.l.b16 %v287
    %v367 = vunpack.c.l.b16 %v288
    %v368 = vunpack.c.h.b16 %v288
    %v369 = vunpack.c.l.b16 %v289
    %v370 = vunpack.c.l.b16 %v290
    %v371 = vunpack.c.h.b16 %v290
    %v372 = vunpack.c.l.b16 %v291
    %v373 = vunpack.c.l.b16 %v292
    %v374 = vunpack.c.h.b16 %v292
    %v375 = vunpack.c.l.b16 %v293
    %v376 = vunpack.c.l.b16 %v294
    %v377 = vunpack.c.h.b16 %v294
    %v378 = vunpack.c.l.b16 %v295
    %v379 = vunpack.c.l.b16 %v296
    %v380 = vunpack.c.h.b16 %v296
    %v381 = vunpack.c.l.b16 %v297
    %v382 = vunpack.c.l.b16 %v298
    %v383 = vunpack.c.h.b16 %v298
    %v384 = vunpack.c.l.b16 %v299
    %v385 = vunpack.c.l.b16 %v300
    %v386 = vunpack.c.h.b16 %v300
    %v387 = vunpack.c.l.b16 %v301
    %v388 = vunpack.c.l.b16 %v302
    %v389 = vunpack.c.h.b16 %v302
    %v390 = vunpack.c.l.b16 %v303
    %v391 = vunpack.c.l.b16 %v304
    %v392 = vunpack.c.h.b16 %v304
    %v393 = vunpack.c.l.b16 %v305
    %v394 = vpack.c.b16 %v349, %v346
    %v395 = vpack.c.b16 %v350, %v347
    %v396 = vpack.c.b16 %v351, %v348
    %v397 = vpack.c.b16 %v355, %v352
    %v398 = vpack.c.b16 %v356, %v353
    %v399 = vpack.c.b16 %v357, %v354
    %v400 = vpack.c.b16 %v361, %v358
    %v401 = vpack.c.b16 %v362, %v359
    %v402 = vpack.c.b16 %v363, %v360
    %v403 = vpack.c.b16 %v367, %v364
    %v404 = vpack.c.b16 %v368, %v365
    %v405 = vpack.c.b16 %v369, %v366
    %v406 = vpack.c.b16 %v373, %v370
    %v407 = vpack.c.b16 %v374, %v371
    %v408 = vpack.c.b16 %v375, %v372
    %v409 = vpack.c.b16 %v379, %v376
    %v410 = vpack.c.b16 %v380, %v377
    %v411 = vpack.c.b16 %v381, %v378
    %v412 = vpack.c.b16 %v385, %v382
    %v413 = vpack.c.b16 %v386, %v383
    %v414 = vpack.c.b16 %v387, %v384
    %v415 = vpack.c.b16 %v391, %v388
    %v416 = vpack.c.b16 %v392, %v389
    %v417 = vpack.c.b16 %v393, %v390
    %442 = vmatpush.bf16.msra.mxu0 %v415
    %443 = vmatpush.bf16.msra.mxu0 %v412
    %444 = vmatpush.bf16.msra.mxu0 %v409
    %445 = vmatpush.bf16.msra.mxu0 %v406
    %446 = vmatpush.bf16.msra.mxu0 %v403
    %447 = vmatpush.bf16.msra.mxu0 %v400
    %448 = vmatpush.bf16.msra.mxu0 %v397
    %449 = vmatpush.bf16.msra.mxu0 %v394
    %450 = vmatmul.bf16.gmra.mxu0 %v272
    %v451 = vpop.f32.mrf.mxu0
    %v452 = vadd.f32 %v308, %v451
    %v453 = vpop.f32.mrf.mxu0
    %v454 = vadd.f32 %v308, %v453
    %455 = vmatmul.bf16.gmra.mxu0 %v273
    %v456 = vpop.f32.mrf.mxu0
    %v457 = vadd.f32 %v308, %v456
    %v458 = vpop.f32.mrf.mxu0
    %v459 = vadd.f32 %v308, %v458
    %460 = vdwg.mxu0
    %461 = vmatpush.bf16.msra.mxu0 %v416
    %462 = vmatpush.bf16.msra.mxu0 %v413
    %463 = vmatpush.bf16.msra.mxu0 %v410
    %464 = vmatpush.bf16.msra.mxu0 %v407
    %465 = vmatpush.bf16.msra.mxu0 %v404
    %466 = vmatpush.bf16.msra.mxu0 %v401
    %467 = vmatpush.bf16.msra.mxu0 %v398
    %468 = vmatpush.bf16.msra.mxu0 %v395
    %469 = vmatmul.bf16.gmra.mxu0 %v272
    %v470 = vpop.f32.mrf.mxu0
    %v471 = vadd.f32 %v309, %v470
    %v472 = vpop.f32.mrf.mxu0
    %v473 = vadd.f32 %v309, %v472
    %474 = vmatmul.bf16.gmra.mxu0 %v273
    %v475 = vpop.f32.mrf.mxu0
    %v476 = vadd.f32 %v309, %v475
    %v477 = vpop.f32.mrf.mxu0
    %v478 = vadd.f32 %v309, %v477
    %479 = vdwg.mxu0
    %480 = vmatpush.bf16.msra.mxu0 %v417
    %481 = vmatpush.bf16.msra.mxu0 %v414
    %482 = vmatpush.bf16.msra.mxu0 %v411
    %483 = vmatpush.bf16.msra.mxu0 %v408
    %484 = vmatpush.bf16.msra.mxu0 %v405
    %485 = vmatpush.bf16.msra.mxu0 %v402
    %486 = vmatpush.bf16.msra.mxu0 %v399
    %487 = vmatpush.bf16.msra.mxu0 %v396
    %488 = vmatmul.bf16.gmra.mxu0 %v272
    %v489 = vpop.f32.mrf.mxu0
    %v490 = vadd.f32 %v310, %v489
    %v491 = vpop.f32.mrf.mxu0
    %v492 = vadd.f32 %v310, %v491
    %493 = vmatmul.bf16.gmra.mxu0 %v273
    %v494 = vpop.f32.mrf.mxu0
    %v495 = vadd.f32 %v310, %v494
    %v496 = vpop.f32.mrf.mxu0
    %v497 = vadd.f32 %v310, %v496
    %498 = vdwg.mxu0
    %503 = vrot.lane.b32.xlu0 %v452, 96
    %v504 = vpop.permute.xlu0 %503
    %505 = vrot.lane.b32.xlu0 %v454, 96
    %v506 = vpop.permute.xlu0 %505
    %507 = vrot.lane.b32.xlu0 %v457, 96
    %v508 = vpop.permute.xlu0 %507
    %509 = vrot.lane.b32.xlu0 %v459, 96
    %v510 = vpop.permute.xlu0 %509
    %515 = vrot.lane.b32.xlu0 %v452, 64
    %v516 = vpop.permute.xlu0 %515
    %517 = vrot.lane.b32.xlu0 %v454, 64
    %v518 = vpop.permute.xlu0 %517
    %519 = vrot.lane.b32.xlu0 %v457, 64
    %v520 = vpop.permute.xlu0 %519
    %521 = vrot.lane.b32.xlu0 %v459, 64
    %v522 = vpop.permute.xlu0 %521
    %527 = vrot.lane.b32.xlu0 %v452, 32
    %v528 = vpop.permute.xlu0 %527
    %529 = vrot.lane.b32.xlu0 %v454, 32
    %v530 = vpop.permute.xlu0 %529
    %531 = vrot.lane.b32.xlu0 %v457, 32
    %v532 = vpop.permute.xlu0 %531
    %533 = vrot.lane.b32.xlu0 %v459, 32
    %v534 = vpop.permute.xlu0 %533
    %v539 = vrot.slane %v516, 4
    %vm540 = vcmask 1047556
    %v541 = vsel %vm540, %v539, %v452
    %v542 = vrot.slane %v452, 4
    %v543 = vsel %vm540, %v516, %v542
    %v545 = vunpack.c.l.s4 1983009808
    %v546 = vunpack.c.0.s8 %v545
    %v547 = vperm.slane %v541, %v546
    %v549 = vunpack.c.l.s4 1983009808
    %v550 = vunpack.c.0.s8 %v549
    %v551 = vperm.slane %v543, %v550
    %v552 = vrot.slane %v528, 4
    %v553 = vsel %vm540, %v552, %v504
    %v554 = vrot.slane %v504, 4
    %v555 = vsel %vm540, %v528, %v554
    %v557 = vunpack.c.l.s4 1983009808
    %v558 = vunpack.c.0.s8 %v557
    %v559 = vperm.slane %v553, %v558
    %v561 = vunpack.c.l.s4 1983009808
    %v562 = vunpack.c.0.s8 %v561
    %v563 = vperm.slane %v555, %v562
    %v564 = vrot.slane %v559, 4
    %v565 = vsel %vm540, %v564, %v547
    %v566 = vrot.slane %v547, 4
    %v567 = vsel %vm540, %v559, %v566
    %v569 = vunpack.c.l.s4 1934713408
    %v570 = vunpack.c.0.s8 %v569
    %v571 = vperm.slane %v565, %v570
    %v573 = vunpack.c.l.s4 1934713408
    %v574 = vunpack.c.0.s8 %v573
    %v575 = vperm.slane %v567, %v574
    %v576 = vrot.slane %v563, 4
    %v577 = vsel %vm540, %v576, %v551
    %v578 = vrot.slane %v551, 4
    %v579 = vsel %vm540, %v563, %v578
    %v581 = vunpack.c.l.s4 1934713408
    %v582 = vunpack.c.0.s8 %v581
    %v583 = vperm.slane %v577, %v582
    %v585 = vunpack.c.l.s4 1934713408
    %v586 = vunpack.c.0.s8 %v585
    %v587 = vperm.slane %v579, %v586
    %v588 = vrot.slane %v571, 4
    %v589 = vsel %vm540, 0.0, %v588
    %v590 = vrot.slane %v575, 4
    %v591 = vsel %vm540, 0.0, %v590
    %v592 = vrot.slane %v583, 4
    %v593 = vsel %vm540, 0.0, %v592
    %v594 = vrot.slane %v587, 4
    %v595 = vsel %vm540, 0.0, %v594
    %v596 = vrot.slane %v518, 4
    %v597 = vsel %vm540, %v596, %v454
    %v598 = vrot.slane %v454, 4
    %v599 = vsel %vm540, %v518, %v598
    %v601 = vunpack.c.l.s4 1983009808
    %v602 = vunpack.c.0.s8 %v601
    %v603 = vperm.slane %v597, %v602
    %v605 = vunpack.c.l.s4 1983009808
    %v606 = vunpack.c.0.s8 %v605
    %v607 = vperm.slane %v599, %v606
    %v608 = vrot.slane %v530, 4
    %v609 = vsel %vm540, %v608, %v506
    %v610 = vrot.slane %v506, 4
    %v611 = vsel %vm540, %v530, %v610
    %v613 = vunpack.c.l.s4 1983009808
    %v614 = vunpack.c.0.s8 %v613
    %v615 = vperm.slane %v609, %v614
    %v617 = vunpack.c.l.s4 1983009808
    %v618 = vunpack.c.0.s8 %v617
    %v619 = vperm.slane %v611, %v618
    %v620 = vrot.slane %v615, 4
    %v621 = vsel %vm540, %v620, %v603
    %v622 = vrot.slane %v603, 4
    %v623 = vsel %vm540, %v615, %v622
    %v625 = vunpack.c.l.s4 1934713408
    %v626 = vunpack.c.0.s8 %v625
    %v627 = vperm.slane %v621, %v626
    %v629 = vunpack.c.l.s4 1934713408
    %v630 = vunpack.c.0.s8 %v629
    %v631 = vperm.slane %v623, %v630
    %v632 = vrot.slane %v619, 4
    %v633 = vsel %vm540, %v632, %v607
    %v634 = vrot.slane %v607, 4
    %v635 = vsel %vm540, %v619, %v634
    %v637 = vunpack.c.l.s4 1934713408
    %v638 = vunpack.c.0.s8 %v637
    %v639 = vperm.slane %v633, %v638
    %v641 = vunpack.c.l.s4 1934713408
    %v642 = vunpack.c.0.s8 %v641
    %v643 = vperm.slane %v635, %v642
    %v644 = vrot.slane %v627, 4
    %v645 = vsel %vm540, 0.0, %v644
    %v646 = vrot.slane %v631, 4
    %v647 = vsel %vm540, 0.0, %v646
    %v648 = vrot.slane %v639, 4
    %v649 = vsel %vm540, 0.0, %v648
    %v650 = vrot.slane %v643, 4
    %v651 = vsel %vm540, 0.0, %v650
    %v652 = vrot.slane %v520, 4
    %v653 = vsel %vm540, %v652, %v457
    %v654 = vrot.slane %v457, 4
    %v655 = vsel %vm540, %v520, %v654
    %v657 = vunpack.c.l.s4 1983009808
    %v658 = vunpack.c.0.s8 %v657
    %v659 = vperm.slane %v653, %v658
    %v661 = vunpack.c.l.s4 1983009808
    %v662 = vunpack.c.0.s8 %v661
    %v663 = vperm.slane %v655, %v662
    %v664 = vrot.slane %v532, 4
    %v665 = vsel %vm540, %v664, %v508
    %v666 = vrot.slane %v508, 4
    %v667 = vsel %vm540, %v532, %v666
    %v669 = vunpack.c.l.s4 1983009808
    %v670 = vunpack.c.0.s8 %v669
    %v671 = vperm.slane %v665, %v670
    %v673 = vunpack.c.l.s4 1983009808
    %v674 = vunpack.c.0.s8 %v673
    %v675 = vperm.slane %v667, %v674
    %v676 = vrot.slane %v671, 4
    %v677 = vsel %vm540, %v676, %v659
    %v678 = vrot.slane %v659, 4
    %v679 = vsel %vm540, %v671, %v678
    %v681 = vunpack.c.l.s4 1934713408
    %v682 = vunpack.c.0.s8 %v681
    %v683 = vperm.slane %v677, %v682
    %v685 = vunpack.c.l.s4 1934713408
    %v686 = vunpack.c.0.s8 %v685
    %v687 = vperm.slane %v679, %v686
    %v688 = vrot.slane %v675, 4
    %v689 = vsel %vm540, %v688, %v663
    %v690 = vrot.slane %v663, 4
    %v691 = vsel %vm540, %v675, %v690
    %v693 = vunpack.c.l.s4 1934713408
    %v694 = vunpack.c.0.s8 %v693
    %v695 = vperm.slane %v689, %v694
    %v697 = vunpack.c.l.s4 1934713408
    %v698 = vunpack.c.0.s8 %v697
    %v699 = vperm.slane %v691, %v698
    %v700 = vrot.slane %v683, 4
    %v701 = vsel %vm540, 0.0, %v700
    %v702 = vrot.slane %v687, 4
    %v703 = vsel %vm540, 0.0, %v702
    %v704 = vrot.slane %v695, 4
    %v705 = vsel %vm540, 0.0, %v704
    %v706 = vrot.slane %v699, 4
    %v707 = vsel %vm540, 0.0, %v706
    %v708 = vrot.slane %v522, 4
    %v709 = vsel %vm540, %v708, %v459
    %v710 = vrot.slane %v459, 4
    %v711 = vsel %vm540, %v522, %v710
    %v713 = vunpack.c.l.s4 1983009808
    %v714 = vunpack.c.0.s8 %v713
    %v715 = vperm.slane %v709, %v714
    %v717 = vunpack.c.l.s4 1983009808
    %v718 = vunpack.c.0.s8 %v717
    %v719 = vperm.slane %v711, %v718
    %v720 = vrot.slane %v534, 4
    %v721 = vsel %vm540, %v720, %v510
    %v722 = vrot.slane %v510, 4
    %v723 = vsel %vm540, %v534, %v722
    %v725 = vunpack.c.l.s4 1983009808
    %v726 = vunpack.c.0.s8 %v725
    %v727 = vperm.slane %v721, %v726
    %v729 = vunpack.c.l.s4 1983009808
    %v730 = vunpack.c.0.s8 %v729
    %v731 = vperm.slane %v723, %v730
    %v732 = vrot.slane %v727, 4
    %v733 = vsel %vm540, %v732, %v715
    %v734 = vrot.slane %v715, 4
    %v735 = vsel %vm540, %v727, %v734
    %v737 = vunpack.c.l.s4 1934713408
    %v738 = vunpack.c.0.s8 %v737
    %v739 = vperm.slane %v733, %v738
    %v741 = vunpack.c.l.s4 1934713408
    %v742 = vunpack.c.0.s8 %v741
    %v743 = vperm.slane %v735, %v742
    %v744 = vrot.slane %v731, 4
    %v745 = vsel %vm540, %v744, %v719
    %v746 = vrot.slane %v719, 4
    %v747 = vsel %vm540, %v731, %v746
    %v749 = vunpack.c.l.s4 1934713408
    %v750 = vunpack.c.0.s8 %v749
    %v751 = vperm.slane %v745, %v750
    %v753 = vunpack.c.l.s4 1934713408
    %v754 = vunpack.c.0.s8 %v753
    %v755 = vperm.slane %v747, %v754
    %v756 = vrot.slane %v739, 4
    %v757 = vsel %vm540, 0.0, %v756
    %v758 = vrot.slane %v743, 4
    %v759 = vsel %vm540, 0.0, %v758
    %v760 = vrot.slane %v751, 4
    %v761 = vsel %vm540, 0.0, %v760
    %v762 = vrot.slane %v755, 4
    %v763 = vsel %vm540, 0.0, %v762
    %v764 = vsel %vm540, %v590, %v571
    %v766 = vunpack.c.l.s4 1983009808
    %v767 = vunpack.c.0.s8 %v766
    %v768 = vperm.slane %v764, %v767
    %v769 = vrot.slane %v591, 4
    %v770 = vsel %vm540, %v769, %v589
    %v772 = vunpack.c.l.s4 1983009808
    %v773 = vunpack.c.0.s8 %v772
    %v774 = vperm.slane %v770, %v773
    %v775 = vsel %vm540, %v594, %v583
    %v777 = vunpack.c.l.s4 1983009808
    %v778 = vunpack.c.0.s8 %v777
    %v779 = vperm.slane %v775, %v778
    %v780 = vrot.slane %v595, 4
    %v781 = vsel %vm540, %v780, %v593
    %v783 = vunpack.c.l.s4 1983009808
    %v784 = vunpack.c.0.s8 %v783
    %v785 = vperm.slane %v781, %v784
    %v786 = vrot.slane %v774, 4
    %v787 = vsel %vm540, %v786, %v768
    %v788 = vrot.slane %v768, 4
    %v789 = vsel %vm540, %v774, %v788
    %v791 = vunpack.c.l.s4 1934713408
    %v792 = vunpack.c.0.s8 %v791
    %v793 = vperm.slane %v787, %v792
    %v795 = vunpack.c.l.s4 1934713408
    %v796 = vunpack.c.0.s8 %v795
    %v797 = vperm.slane %v789, %v796
    %v798 = vrot.slane %v785, 4
    %v799 = vsel %vm540, %v798, %v779
    %v800 = vrot.slane %v779, 4
    %v801 = vsel %vm540, %v785, %v800
    %v803 = vunpack.c.l.s4 1934713408
    %v804 = vunpack.c.0.s8 %v803
    %v805 = vperm.slane %v799, %v804
    %v807 = vunpack.c.l.s4 1934713408
    %v808 = vunpack.c.0.s8 %v807
    %v809 = vperm.slane %v801, %v808
    %v810 = vrot.slane %v805, 4
    %v811 = vsel %vm540, %v810, %v793
    %v812 = vrot.slane %v793, 4
    %v813 = vsel %vm540, %v805, %v812
    %v814 = vrot.slane %v809, 4
    %v815 = vsel %vm540, %v814, %v797
    %v816 = vrot.slane %v797, 4
    %v817 = vsel %vm540, %v809, %v816
    %v818 = vsel %vm540, %v646, %v627
    %v820 = vunpack.c.l.s4 1983009808
    %v821 = vunpack.c.0.s8 %v820
    %v822 = vperm.slane %v818, %v821
    %v823 = vrot.slane %v647, 4
    %v824 = vsel %vm540, %v823, %v645
    %v826 = vunpack.c.l.s4 1983009808
    %v827 = vunpack.c.0.s8 %v826
    %v828 = vperm.slane %v824, %v827
    %v829 = vsel %vm540, %v650, %v639
    %v831 = vunpack.c.l.s4 1983009808
    %v832 = vunpack.c.0.s8 %v831
    %v833 = vperm.slane %v829, %v832
    %v834 = vrot.slane %v651, 4
    %v835 = vsel %vm540, %v834, %v649
    %v837 = vunpack.c.l.s4 1983009808
    %v838 = vunpack.c.0.s8 %v837
    %v839 = vperm.slane %v835, %v838
    %v840 = vrot.slane %v828, 4
    %v841 = vsel %vm540, %v840, %v822
    %v842 = vrot.slane %v822, 4
    %v843 = vsel %vm540, %v828, %v842
    %v845 = vunpack.c.l.s4 1934713408
    %v846 = vunpack.c.0.s8 %v845
    %v847 = vperm.slane %v841, %v846
    %v849 = vunpack.c.l.s4 1934713408
    %v850 = vunpack.c.0.s8 %v849
    %v851 = vperm.slane %v843, %v850
    %v852 = vrot.slane %v839, 4
    %v853 = vsel %vm540, %v852, %v833
    %v854 = vrot.slane %v833, 4
    %v855 = vsel %vm540, %v839, %v854
    %v857 = vunpack.c.l.s4 1934713408
    %v858 = vunpack.c.0.s8 %v857
    %v859 = vperm.slane %v853, %v858
    %v861 = vunpack.c.l.s4 1934713408
    %v862 = vunpack.c.0.s8 %v861
    %v863 = vperm.slane %v855, %v862
    %v864 = vrot.slane %v859, 4
    %v865 = vsel %vm540, %v864, %v847
    %v866 = vrot.slane %v847, 4
    %v867 = vsel %vm540, %v859, %v866
    %v868 = vrot.slane %v863, 4
    %v869 = vsel %vm540, %v868, %v851
    %v870 = vrot.slane %v851, 4
    %v871 = vsel %vm540, %v863, %v870
    %v872 = vsel %vm540, %v702, %v683
    %v874 = vunpack.c.l.s4 1983009808
    %v875 = vunpack.c.0.s8 %v874
    %v876 = vperm.slane %v872, %v875
    %v877 = vrot.slane %v703, 4
    %v878 = vsel %vm540, %v877, %v701
    %v880 = vunpack.c.l.s4 1983009808
    %v881 = vunpack.c.0.s8 %v880
    %v882 = vperm.slane %v878, %v881
    %v883 = vsel %vm540, %v706, %v695
    %v885 = vunpack.c.l.s4 1983009808
    %v886 = vunpack.c.0.s8 %v885
    %v887 = vperm.slane %v883, %v886
    %v888 = vrot.slane %v707, 4
    %v889 = vsel %vm540, %v888, %v705
    %v891 = vunpack.c.l.s4 1983009808
    %v892 = vunpack.c.0.s8 %v891
    %v893 = vperm.slane %v889, %v892
    %v894 = vrot.slane %v882, 4
    %v895 = vsel %vm540, %v894, %v876
    %v896 = vrot.slane %v876, 4
    %v897 = vsel %vm540, %v882, %v896
    %v899 = vunpack.c.l.s4 1934713408
    %v900 = vunpack.c.0.s8 %v899
    %v901 = vperm.slane %v895, %v900
    %v903 = vunpack.c.l.s4 1934713408
    %v904 = vunpack.c.0.s8 %v903
    %v905 = vperm.slane %v897, %v904
    %v906 = vrot.slane %v893, 4
    %v907 = vsel %vm540, %v906, %v887
    %v908 = vrot.slane %v887, 4
    %v909 = vsel %vm540, %v893, %v908
    %v911 = vunpack.c.l.s4 1934713408
    %v912 = vunpack.c.0.s8 %v911
    %v913 = vperm.slane %v907, %v912
    %v915 = vunpack.c.l.s4 1934713408
    %v916 = vunpack.c.0.s8 %v915
    %v917 = vperm.slane %v909, %v916
    %v918 = vrot.slane %v913, 4
    %v919 = vsel %vm540, %v918, %v901
    %v920 = vrot.slane %v901, 4
    %v921 = vsel %vm540, %v913, %v920
    %v922 = vrot.slane %v917, 4
    %v923 = vsel %vm540, %v922, %v905
    %v924 = vrot.slane %v905, 4
    %v925 = vsel %vm540, %v917, %v924
    %v926 = vsel %vm540, %v758, %v739
    %v928 = vunpack.c.l.s4 1983009808
    %v929 = vunpack.c.0.s8 %v928
    %v930 = vperm.slane %v926, %v929
    %v931 = vrot.slane %v759, 4
    %v932 = vsel %vm540, %v931, %v757
    %v934 = vunpack.c.l.s4 1983009808
    %v935 = vunpack.c.0.s8 %v934
    %v936 = vperm.slane %v932, %v935
    %v937 = vsel %vm540, %v762, %v751
    %v939 = vunpack.c.l.s4 1983009808
    %v940 = vunpack.c.0.s8 %v939
    %v941 = vperm.slane %v937, %v940
    %v942 = vrot.slane %v763, 4
    %v943 = vsel %vm540, %v942, %v761
    %v945 = vunpack.c.l.s4 1983009808
    %v946 = vunpack.c.0.s8 %v945
    %v947 = vperm.slane %v943, %v946
    %v948 = vrot.slane %v936, 4
    %v949 = vsel %vm540, %v948, %v930
    %v950 = vrot.slane %v930, 4
    %v951 = vsel %vm540, %v936, %v950
    %v953 = vunpack.c.l.s4 1934713408
    %v954 = vunpack.c.0.s8 %v953
    %v955 = vperm.slane %v949, %v954
    %v957 = vunpack.c.l.s4 1934713408
    %v958 = vunpack.c.0.s8 %v957
    %v959 = vperm.slane %v951, %v958
    %v960 = vrot.slane %v947, 4
    %v961 = vsel %vm540, %v960, %v941
    %v962 = vrot.slane %v941, 4
    %v963 = vsel %vm540, %v947, %v962
    %v965 = vunpack.c.l.s4 1934713408
    %v966 = vunpack.c.0.s8 %v965
    %v967 = vperm.slane %v961, %v966
    %v969 = vunpack.c.l.s4 1934713408
    %v970 = vunpack.c.0.s8 %v969
    %v971 = vperm.slane %v963, %v970
    %v972 = vrot.slane %v967, 4
    %v973 = vsel %vm540, %v972, %v955
    %v974 = vrot.slane %v955, 4
    %v975 = vsel %vm540, %v967, %v974
    %v976 = vrot.slane %v971, 4
    %v977 = vsel %vm540, %v976, %v959
    %v978 = vrot.slane %v959, 4
    %v979 = vsel %vm540, %v971, %v978
    %v980 = vpack.c.bf16 %v811, %v811
    %v981 = vpack.c.bf16 %v865, %v865
    %v982 = vpack.c.bf16 %v813, %v813
    %v983 = vpack.c.bf16 %v867, %v867
    %v984 = vpack.c.bf16 %v815, %v815
    %v985 = vpack.c.bf16 %v869, %v869
    %v986 = vpack.c.bf16 %v817, %v817
    %v987 = vpack.c.bf16 %v871, %v871
    %v988 = vpack.c.bf16 %v919, %v919
    %v989 = vpack.c.bf16 %v973, %v973
    %v990 = vpack.c.bf16 %v921, %v921
    %v991 = vpack.c.bf16 %v975, %v975
    %v992 = vpack.c.bf16 %v923, %v923
    %v993 = vpack.c.bf16 %v977, %v977
    %v994 = vpack.c.bf16 %v925, %v925
    %v995 = vpack.c.bf16 %v979, %v979
    %1000 = vrot.lane.b32.xlu0 %v471, 96
    %v1001 = vpop.permute.xlu0 %1000
    %1002 = vrot.lane.b32.xlu0 %v473, 96
    %v1003 = vpop.permute.xlu0 %1002
    %1004 = vrot.lane.b32.xlu0 %v476, 96
    %v1005 = vpop.permute.xlu0 %1004
    %1006 = vrot.lane.b32.xlu0 %v478, 96
    %v1007 = vpop.permute.xlu0 %1006
    %1012 = vrot.lane.b32.xlu0 %v471, 64
    %v1013 = vpop.permute.xlu0 %1012
    %1014 = vrot.lane.b32.xlu0 %v473, 64
    %v1015 = vpop.permute.xlu0 %1014
    %1016 = vrot.lane.b32.xlu0 %v476, 64
    %v1017 = vpop.permute.xlu0 %1016
    %1018 = vrot.lane.b32.xlu0 %v478, 64
    %v1019 = vpop.permute.xlu0 %1018
    %1024 = vrot.lane.b32.xlu0 %v471, 32
    %v1025 = vpop.permute.xlu0 %1024
    %1026 = vrot.lane.b32.xlu0 %v473, 32
    %v1027 = vpop.permute.xlu0 %1026
    %1028 = vrot.lane.b32.xlu0 %v476, 32
    %v1029 = vpop.permute.xlu0 %1028
    %1030 = vrot.lane.b32.xlu0 %v478, 32
    %v1031 = vpop.permute.xlu0 %1030
    %v1036 = vrot.slane %v1013, 4
    %v1037 = vsel %vm540, %v1036, %v471
    %v1038 = vrot.slane %v471, 4
    %v1039 = vsel %vm540, %v1013, %v1038
    %v1041 = vunpack.c.l.s4 1983009808
    %v1042 = vunpack.c.0.s8 %v1041
    %v1043 = vperm.slane %v1037, %v1042
    %v1045 = vunpack.c.l.s4 1983009808
    %v1046 = vunpack.c.0.s8 %v1045
    %v1047 = vperm.slane %v1039, %v1046
    %v1048 = vrot.slane %v1025, 4
    %v1049 = vsel %vm540, %v1048, %v1001
    %v1050 = vrot.slane %v1001, 4
    %v1051 = vsel %vm540, %v1025, %v1050
    %v1053 = vunpack.c.l.s4 1983009808
    %v1054 = vunpack.c.0.s8 %v1053
    %v1055 = vperm.slane %v1049, %v1054
    %v1057 = vunpack.c.l.s4 1983009808
    %v1058 = vunpack.c.0.s8 %v1057
    %v1059 = vperm.slane %v1051, %v1058
    %v1060 = vrot.slane %v1055, 4
    %v1061 = vsel %vm540, %v1060, %v1043
    %v1062 = vrot.slane %v1043, 4
    %v1063 = vsel %vm540, %v1055, %v1062
    %v1065 = vunpack.c.l.s4 1934713408
    %v1066 = vunpack.c.0.s8 %v1065
    %v1067 = vperm.slane %v1061, %v1066
    %v1069 = vunpack.c.l.s4 1934713408
    %v1070 = vunpack.c.0.s8 %v1069
    %v1071 = vperm.slane %v1063, %v1070
    %v1072 = vrot.slane %v1059, 4
    %v1073 = vsel %vm540, %v1072, %v1047
    %v1074 = vrot.slane %v1047, 4
    %v1075 = vsel %vm540, %v1059, %v1074
    %v1077 = vunpack.c.l.s4 1934713408
    %v1078 = vunpack.c.0.s8 %v1077
    %v1079 = vperm.slane %v1073, %v1078
    %v1081 = vunpack.c.l.s4 1934713408
    %v1082 = vunpack.c.0.s8 %v1081
    %v1083 = vperm.slane %v1075, %v1082
    %v1084 = vrot.slane %v1067, 4
    %v1085 = vsel %vm540, 0.0, %v1084
    %v1086 = vrot.slane %v1071, 4
    %v1087 = vsel %vm540, 0.0, %v1086
    %v1088 = vrot.slane %v1079, 4
    %v1089 = vsel %vm540, 0.0, %v1088
    %v1090 = vrot.slane %v1083, 4
    %v1091 = vsel %vm540, 0.0, %v1090
    %v1092 = vrot.slane %v1015, 4
    %v1093 = vsel %vm540, %v1092, %v473
    %v1094 = vrot.slane %v473, 4
    %v1095 = vsel %vm540, %v1015, %v1094
    %v1097 = vunpack.c.l.s4 1983009808
    %v1098 = vunpack.c.0.s8 %v1097
    %v1099 = vperm.slane %v1093, %v1098
    %v1101 = vunpack.c.l.s4 1983009808
    %v1102 = vunpack.c.0.s8 %v1101
    %v1103 = vperm.slane %v1095, %v1102
    %v1104 = vrot.slane %v1027, 4
    %v1105 = vsel %vm540, %v1104, %v1003
    %v1106 = vrot.slane %v1003, 4
    %v1107 = vsel %vm540, %v1027, %v1106
    %v1109 = vunpack.c.l.s4 1983009808
    %v1110 = vunpack.c.0.s8 %v1109
    %v1111 = vperm.slane %v1105, %v1110
    %v1113 = vunpack.c.l.s4 1983009808
    %v1114 = vunpack.c.0.s8 %v1113
    %v1115 = vperm.slane %v1107, %v1114
    %v1116 = vrot.slane %v1111, 4
    %v1117 = vsel %vm540, %v1116, %v1099
    %v1118 = vrot.slane %v1099, 4
    %v1119 = vsel %vm540, %v1111, %v1118
    %v1121 = vunpack.c.l.s4 1934713408
    %v1122 = vunpack.c.0.s8 %v1121
    %v1123 = vperm.slane %v1117, %v1122
    %v1125 = vunpack.c.l.s4 1934713408
    %v1126 = vunpack.c.0.s8 %v1125
    %v1127 = vperm.slane %v1119, %v1126
    %v1128 = vrot.slane %v1115, 4
    %v1129 = vsel %vm540, %v1128, %v1103
    %v1130 = vrot.slane %v1103, 4
    %v1131 = vsel %vm540, %v1115, %v1130
    %v1133 = vunpack.c.l.s4 1934713408
    %v1134 = vunpack.c.0.s8 %v1133
    %v1135 = vperm.slane %v1129, %v1134
    %v1137 = vunpack.c.l.s4 1934713408
    %v1138 = vunpack.c.0.s8 %v1137
    %v1139 = vperm.slane %v1131, %v1138
    %v1140 = vrot.slane %v1123, 4
    %v1141 = vsel %vm540, 0.0, %v1140
    %v1142 = vrot.slane %v1127, 4
    %v1143 = vsel %vm540, 0.0, %v1142
    %v1144 = vrot.slane %v1135, 4
    %v1145 = vsel %vm540, 0.0, %v1144
    %v1146 = vrot.slane %v1139, 4
    %v1147 = vsel %vm540, 0.0, %v1146
    %v1148 = vrot.slane %v1017, 4
    %v1149 = vsel %vm540, %v1148, %v476
    %v1150 = vrot.slane %v476, 4
    %v1151 = vsel %vm540, %v1017, %v1150
    %v1153 = vunpack.c.l.s4 1983009808
    %v1154 = vunpack.c.0.s8 %v1153
    %v1155 = vperm.slane %v1149, %v1154
    %v1157 = vunpack.c.l.s4 1983009808
    %v1158 = vunpack.c.0.s8 %v1157
    %v1159 = vperm.slane %v1151, %v1158
    %v1160 = vrot.slane %v1029, 4
    %v1161 = vsel %vm540, %v1160, %v1005
    %v1162 = vrot.slane %v1005, 4
    %v1163 = vsel %vm540, %v1029, %v1162
    %v1165 = vunpack.c.l.s4 1983009808
    %v1166 = vunpack.c.0.s8 %v1165
    %v1167 = vperm.slane %v1161, %v1166
    %v1169 = vunpack.c.l.s4 1983009808
    %v1170 = vunpack.c.0.s8 %v1169
    %v1171 = vperm.slane %v1163, %v1170
    %v1172 = vrot.slane %v1167, 4
    %v1173 = vsel %vm540, %v1172, %v1155
    %v1174 = vrot.slane %v1155, 4
    %v1175 = vsel %vm540, %v1167, %v1174
    %v1177 = vunpack.c.l.s4 1934713408
    %v1178 = vunpack.c.0.s8 %v1177
    %v1179 = vperm.slane %v1173, %v1178
    %v1181 = vunpack.c.l.s4 1934713408
    %v1182 = vunpack.c.0.s8 %v1181
    %v1183 = vperm.slane %v1175, %v1182
    %v1184 = vrot.slane %v1171, 4
    %v1185 = vsel %vm540, %v1184, %v1159
    %v1186 = vrot.slane %v1159, 4
    %v1187 = vsel %vm540, %v1171, %v1186
    %v1189 = vunpack.c.l.s4 1934713408
    %v1190 = vunpack.c.0.s8 %v1189
    %v1191 = vperm.slane %v1185, %v1190
    %v1193 = vunpack.c.l.s4 1934713408
    %v1194 = vunpack.c.0.s8 %v1193
    %v1195 = vperm.slane %v1187, %v1194
    %v1196 = vrot.slane %v1179, 4
    %v1197 = vsel %vm540, 0.0, %v1196
    %v1198 = vrot.slane %v1183, 4
    %v1199 = vsel %vm540, 0.0, %v1198
    %v1200 = vrot.slane %v1191, 4
    %v1201 = vsel %vm540, 0.0, %v1200
    %v1202 = vrot.slane %v1195, 4
    %v1203 = vsel %vm540, 0.0, %v1202
    %v1204 = vrot.slane %v1019, 4
    %v1205 = vsel %vm540, %v1204, %v478
    %v1206 = vrot.slane %v478, 4
    %v1207 = vsel %vm540, %v1019, %v1206
    %v1209 = vunpack.c.l.s4 1983009808
    %v1210 = vunpack.c.0.s8 %v1209
    %v1211 = vperm.slane %v1205, %v1210
    %v1213 = vunpack.c.l.s4 1983009808
    %v1214 = vunpack.c.0.s8 %v1213
    %v1215 = vperm.slane %v1207, %v1214
    %v1216 = vrot.slane %v1031, 4
    %v1217 = vsel %vm540, %v1216, %v1007
    %v1218 = vrot.slane %v1007, 4
    %v1219 = vsel %vm540, %v1031, %v1218
    %v1221 = vunpack.c.l.s4 1983009808
    %v1222 = vunpack.c.0.s8 %v1221
    %v1223 = vperm.slane %v1217, %v1222
    %v1225 = vunpack.c.l.s4 1983009808
    %v1226 = vunpack.c.0.s8 %v1225
    %v1227 = vperm.slane %v1219, %v1226
    %v1228 = vrot.slane %v1223, 4
    %v1229 = vsel %vm540, %v1228, %v1211
    %v1230 = vrot.slane %v1211, 4
    %v1231 = vsel %vm540, %v1223, %v1230
    %v1233 = vunpack.c.l.s4 1934713408
    %v1234 = vunpack.c.0.s8 %v1233
    %v1235 = vperm.slane %v1229, %v1234
    %v1237 = vunpack.c.l.s4 1934713408
    %v1238 = vunpack.c.0.s8 %v1237
    %v1239 = vperm.slane %v1231, %v1238
    %v1240 = vrot.slane %v1227, 4
    %v1241 = vsel %vm540, %v1240, %v1215
    %v1242 = vrot.slane %v1215, 4
    %v1243 = vsel %vm540, %v1227, %v1242
    %v1245 = vunpack.c.l.s4 1934713408
    %v1246 = vunpack.c.0.s8 %v1245
    %v1247 = vperm.slane %v1241, %v1246
    %v1249 = vunpack.c.l.s4 1934713408
    %v1250 = vunpack.c.0.s8 %v1249
    %v1251 = vperm.slane %v1243, %v1250
    %v1252 = vrot.slane %v1235, 4
    %v1253 = vsel %vm540, 0.0, %v1252
    %v1254 = vrot.slane %v1239, 4
    %v1255 = vsel %vm540, 0.0, %v1254
    %v1256 = vrot.slane %v1247, 4
    %v1257 = vsel %vm540, 0.0, %v1256
    %v1258 = vrot.slane %v1251, 4
    %v1259 = vsel %vm540, 0.0, %v1258
    %v1260 = vsel %vm540, %v1086, %v1067
    %v1262 = vunpack.c.l.s4 1983009808
    %v1263 = vunpack.c.0.s8 %v1262
    %v1264 = vperm.slane %v1260, %v1263
    %v1265 = vrot.slane %v1087, 4
    %v1266 = vsel %vm540, %v1265, %v1085
    %v1268 = vunpack.c.l.s4 1983009808
    %v1269 = vunpack.c.0.s8 %v1268
    %v1270 = vperm.slane %v1266, %v1269
    %v1271 = vsel %vm540, %v1090, %v1079
    %v1273 = vunpack.c.l.s4 1983009808
    %v1274 = vunpack.c.0.s8 %v1273
    %v1275 = vperm.slane %v1271, %v1274
    %v1276 = vrot.slane %v1091, 4
    %v1277 = vsel %vm540, %v1276, %v1089
    %v1279 = vunpack.c.l.s4 1983009808
    %v1280 = vunpack.c.0.s8 %v1279
    %v1281 = vperm.slane %v1277, %v1280
    %v1282 = vrot.slane %v1270, 4
    %v1283 = vsel %vm540, %v1282, %v1264
    %v1284 = vrot.slane %v1264, 4
    %v1285 = vsel %vm540, %v1270, %v1284
    %v1287 = vunpack.c.l.s4 1934713408
    %v1288 = vunpack.c.0.s8 %v1287
    %v1289 = vperm.slane %v1283, %v1288
    %v1291 = vunpack.c.l.s4 1934713408
    %v1292 = vunpack.c.0.s8 %v1291
    %v1293 = vperm.slane %v1285, %v1292
    %v1294 = vrot.slane %v1281, 4
    %v1295 = vsel %vm540, %v1294, %v1275
    %v1296 = vrot.slane %v1275, 4
    %v1297 = vsel %vm540, %v1281, %v1296
    %v1299 = vunpack.c.l.s4 1934713408
    %v1300 = vunpack.c.0.s8 %v1299
    %v1301 = vperm.slane %v1295, %v1300
    %v1303 = vunpack.c.l.s4 1934713408
    %v1304 = vunpack.c.0.s8 %v1303
    %v1305 = vperm.slane %v1297, %v1304
    %v1306 = vrot.slane %v1301, 4
    %v1307 = vsel %vm540, %v1306, %v1289
    %v1308 = vrot.slane %v1289, 4
    %v1309 = vsel %vm540, %v1301, %v1308
    %v1310 = vrot.slane %v1305, 4
    %v1311 = vsel %vm540, %v1310, %v1293
    %v1312 = vrot.slane %v1293, 4
    %v1313 = vsel %vm540, %v1305, %v1312
    %v1314 = vsel %vm540, %v1142, %v1123
    %v1316 = vunpack.c.l.s4 1983009808
    %v1317 = vunpack.c.0.s8 %v1316
    %v1318 = vperm.slane %v1314, %v1317
    %v1319 = vrot.slane %v1143, 4
    %v1320 = vsel %vm540, %v1319, %v1141
    %v1322 = vunpack.c.l.s4 1983009808
    %v1323 = vunpack.c.0.s8 %v1322
    %v1324 = vperm.slane %v1320, %v1323
    %v1325 = vsel %vm540, %v1146, %v1135
    %v1327 = vunpack.c.l.s4 1983009808
    %v1328 = vunpack.c.0.s8 %v1327
    %v1329 = vperm.slane %v1325, %v1328
    %v1330 = vrot.slane %v1147, 4
    %v1331 = vsel %vm540, %v1330, %v1145
    %v1333 = vunpack.c.l.s4 1983009808
    %v1334 = vunpack.c.0.s8 %v1333
    %v1335 = vperm.slane %v1331, %v1334
    %v1336 = vrot.slane %v1324, 4
    %v1337 = vsel %vm540, %v1336, %v1318
    %v1338 = vrot.slane %v1318, 4
    %v1339 = vsel %vm540, %v1324, %v1338
    %v1341 = vunpack.c.l.s4 1934713408
    %v1342 = vunpack.c.0.s8 %v1341
    %v1343 = vperm.slane %v1337, %v1342
    %v1345 = vunpack.c.l.s4 1934713408
    %v1346 = vunpack.c.0.s8 %v1345
    %v1347 = vperm.slane %v1339, %v1346
    %v1348 = vrot.slane %v1335, 4
    %v1349 = vsel %vm540, %v1348, %v1329
    %v1350 = vrot.slane %v1329, 4
    %v1351 = vsel %vm540, %v1335, %v1350
    %v1353 = vunpack.c.l.s4 1934713408
    %v1354 = vunpack.c.0.s8 %v1353
    %v1355 = vperm.slane %v1349, %v1354
    %v1357 = vunpack.c.l.s4 1934713408
    %v1358 = vunpack.c.0.s8 %v1357
    %v1359 = vperm.slane %v1351, %v1358
    %v1360 = vrot.slane %v1355, 4
    %v1361 = vsel %vm540, %v1360, %v1343
    %v1362 = vrot.slane %v1343, 4
    %v1363 = vsel %vm540, %v1355, %v1362
    %v1364 = vrot.slane %v1359, 4
    %v1365 = vsel %vm540, %v1364, %v1347
    %v1366 = vrot.slane %v1347, 4
    %v1367 = vsel %vm540, %v1359, %v1366
    %v1368 = vsel %vm540, %v1198, %v1179
    %v1370 = vunpack.c.l.s4 1983009808
    %v1371 = vunpack.c.0.s8 %v1370
    %v1372 = vperm.slane %v1368, %v1371
    %v1373 = vrot.slane %v1199, 4
    %v1374 = vsel %vm540, %v1373, %v1197
    %v1376 = vunpack.c.l.s4 1983009808
    %v1377 = vunpack.c.0.s8 %v1376
    %v1378 = vperm.slane %v1374, %v1377
    %v1379 = vsel %vm540, %v1202, %v1191
    %v1381 = vunpack.c.l.s4 1983009808
    %v1382 = vunpack.c.0.s8 %v1381
    %v1383 = vperm.slane %v1379, %v1382
    %v1384 = vrot.slane %v1203, 4
    %v1385 = vsel %vm540, %v1384, %v1201
    %v1387 = vunpack.c.l.s4 1983009808
    %v1388 = vunpack.c.0.s8 %v1387
    %v1389 = vperm.slane %v1385, %v1388
    %v1390 = vrot.slane %v1378, 4
    %v1391 = vsel %vm540, %v1390, %v1372
    %v1392 = vrot.slane %v1372, 4
    %v1393 = vsel %vm540, %v1378, %v1392
    %v1395 = vunpack.c.l.s4 1934713408
    %v1396 = vunpack.c.0.s8 %v1395
    %v1397 = vperm.slane %v1391, %v1396
    %v1399 = vunpack.c.l.s4 1934713408
    %v1400 = vunpack.c.0.s8 %v1399
    %v1401 = vperm.slane %v1393, %v1400
    %v1402 = vrot.slane %v1389, 4
    %v1403 = vsel %vm540, %v1402, %v1383
    %v1404 = vrot.slane %v1383, 4
    %v1405 = vsel %vm540, %v1389, %v1404
    %v1407 = vunpack.c.l.s4 1934713408
    %v1408 = vunpack.c.0.s8 %v1407
    %v1409 = vperm.slane %v1403, %v1408
    %v1411 = vunpack.c.l.s4 1934713408
    %v1412 = vunpack.c.0.s8 %v1411
    %v1413 = vperm.slane %v1405, %v1412
    %v1414 = vrot.slane %v1409, 4
    %v1415 = vsel %vm540, %v1414, %v1397
    %v1416 = vrot.slane %v1397, 4
    %v1417 = vsel %vm540, %v1409, %v1416
    %v1418 = vrot.slane %v1413, 4
    %v1419 = vsel %vm540, %v1418, %v1401
    %v1420 = vrot.slane %v1401, 4
    %v1421 = vsel %vm540, %v1413, %v1420
    %v1422 = vsel %vm540, %v1254, %v1235
    %v1424 = vunpack.c.l.s4 1983009808
    %v1425 = vunpack.c.0.s8 %v1424
    %v1426 = vperm.slane %v1422, %v1425
    %v1427 = vrot.slane %v1255, 4
    %v1428 = vsel %vm540, %v1427, %v1253
    %v1430 = vunpack.c.l.s4 1983009808
    %v1431 = vunpack.c.0.s8 %v1430
    %v1432 = vperm.slane %v1428, %v1431
    %v1433 = vsel %vm540, %v1258, %v1247
    %v1435 = vunpack.c.l.s4 1983009808
    %v1436 = vunpack.c.0.s8 %v1435
    %v1437 = vperm.slane %v1433, %v1436
    %v1438 = vrot.slane %v1259, 4
    %v1439 = vsel %vm540, %v1438, %v1257
    %v1441 = vunpack.c.l.s4 1983009808
    %v1442 = vunpack.c.0.s8 %v1441
    %v1443 = vperm.slane %v1439, %v1442
    %v1444 = vrot.slane %v1432, 4
    %v1445 = vsel %vm540, %v1444, %v1426
    %v1446 = vrot.slane %v1426, 4
    %v1447 = vsel %vm540, %v1432, %v1446
    %v1449 = vunpack.c.l.s4 1934713408
    %v1450 = vunpack.c.0.s8 %v1449
    %v1451 = vperm.slane %v1445, %v1450
    %v1453 = vunpack.c.l.s4 1934713408
    %v1454 = vunpack.c.0.s8 %v1453
    %v1455 = vperm.slane %v1447, %v1454
    %v1456 = vrot.slane %v1443, 4
    %v1457 = vsel %vm540, %v1456, %v1437
    %v1458 = vrot.slane %v1437, 4
    %v1459 = vsel %vm540, %v1443, %v1458
    %v1461 = vunpack.c.l.s4 1934713408
    %v1462 = vunpack.c.0.s8 %v1461
    %v1463 = vperm.slane %v1457, %v1462
    %v1465 = vunpack.c.l.s4 1934713408
    %v1466 = vunpack.c.0.s8 %v1465
    %v1467 = vperm.slane %v1459, %v1466
    %v1468 = vrot.slane %v1463, 4
    %v1469 = vsel %vm540, %v1468, %v1451
    %v1470 = vrot.slane %v1451, 4
    %v1471 = vsel %vm540, %v1463, %v1470
    %v1472 = vrot.slane %v1467, 4
    %v1473 = vsel %vm540, %v1472, %v1455
    %v1474 = vrot.slane %v1455, 4
    %v1475 = vsel %vm540, %v1467, %v1474
    %v1476 = vpack.c.bf16 %v1307, %v1307
    %v1477 = vpack.c.bf16 %v1361, %v1361
    %v1478 = vpack.c.bf16 %v1309, %v1309
    %v1479 = vpack.c.bf16 %v1363, %v1363
    %v1480 = vpack.c.bf16 %v1311, %v1311
    %v1481 = vpack.c.bf16 %v1365, %v1365
    %v1482 = vpack.c.bf16 %v1313, %v1313
    %v1483 = vpack.c.bf16 %v1367, %v1367
    %v1484 = vpack.c.bf16 %v1415, %v1415
    %v1485 = vpack.c.bf16 %v1469, %v1469
    %v1486 = vpack.c.bf16 %v1417, %v1417
    %v1487 = vpack.c.bf16 %v1471, %v1471
    %v1488 = vpack.c.bf16 %v1419, %v1419
    %v1489 = vpack.c.bf16 %v1473, %v1473
    %v1490 = vpack.c.bf16 %v1421, %v1421
    %v1491 = vpack.c.bf16 %v1475, %v1475
    %1496 = vrot.lane.b32.xlu0 %v490, 96
    %v1497 = vpop.permute.xlu0 %1496
    %1498 = vrot.lane.b32.xlu0 %v492, 96
    %v1499 = vpop.permute.xlu0 %1498
    %1500 = vrot.lane.b32.xlu0 %v495, 96
    %v1501 = vpop.permute.xlu0 %1500
    %1502 = vrot.lane.b32.xlu0 %v497, 96
    %v1503 = vpop.permute.xlu0 %1502
    %1508 = vrot.lane.b32.xlu0 %v490, 64
    %v1509 = vpop.permute.xlu0 %1508
    %1510 = vrot.lane.b32.xlu0 %v492, 64
    %v1511 = vpop.permute.xlu0 %1510
    %1512 = vrot.lane.b32.xlu0 %v495, 64
    %v1513 = vpop.permute.xlu0 %1512
    %1514 = vrot.lane.b32.xlu0 %v497, 64
    %v1515 = vpop.permute.xlu0 %1514
    %1520 = vrot.lane.b32.xlu0 %v490, 32
    %v1521 = vpop.permute.xlu0 %1520
    %1522 = vrot.lane.b32.xlu0 %v492, 32
    %v1523 = vpop.permute.xlu0 %1522
    %1524 = vrot.lane.b32.xlu0 %v495, 32
    %v1525 = vpop.permute.xlu0 %1524
    %1526 = vrot.lane.b32.xlu0 %v497, 32
    %v1527 = vpop.permute.xlu0 %1526
    %v1532 = vrot.slane %v1509, 4
    %v1533 = vsel %vm540, %v1532, %v490
    %v1534 = vrot.slane %v490, 4
    %v1535 = vsel %vm540, %v1509, %v1534
    %v1537 = vunpack.c.l.s4 1983009808
    %v1538 = vunpack.c.0.s8 %v1537
    %v1539 = vperm.slane %v1533, %v1538
    %v1541 = vunpack.c.l.s4 1983009808
    %v1542 = vunpack.c.0.s8 %v1541
    %v1543 = vperm.slane %v1535, %v1542
    %v1544 = vrot.slane %v1521, 4
    %v1545 = vsel %vm540, %v1544, %v1497
    %v1546 = vrot.slane %v1497, 4
    %v1547 = vsel %vm540, %v1521, %v1546
    %v1549 = vunpack.c.l.s4 1983009808
    %v1550 = vunpack.c.0.s8 %v1549
    %v1551 = vperm.slane %v1545, %v1550
    %v1553 = vunpack.c.l.s4 1983009808
    %v1554 = vunpack.c.0.s8 %v1553
    %v1555 = vperm.slane %v1547, %v1554
    %v1556 = vrot.slane %v1551, 4
    %v1557 = vsel %vm540, %v1556, %v1539
    %v1558 = vrot.slane %v1539, 4
    %v1559 = vsel %vm540, %v1551, %v1558
    %v1561 = vunpack.c.l.s4 1934713408
    %v1562 = vunpack.c.0.s8 %v1561
    %v1563 = vperm.slane %v1557, %v1562
    %v1565 = vunpack.c.l.s4 1934713408
    %v1566 = vunpack.c.0.s8 %v1565
    %v1567 = vperm.slane %v1559, %v1566
    %v1568 = vrot.slane %v1555, 4
    %v1569 = vsel %vm540, %v1568, %v1543
    %v1570 = vrot.slane %v1543, 4
    %v1571 = vsel %vm540, %v1555, %v1570
    %v1573 = vunpack.c.l.s4 1934713408
    %v1574 = vunpack.c.0.s8 %v1573
    %v1575 = vperm.slane %v1569, %v1574
    %v1577 = vunpack.c.l.s4 1934713408
    %v1578 = vunpack.c.0.s8 %v1577
    %v1579 = vperm.slane %v1571, %v1578
    %v1580 = vrot.slane %v1563, 4
    %v1581 = vsel %vm540, 0.0, %v1580
    %v1582 = vrot.slane %v1567, 4
    %v1583 = vsel %vm540, 0.0, %v1582
    %v1584 = vrot.slane %v1575, 4
    %v1585 = vsel %vm540, 0.0, %v1584
    %v1586 = vrot.slane %v1579, 4
    %v1587 = vsel %vm540, 0.0, %v1586
    %v1588 = vrot.slane %v1511, 4
    %v1589 = vsel %vm540, %v1588, %v492
    %v1590 = vrot.slane %v492, 4
    %v1591 = vsel %vm540, %v1511, %v1590
    %v1593 = vunpack.c.l.s4 1983009808
    %v1594 = vunpack.c.0.s8 %v1593
    %v1595 = vperm.slane %v1589, %v1594
    %v1597 = vunpack.c.l.s4 1983009808
    %v1598 = vunpack.c.0.s8 %v1597
    %v1599 = vperm.slane %v1591, %v1598
    %v1600 = vrot.slane %v1523, 4
    %v1601 = vsel %vm540, %v1600, %v1499
    %v1602 = vrot.slane %v1499, 4
    %v1603 = vsel %vm540, %v1523, %v1602
    %v1605 = vunpack.c.l.s4 1983009808
    %v1606 = vunpack.c.0.s8 %v1605
    %v1607 = vperm.slane %v1601, %v1606
    %v1609 = vunpack.c.l.s4 1983009808
    %v1610 = vunpack.c.0.s8 %v1609
    %v1611 = vperm.slane %v1603, %v1610
    %v1612 = vrot.slane %v1607, 4
    %v1613 = vsel %vm540, %v1612, %v1595
    %v1614 = vrot.slane %v1595, 4
    %v1615 = vsel %vm540, %v1607, %v1614
    %v1617 = vunpack.c.l.s4 1934713408
    %v1618 = vunpack.c.0.s8 %v1617
    %v1619 = vperm.slane %v1613, %v1618
    %v1621 = vunpack.c.l.s4 1934713408
    %v1622 = vunpack.c.0.s8 %v1621
    %v1623 = vperm.slane %v1615, %v1622
    %v1624 = vrot.slane %v1611, 4
    %v1625 = vsel %vm540, %v1624, %v1599
    %v1626 = vrot.slane %v1599, 4
    %v1627 = vsel %vm540, %v1611, %v1626
    %v1629 = vunpack.c.l.s4 1934713408
    %v1630 = vunpack.c.0.s8 %v1629
    %v1631 = vperm.slane %v1625, %v1630
    %v1633 = vunpack.c.l.s4 1934713408
    %v1634 = vunpack.c.0.s8 %v1633
    %v1635 = vperm.slane %v1627, %v1634
    %v1636 = vrot.slane %v1619, 4
    %v1637 = vsel %vm540, 0.0, %v1636
    %v1638 = vrot.slane %v1623, 4
    %v1639 = vsel %vm540, 0.0, %v1638
    %v1640 = vrot.slane %v1631, 4
    %v1641 = vsel %vm540, 0.0, %v1640
    %v1642 = vrot.slane %v1635, 4
    %v1643 = vsel %vm540, 0.0, %v1642
    %v1644 = vrot.slane %v1513, 4
    %v1645 = vsel %vm540, %v1644, %v495
    %v1646 = vrot.slane %v495, 4
    %v1647 = vsel %vm540, %v1513, %v1646
    %v1649 = vunpack.c.l.s4 1983009808
    %v1650 = vunpack.c.0.s8 %v1649
    %v1651 = vperm.slane %v1645, %v1650
    %v1653 = vunpack.c.l.s4 1983009808
    %v1654 = vunpack.c.0.s8 %v1653
    %v1655 = vperm.slane %v1647, %v1654
    %v1656 = vrot.slane %v1525, 4
    %v1657 = vsel %vm540, %v1656, %v1501
    %v1658 = vrot.slane %v1501, 4
    %v1659 = vsel %vm540, %v1525, %v1658
    %v1661 = vunpack.c.l.s4 1983009808
    %v1662 = vunpack.c.0.s8 %v1661
    %v1663 = vperm.slane %v1657, %v1662
    %v1665 = vunpack.c.l.s4 1983009808
    %v1666 = vunpack.c.0.s8 %v1665
    %v1667 = vperm.slane %v1659, %v1666
    %v1668 = vrot.slane %v1663, 4
    %v1669 = vsel %vm540, %v1668, %v1651
    %v1670 = vrot.slane %v1651, 4
    %v1671 = vsel %vm540, %v1663, %v1670
    %v1673 = vunpack.c.l.s4 1934713408
    %v1674 = vunpack.c.0.s8 %v1673
    %v1675 = vperm.slane %v1669, %v1674
    %v1677 = vunpack.c.l.s4 1934713408
    %v1678 = vunpack.c.0.s8 %v1677
    %v1679 = vperm.slane %v1671, %v1678
    %v1680 = vrot.slane %v1667, 4
    %v1681 = vsel %vm540, %v1680, %v1655
    %v1682 = vrot.slane %v1655, 4
    %v1683 = vsel %vm540, %v1667, %v1682
    %v1685 = vunpack.c.l.s4 1934713408
    %v1686 = vunpack.c.0.s8 %v1685
    %v1687 = vperm.slane %v1681, %v1686
    %v1689 = vunpack.c.l.s4 1934713408
    %v1690 = vunpack.c.0.s8 %v1689
    %v1691 = vperm.slane %v1683, %v1690
    %v1692 = vrot.slane %v1675, 4
    %v1693 = vsel %vm540, 0.0, %v1692
    %v1694 = vrot.slane %v1679, 4
    %v1695 = vsel %vm540, 0.0, %v1694
    %v1696 = vrot.slane %v1687, 4
    %v1697 = vsel %vm540, 0.0, %v1696
    %v1698 = vrot.slane %v1691, 4
    %v1699 = vsel %vm540, 0.0, %v1698
    %v1700 = vrot.slane %v1515, 4
    %v1701 = vsel %vm540, %v1700, %v497
    %v1702 = vrot.slane %v497, 4
    %v1703 = vsel %vm540, %v1515, %v1702
    %v1705 = vunpack.c.l.s4 1983009808
    %v1706 = vunpack.c.0.s8 %v1705
    %v1707 = vperm.slane %v1701, %v1706
    %v1709 = vunpack.c.l.s4 1983009808
    %v1710 = vunpack.c.0.s8 %v1709
    %v1711 = vperm.slane %v1703, %v1710
    %v1712 = vrot.slane %v1527, 4
    %v1713 = vsel %vm540, %v1712, %v1503
    %v1714 = vrot.slane %v1503, 4
    %v1715 = vsel %vm540, %v1527, %v1714
    %v1717 = vunpack.c.l.s4 1983009808
    %v1718 = vunpack.c.0.s8 %v1717
    %v1719 = vperm.slane %v1713, %v1718
    %v1721 = vunpack.c.l.s4 1983009808
    %v1722 = vunpack.c.0.s8 %v1721
    %v1723 = vperm.slane %v1715, %v1722
    %v1724 = vrot.slane %v1719, 4
    %v1725 = vsel %vm540, %v1724, %v1707
    %v1726 = vrot.slane %v1707, 4
    %v1727 = vsel %vm540, %v1719, %v1726
    %v1729 = vunpack.c.l.s4 1934713408
    %v1730 = vunpack.c.0.s8 %v1729
    %v1731 = vperm.slane %v1725, %v1730
    %v1733 = vunpack.c.l.s4 1934713408
    %v1734 = vunpack.c.0.s8 %v1733
    %v1735 = vperm.slane %v1727, %v1734
    %v1736 = vrot.slane %v1723, 4
    %v1737 = vsel %vm540, %v1736, %v1711
    %v1738 = vrot.slane %v1711, 4
    %v1739 = vsel %vm540, %v1723, %v1738
    %v1741 = vunpack.c.l.s4 1934713408
    %v1742 = vunpack.c.0.s8 %v1741
    %v1743 = vperm.slane %v1737, %v1742
    %v1745 = vunpack.c.l.s4 1934713408
    %v1746 = vunpack.c.0.s8 %v1745
    %v1747 = vperm.slane %v1739, %v1746
    %v1748 = vrot.slane %v1731, 4
    %v1749 = vsel %vm540, 0.0, %v1748
    %v1750 = vrot.slane %v1735, 4
    %v1751 = vsel %vm540, 0.0, %v1750
    %v1752 = vrot.slane %v1743, 4
    %v1753 = vsel %vm540, 0.0, %v1752
    %v1754 = vrot.slane %v1747, 4
    %v1755 = vsel %vm540, 0.0, %v1754
    %v1756 = vsel %vm540, %v1582, %v1563
    %v1758 = vunpack.c.l.s4 1983009808
    %v1759 = vunpack.c.0.s8 %v1758
    %v1760 = vperm.slane %v1756, %v1759
    %v1761 = vrot.slane %v1583, 4
    %v1762 = vsel %vm540, %v1761, %v1581
    %v1764 = vunpack.c.l.s4 1983009808
    %v1765 = vunpack.c.0.s8 %v1764
    %v1766 = vperm.slane %v1762, %v1765
    %v1767 = vsel %vm540, %v1586, %v1575
    %v1769 = vunpack.c.l.s4 1983009808
    %v1770 = vunpack.c.0.s8 %v1769
    %v1771 = vperm.slane %v1767, %v1770
    %v1772 = vrot.slane %v1587, 4
    %v1773 = vsel %vm540, %v1772, %v1585
    %v1775 = vunpack.c.l.s4 1983009808
    %v1776 = vunpack.c.0.s8 %v1775
    %v1777 = vperm.slane %v1773, %v1776
    %v1778 = vrot.slane %v1766, 4
    %v1779 = vsel %vm540, %v1778, %v1760
    %v1780 = vrot.slane %v1760, 4
    %v1781 = vsel %vm540, %v1766, %v1780
    %v1783 = vunpack.c.l.s4 1934713408
    %v1784 = vunpack.c.0.s8 %v1783
    %v1785 = vperm.slane %v1779, %v1784
    %v1787 = vunpack.c.l.s4 1934713408
    %v1788 = vunpack.c.0.s8 %v1787
    %v1789 = vperm.slane %v1781, %v1788
    %v1790 = vrot.slane %v1777, 4
    %v1791 = vsel %vm540, %v1790, %v1771
    %v1792 = vrot.slane %v1771, 4
    %v1793 = vsel %vm540, %v1777, %v1792
    %v1795 = vunpack.c.l.s4 1934713408
    %v1796 = vunpack.c.0.s8 %v1795
    %v1797 = vperm.slane %v1791, %v1796
    %v1799 = vunpack.c.l.s4 1934713408
    %v1800 = vunpack.c.0.s8 %v1799
    %v1801 = vperm.slane %v1793, %v1800
    %v1802 = vrot.slane %v1797, 4
    %v1803 = vsel %vm540, %v1802, %v1785
    %v1804 = vrot.slane %v1785, 4
    %v1805 = vsel %vm540, %v1797, %v1804
    %v1806 = vrot.slane %v1801, 4
    %v1807 = vsel %vm540, %v1806, %v1789
    %v1808 = vrot.slane %v1789, 4
    %v1809 = vsel %vm540, %v1801, %v1808
    %v1810 = vsel %vm540, %v1638, %v1619
    %v1812 = vunpack.c.l.s4 1983009808
    %v1813 = vunpack.c.0.s8 %v1812
    %v1814 = vperm.slane %v1810, %v1813
    %v1815 = vrot.slane %v1639, 4
    %v1816 = vsel %vm540, %v1815, %v1637
    %v1818 = vunpack.c.l.s4 1983009808
    %v1819 = vunpack.c.0.s8 %v1818
    %v1820 = vperm.slane %v1816, %v1819
    %v1821 = vsel %vm540, %v1642, %v1631
    %v1823 = vunpack.c.l.s4 1983009808
    %v1824 = vunpack.c.0.s8 %v1823
    %v1825 = vperm.slane %v1821, %v1824
    %v1826 = vrot.slane %v1643, 4
    %v1827 = vsel %vm540, %v1826, %v1641
    %v1829 = vunpack.c.l.s4 1983009808
    %v1830 = vunpack.c.0.s8 %v1829
    %v1831 = vperm.slane %v1827, %v1830
    %v1832 = vrot.slane %v1820, 4
    %v1833 = vsel %vm540, %v1832, %v1814
    %v1834 = vrot.slane %v1814, 4
    %v1835 = vsel %vm540, %v1820, %v1834
    %v1837 = vunpack.c.l.s4 1934713408
    %v1838 = vunpack.c.0.s8 %v1837
    %v1839 = vperm.slane %v1833, %v1838
    %v1841 = vunpack.c.l.s4 1934713408
    %v1842 = vunpack.c.0.s8 %v1841
    %v1843 = vperm.slane %v1835, %v1842
    %v1844 = vrot.slane %v1831, 4
    %v1845 = vsel %vm540, %v1844, %v1825
    %v1846 = vrot.slane %v1825, 4
    %v1847 = vsel %vm540, %v1831, %v1846
    %v1849 = vunpack.c.l.s4 1934713408
    %v1850 = vunpack.c.0.s8 %v1849
    %v1851 = vperm.slane %v1845, %v1850
    %v1853 = vunpack.c.l.s4 1934713408
    %v1854 = vunpack.c.0.s8 %v1853
    %v1855 = vperm.slane %v1847, %v1854
    %v1856 = vrot.slane %v1851, 4
    %v1857 = vsel %vm540, %v1856, %v1839
    %v1858 = vrot.slane %v1839, 4
    %v1859 = vsel %vm540, %v1851, %v1858
    %v1860 = vrot.slane %v1855, 4
    %v1861 = vsel %vm540, %v1860, %v1843
    %v1862 = vrot.slane %v1843, 4
    %v1863 = vsel %vm540, %v1855, %v1862
    %v1864 = vsel %vm540, %v1694, %v1675
    %v1866 = vunpack.c.l.s4 1983009808
    %v1867 = vunpack.c.0.s8 %v1866
    %v1868 = vperm.slane %v1864, %v1867
    %v1869 = vrot.slane %v1695, 4
    %v1870 = vsel %vm540, %v1869, %v1693
    %v1872 = vunpack.c.l.s4 1983009808
    %v1873 = vunpack.c.0.s8 %v1872
    %v1874 = vperm.slane %v1870, %v1873
    %v1875 = vsel %vm540, %v1698, %v1687
    %v1877 = vunpack.c.l.s4 1983009808
    %v1878 = vunpack.c.0.s8 %v1877
    %v1879 = vperm.slane %v1875, %v1878
    %v1880 = vrot.slane %v1699, 4
    %v1881 = vsel %vm540, %v1880, %v1697
    %v1883 = vunpack.c.l.s4 1983009808
    %v1884 = vunpack.c.0.s8 %v1883
    %v1885 = vperm.slane %v1881, %v1884
    %v1886 = vrot.slane %v1874, 4
    %v1887 = vsel %vm540, %v1886, %v1868
    %v1888 = vrot.slane %v1868, 4
    %v1889 = vsel %vm540, %v1874, %v1888
    %v1891 = vunpack.c.l.s4 1934713408
    %v1892 = vunpack.c.0.s8 %v1891
    %v1893 = vperm.slane %v1887, %v1892
    %v1895 = vunpack.c.l.s4 1934713408
    %v1896 = vunpack.c.0.s8 %v1895
    %v1897 = vperm.slane %v1889, %v1896
    %v1898 = vrot.slane %v1885, 4
    %v1899 = vsel %vm540, %v1898, %v1879
    %v1900 = vrot.slane %v1879, 4
    %v1901 = vsel %vm540, %v1885, %v1900
    %v1903 = vunpack.c.l.s4 1934713408
    %v1904 = vunpack.c.0.s8 %v1903
    %v1905 = vperm.slane %v1899, %v1904
    %v1907 = vunpack.c.l.s4 1934713408
    %v1908 = vunpack.c.0.s8 %v1907
    %v1909 = vperm.slane %v1901, %v1908
    %v1910 = vrot.slane %v1905, 4
    %v1911 = vsel %vm540, %v1910, %v1893
    %v1912 = vrot.slane %v1893, 4
    %v1913 = vsel %vm540, %v1905, %v1912
    %v1914 = vrot.slane %v1909, 4
    %v1915 = vsel %vm540, %v1914, %v1897
    %v1916 = vrot.slane %v1897, 4
    %v1917 = vsel %vm540, %v1909, %v1916
    %v1918 = vsel %vm540, %v1750, %v1731
    %v1920 = vunpack.c.l.s4 1983009808
    %v1921 = vunpack.c.0.s8 %v1920
    %v1922 = vperm.slane %v1918, %v1921
    %v1923 = vrot.slane %v1751, 4
    %v1924 = vsel %vm540, %v1923, %v1749
    %v1926 = vunpack.c.l.s4 1983009808
    %v1927 = vunpack.c.0.s8 %v1926
    %v1928 = vperm.slane %v1924, %v1927
    %v1929 = vsel %vm540, %v1754, %v1743
    %v1931 = vunpack.c.l.s4 1983009808
    %v1932 = vunpack.c.0.s8 %v1931
    %v1933 = vperm.slane %v1929, %v1932
    %v1934 = vrot.slane %v1755, 4
    %v1935 = vsel %vm540, %v1934, %v1753
    %v1937 = vunpack.c.l.s4 1983009808
    %v1938 = vunpack.c.0.s8 %v1937
    %v1939 = vperm.slane %v1935, %v1938
    %v1940 = vrot.slane %v1928, 4
    %v1941 = vsel %vm540, %v1940, %v1922
    %v1942 = vrot.slane %v1922, 4
    %v1943 = vsel %vm540, %v1928, %v1942
    %v1945 = vunpack.c.l.s4 1934713408
    %v1946 = vunpack.c.0.s8 %v1945
    %v1947 = vperm.slane %v1941, %v1946
    %v1949 = vunpack.c.l.s4 1934713408
    %v1950 = vunpack.c.0.s8 %v1949
    %v1951 = vperm.slane %v1943, %v1950
    %v1952 = vrot.slane %v1939, 4
    %v1953 = vsel %vm540, %v1952, %v1933
    %v1954 = vrot.slane %v1933, 4
    %v1955 = vsel %vm540, %v1939, %v1954
    %v1957 = vunpack.c.l.s4 1934713408
    %v1958 = vunpack.c.0.s8 %v1957
    %v1959 = vperm.slane %v1953, %v1958
    %v1961 = vunpack.c.l.s4 1934713408
    %v1962 = vunpack.c.0.s8 %v1961
    %v1963 = vperm.slane %v1955, %v1962
    %v1964 = vrot.slane %v1959, 4
    %v1965 = vsel %vm540, %v1964, %v1947
    %v1966 = vrot.slane %v1947, 4
    %v1967 = vsel %vm540, %v1959, %v1966
    %v1968 = vrot.slane %v1963, 4
    %v1969 = vsel %vm540, %v1968, %v1951
    %v1970 = vrot.slane %v1951, 4
    %v1971 = vsel %vm540, %v1963, %v1970
    %v1972 = vpack.c.bf16 %v1803, %v1803
    %v1973 = vpack.c.bf16 %v1857, %v1857
    %v1974 = vpack.c.bf16 %v1805, %v1805
    %v1975 = vpack.c.bf16 %v1859, %v1859
    %v1976 = vpack.c.bf16 %v1807, %v1807
    %v1977 = vpack.c.bf16 %v1861, %v1861
    %v1978 = vpack.c.bf16 %v1809, %v1809
    %v1979 = vpack.c.bf16 %v1863, %v1863
    %v1980 = vpack.c.bf16 %v1911, %v1911
    %v1981 = vpack.c.bf16 %v1965, %v1965
    %v1982 = vpack.c.bf16 %v1913, %v1913
    %v1983 = vpack.c.bf16 %v1967, %v1967
    %v1984 = vpack.c.bf16 %v1915, %v1915
    %v1985 = vpack.c.bf16 %v1969, %v1969
    %v1986 = vpack.c.bf16 %v1917, %v1917
    %v1987 = vpack.c.bf16 %v1971, %v1971
    %v1990 = vunpack.c.l.b16 %v980
    %v1991 = vunpack.c.l.b16 %v981
    %v1992 = vpack.c.b16 %v1991, %v1990
    %v1995 = vunpack.c.l.b16 %v1476
    %v1996 = vunpack.c.l.b16 %v1477
    %v1997 = vpack.c.b16 %v1996, %v1995
    %vm1998 = vcmask 261120
    %v2000 = vsel %vm1998, %v1992, 0
    %v2003 = vsel %vm1998, %v1997, 0
    %2005 = vmatpush.bf16.xpose.msra.mxu0 0
    %2006 = vmatpush.bf16.xpose.msra.mxu0 0
    %2007 = vmatpush.bf16.xpose.msra.mxu0 0
    %2008 = vmatpush.bf16.xpose.msra.mxu0 0
    %2009 = vmatpush.bf16.xpose.msra.mxu0 0
    %2010 = vmatpush.bf16.xpose.msra.mxu0 0
    %2011 = vmatpush.bf16.xpose.msra.mxu0 0
    %2012 = vmatpush.bf16.xpose.msra.mxu0 %v2003
    %2013 = vmatmul.bf16.gmra.mxu0 %v2000
    %v2014 = vpop.f32.mrf.mxu0
    %v2015 = vadd.f32 0.0, %v2014
    %v2016 = vpop.f32.mrf.mxu0
    %v2017 = vadd.f32 0.0, %v2016
    %2018 = vdwg.mxu0
    %v2021 = vunpack.c.l.b16 %v982
    %v2022 = vunpack.c.l.b16 %v983
    %v2023 = vpack.c.b16 %v2022, %v2021
    %v2026 = vunpack.c.l.b16 %v1478
    %v2027 = vunpack.c.l.b16 %v1479
    %v2028 = vpack.c.b16 %v2027, %v2026
    %v2030 = vsel %vm1998, %v2023, 0
    %v2033 = vsel %vm1998, %v2028, 0
    %2035 = vmatpush.bf16.xpose.msra.mxu0 0
    %2036 = vmatpush.bf16.xpose.msra.mxu0 0
    %2037 = vmatpush.bf16.xpose.msra.mxu0 0
    %2038 = vmatpush.bf16.xpose.msra.mxu0 0
    %2039 = vmatpush.bf16.xpose.msra.mxu0 0
    %2040 = vmatpush.bf16.xpose.msra.mxu0 0
    %2041 = vmatpush.bf16.xpose.msra.mxu0 0
    %2042 = vmatpush.bf16.xpose.msra.mxu0 %v2033
    %2043 = vmatmul.bf16.gmra.mxu0 %v2030
    %v2044 = vpop.f32.mrf.mxu0
    %v2045 = vadd.f32 0.0, %v2044
    %v2046 = vpop.f32.mrf.mxu0
    %v2047 = vadd.f32 0.0, %v2046
    %2048 = vdwg.mxu0
    %v2051 = vunpack.c.l.b16 %v984
    %v2052 = vunpack.c.l.b16 %v985
    %v2053 = vpack.c.b16 %v2052, %v2051
    %v2056 = vunpack.c.l.b16 %v1480
    %v2057 = vunpack.c.l.b16 %v1481
    %v2058 = vpack.c.b16 %v2057, %v2056
    %v2060 = vsel %vm1998, %v2053, 0
    %v2063 = vsel %vm1998, %v2058, 0
    %2065 = vmatpush.bf16.xpose.msra.mxu0 0
    %2066 = vmatpush.bf16.xpose.msra.mxu0 0
    %2067 = vmatpush.bf16.xpose.msra.mxu0 0
    %2068 = vmatpush.bf16.xpose.msra.mxu0 0
    %2069 = vmatpush.bf16.xpose.msra.mxu0 0
    %2070 = vmatpush.bf16.xpose.msra.mxu0 0
    %2071 = vmatpush.bf16.xpose.msra.mxu0 0
    %2072 = vmatpush.bf16.xpose.msra.mxu0 %v2063
    %2073 = vmatmul.bf16.gmra.mxu0 %v2060
    %v2074 = vpop.f32.mrf.mxu0
    %v2075 = vadd.f32 0.0, %v2074
    %v2076 = vpop.f32.mrf.mxu0
    %v2077 = vadd.f32 0.0, %v2076
    %2078 = vdwg.mxu0
    %v2081 = vunpack.c.l.b16 %v986
    %v2082 = vunpack.c.l.b16 %v987
    %v2083 = vpack.c.b16 %v2082, %v2081
    %v2086 = vunpack.c.l.b16 %v1482
    %v2087 = vunpack.c.l.b16 %v1483
    %v2088 = vpack.c.b16 %v2087, %v2086
    %v2090 = vsel %vm1998, %v2083, 0
    %v2093 = vsel %vm1998, %v2088, 0
    %2095 = vmatpush.bf16.xpose.msra.mxu0 0
    %2096 = vmatpush.bf16.xpose.msra.mxu0 0
    %2097 = vmatpush.bf16.xpose.msra.mxu0 0
    %2098 = vmatpush.bf16.xpose.msra.mxu0 0
    %2099 = vmatpush.bf16.xpose.msra.mxu0 0
    %2100 = vmatpush.bf16.xpose.msra.mxu0 0
    %2101 = vmatpush.bf16.xpose.msra.mxu0 0
    %2102 = vmatpush.bf16.xpose.msra.mxu0 %v2093
    %2103 = vmatmul.bf16.gmra.mxu0 %v2090
    %v2104 = vpop.f32.mrf.mxu0
    %v2105 = vadd.f32 0.0, %v2104
    %v2106 = vpop.f32.mrf.mxu0
    %v2107 = vadd.f32 0.0, %v2106
    %2108 = vdwg.mxu0
    %v2111 = vunpack.c.l.b16 %v988
    %v2112 = vunpack.c.l.b16 %v989
    %v2113 = vpack.c.b16 %v2112, %v2111
    %v2116 = vunpack.c.l.b16 %v1484
    %v2117 = vunpack.c.l.b16 %v1485
    %v2118 = vpack.c.b16 %v2117, %v2116
    %v2120 = vsel %vm1998, %v2113, 0
    %v2123 = vsel %vm1998, %v2118, 0
    %2125 = vmatpush.bf16.xpose.msra.mxu0 0
    %2126 = vmatpush.bf16.xpose.msra.mxu0 0
    %2127 = vmatpush.bf16.xpose.msra.mxu0 0
    %2128 = vmatpush.bf16.xpose.msra.mxu0 0
    %2129 = vmatpush.bf16.xpose.msra.mxu0 0
    %2130 = vmatpush.bf16.xpose.msra.mxu0 0
    %2131 = vmatpush.bf16.xpose.msra.mxu0 0
    %2132 = vmatpush.bf16.xpose.msra.mxu0 %v2123
    %2133 = vmatmul.bf16.gmra.mxu0 %v2120
    %v2134 = vpop.f32.mrf.mxu0
    %v2135 = vadd.f32 0.0, %v2134
    %v2136 = vpop.f32.mrf.mxu0
    %v2137 = vadd.f32 0.0, %v2136
    %2138 = vdwg.mxu0
    %v2141 = vunpack.c.l.b16 %v990
    %v2142 = vunpack.c.l.b16 %v991
    %v2143 = vpack.c.b16 %v2142, %v2141
    %v2146 = vunpack.c.l.b16 %v1486
    %v2147 = vunpack.c.l.b16 %v1487
    %v2148 = vpack.c.b16 %v2147, %v2146
    %v2150 = vsel %vm1998, %v2143, 0
    %v2153 = vsel %vm1998, %v2148, 0
    %2155 = vmatpush.bf16.xpose.msra.mxu0 0
    %2156 = vmatpush.bf16.xpose.msra.mxu0 0
    %2157 = vmatpush.bf16.xpose.msra.mxu0 0
    %2158 = vmatpush.bf16.xpose.msra.mxu0 0
    %2159 = vmatpush.bf16.xpose.msra.mxu0 0
    %2160 = vmatpush.bf16.xpose.msra.mxu0 0
    %2161 = vmatpush.bf16.xpose.msra.mxu0 0
    %2162 = vmatpush.bf16.xpose.msra.mxu0 %v2153
    %2163 = vmatmul.bf16.gmra.mxu0 %v2150
    %v2164 = vpop.f32.mrf.mxu0
    %v2165 = vadd.f32 0.0, %v2164
    %v2166 = vpop.f32.mrf.mxu0
    %v2167 = vadd.f32 0.0, %v2166
    %2168 = vdwg.mxu0
    %v2171 = vunpack.c.l.b16 %v992
    %v2172 = vunpack.c.l.b16 %v993
    %v2173 = vpack.c.b16 %v2172, %v2171
    %v2176 = vunpack.c.l.b16 %v1488
    %v2177 = vunpack.c.l.b16 %v1489
    %v2178 = vpack.c.b16 %v2177, %v2176
    %v2180 = vsel %vm1998, %v2173, 0
    %v2183 = vsel %vm1998, %v2178, 0
    %2185 = vmatpush.bf16.xpose.msra.mxu0 0
    %2186 = vmatpush.bf16.xpose.msra.mxu0 0
    %2187 = vmatpush.bf16.xpose.msra.mxu0 0
    %2188 = vmatpush.bf16.xpose.msra.mxu0 0
    %2189 = vmatpush.bf16.xpose.msra.mxu0 0
    %2190 = vmatpush.bf16.xpose.msra.mxu0 0
    %2191 = vmatpush.bf16.xpose.msra.mxu0 0
    %2192 = vmatpush.bf16.xpose.msra.mxu0 %v2183
    %2193 = vmatmul.bf16.gmra.mxu0 %v2180
    %v2194 = vpop.f32.mrf.mxu0
    %v2195 = vadd.f32 0.0, %v2194
    %v2196 = vpop.f32.mrf.mxu0
    %v2197 = vadd.f32 0.0, %v2196
    %2198 = vdwg.mxu0
    %v2201 = vunpack.c.l.b16 %v994
    %v2202 = vunpack.c.l.b16 %v995
    %v2203 = vpack.c.b16 %v2202, %v2201
    %v2206 = vunpack.c.l.b16 %v1490
    %v2207 = vunpack.c.l.b16 %v1491
    %v2208 = vpack.c.b16 %v2207, %v2206
    %v2210 = vsel %vm1998, %v2203, 0
    %v2213 = vsel %vm1998, %v2208, 0
    %2215 = vmatpush.bf16.xpose.msra.mxu0 0
    %2216 = vmatpush.bf16.xpose.msra.mxu0 0
    %2217 = vmatpush.bf16.xpose.msra.mxu0 0
    %2218 = vmatpush.bf16.xpose.msra.mxu0 0
    %2219 = vmatpush.bf16.xpose.msra.mxu0 0
    %2220 = vmatpush.bf16.xpose.msra.mxu0 0
    %2221 = vmatpush.bf16.xpose.msra.mxu0 0
    %2222 = vmatpush.bf16.xpose.msra.mxu0 %v2213
    %2223 = vmatmul.bf16.gmra.mxu0 %v2210
    %v2224 = vpop.f32.mrf.mxu0
    %v2225 = vadd.f32 0.0, %v2224
    %v2226 = vpop.f32.mrf.mxu0
    %v2227 = vadd.f32 0.0, %v2226
    %2228 = vdwg.mxu0
    %v2229 = vmul.f32 %v2015, 0.17677669
    %v2230 = vmul.f32 %v2017, 0.17677669
    %v2231 = vmul.f32 %v2045, 0.17677669
    %v2232 = vmul.f32 %v2047, 0.17677669
    %v2233 = vmul.f32 %v2075, 0.17677669
    %v2234 = vmul.f32 %v2077, 0.17677669
    %v2235 = vmul.f32 %v2105, 0.17677669
    %v2236 = vmul.f32 %v2107, 0.17677669
    %v2237 = vmul.f32 %v2135, 0.17677669
    %v2238 = vmul.f32 %v2137, 0.17677669
    %v2239 = vmul.f32 %v2165, 0.17677669
    %v2240 = vmul.f32 %v2167, 0.17677669
    %v2241 = vmul.f32 %v2195, 0.17677669
    %v2242 = vmul.f32 %v2197, 0.17677669
    %v2243 = vmul.f32 %v2225, 0.17677669
    %v2244 = vmul.f32 %v2227, 0.17677669
    %vm2245 = vcmask 130048
    %v2246 = vsel %vm2245, %v2229, -inf
    %2247 = vmax.xlane.f32.xlu0 %v2246
    %v2248 = vpop.xlane.xlu0 %2247
    %v2249 = vsel %vm2245, %v2230, -inf
    %2250 = vmax.xlane.f32.xlu0 %v2249
    %v2251 = vpop.xlane.xlu0 %2250
    %v2252 = vsel %vm2245, %v2231, -inf
    %2253 = vmax.xlane.f32.xlu0 %v2252
    %v2254 = vpop.xlane.xlu0 %2253
    %v2255 = vsel %vm2245, %v2232, -inf
    %2256 = vmax.xlane.f32.xlu0 %v2255
    %v2257 = vpop.xlane.xlu0 %2256
    %v2258 = vsel %vm2245, %v2233, -inf
    %2259 = vmax.xlane.f32.xlu0 %v2258
    %v2260 = vpop.xlane.xlu0 %2259
    %v2261 = vsel %vm2245, %v2234, -inf
    %2262 = vmax.xlane.f32.xlu0 %v2261
    %v2263 = vpop.xlane.xlu0 %2262
    %v2264 = vsel %vm2245, %v2235, -inf
    %2265 = vmax.xlane.f32.xlu0 %v2264
    %v2266 = vpop.xlane.xlu0 %2265
    %v2267 = vsel %vm2245, %v2236, -inf
    %2268 = vmax.xlane.f32.xlu0 %v2267
    %v2269 = vpop.xlane.xlu0 %2268
    %v2270 = vsel %vm2245, %v2237, -inf
    %2271 = vmax.xlane.f32.xlu0 %v2270
    %v2272 = vpop.xlane.xlu0 %2271
    %v2273 = vsel %vm2245, %v2238, -inf
    %2274 = vmax.xlane.f32.xlu0 %v2273
    %v2275 = vpop.xlane.xlu0 %2274
    %v2276 = vsel %vm2245, %v2239, -inf
    %2277 = vmax.xlane.f32.xlu0 %v2276
    %v2278 = vpop.xlane.xlu0 %2277
    %v2279 = vsel %vm2245, %v2240, -inf
    %2280 = vmax.xlane.f32.xlu0 %v2279
    %v2281 = vpop.xlane.xlu0 %2280
    %v2282 = vsel %vm2245, %v2241, -inf
    %2283 = vmax.xlane.f32.xlu0 %v2282
    %v2284 = vpop.xlane.xlu0 %2283
    %v2285 = vsel %vm2245, %v2242, -inf
    %2286 = vmax.xlane.f32.xlu0 %v2285
    %v2287 = vpop.xlane.xlu0 %2286
    %v2288 = vsel %vm2245, %v2243, -inf
    %2289 = vmax.xlane.f32.xlu0 %v2288
    %v2290 = vpop.xlane.xlu0 %2289
    %v2291 = vsel %vm2245, %v2244, -inf
    %2292 = vmax.xlane.f32.xlu0 %v2291
    %v2293 = vpop.xlane.xlu0 %2292
    %v2294 = vsub.f32 %v2229, %v2248
    %v2295 = vsub.f32 %v2230, %v2251
    %v2296 = vsub.f32 %v2231, %v2254
    %v2297 = vsub.f32 %v2232, %v2257
    %v2298 = vsub.f32 %v2233, %v2260
    %v2299 = vsub.f32 %v2234, %v2263
    %v2300 = vsub.f32 %v2235, %v2266
    %v2301 = vsub.f32 %v2236, %v2269
    %v2302 = vsub.f32 %v2237, %v2272
    %v2303 = vsub.f32 %v2238, %v2275
    %v2304 = vsub.f32 %v2239, %v2278
    %v2305 = vsub.f32 %v2240, %v2281
    %v2306 = vsub.f32 %v2241, %v2284
    %v2307 = vsub.f32 %v2242, %v2287
    %v2308 = vsub.f32 %v2243, %v2290
    %v2309 = vsub.f32 %v2244, %v2293
    %v2310 = vmul.f32 %v2294, 1.442695
    %v2311 = vpow.pop %v2310
    %v2312 = vmul.f32 %v2295, 1.442695
    %v2313 = vpow.pop %v2312
    %v2314 = vmul.f32 %v2296, 1.442695
    %v2315 = vpow.pop %v2314
    %v2316 = vmul.f32 %v2297, 1.442695
    %v2317 = vpow.pop %v2316
    %v2318 = vmul.f32 %v2298, 1.442695
    %v2319 = vpow.pop %v2318
    %v2320 = vmul.f32 %v2299, 1.442695
    %v2321 = vpow.pop %v2320
    %v2322 = vmul.f32 %v2300, 1.442695
    %v2323 = vpow.pop %v2322
    %v2324 = vmul.f32 %v2301, 1.442695
    %v2325 = vpow.pop %v2324
    %v2326 = vmul.f32 %v2302, 1.442695
    %v2327 = vpow.pop %v2326
    %v2328 = vmul.f32 %v2303, 1.442695
    %v2329 = vpow.pop %v2328
    %v2330 = vmul.f32 %v2304, 1.442695
    %v2331 = vpow.pop %v2330
    %v2332 = vmul.f32 %v2305, 1.442695
    %v2333 = vpow.pop %v2332
    %v2334 = vmul.f32 %v2306, 1.442695
    %v2335 = vpow.pop %v2334
    %v2336 = vmul.f32 %v2307, 1.442695
    %v2337 = vpow.pop %v2336
    %v2338 = vmul.f32 %v2308, 1.442695
    %v2339 = vpow.pop %v2338
    %v2340 = vmul.f32 %v2309, 1.442695
    %v2341 = vpow.pop %v2340
    %v2342 = vsel %vm2245, %v2311, 0.0
    %2343 = vadd.xlane.f32.xlu0 %v2342
    %v2344 = vpop.xlane.xlu0 %2343
    %v2345 = vsel %vm2245, %v2313, 0.0
    %2346 = vadd.xlane.f32.xlu0 %v2345
    %v2347 = vpop.xlane.xlu0 %2346
    %v2348 = vsel %vm2245, %v2315, 0.0
    %2349 = vadd.xlane.f32.xlu0 %v2348
    %v2350 = vpop.xlane.xlu0 %2349
    %v2351 = vsel %vm2245, %v2317, 0.0
    %2352 = vadd.xlane.f32.xlu0 %v2351
    %v2353 = vpop.xlane.xlu0 %2352
    %v2354 = vsel %vm2245, %v2319, 0.0
    %2355 = vadd.xlane.f32.xlu0 %v2354
    %v2356 = vpop.xlane.xlu0 %2355
    %v2357 = vsel %vm2245, %v2321, 0.0
    %2358 = vadd.xlane.f32.xlu0 %v2357
    %v2359 = vpop.xlane.xlu0 %2358
    %v2360 = vsel %vm2245, %v2323, 0.0
    %2361 = vadd.xlane.f32.xlu0 %v2360
    %v2362 = vpop.xlane.xlu0 %2361
    %v2363 = vsel %vm2245, %v2325, 0.0
    %2364 = vadd.xlane.f32.xlu0 %v2363
    %v2365 = vpop.xlane.xlu0 %2364
    %v2366 = vsel %vm2245, %v2327, 0.0
    %2367 = vadd.xlane.f32.xlu0 %v2366
    %v2368 = vpop.xlane.xlu0 %2367
    %v2369 = vsel %vm2245, %v2329, 0.0
    %2370 = vadd.xlane.f32.xlu0 %v2369
    %v2371 = vpop.xlane.xlu0 %2370
    %v2372 = vsel %vm2245, %v2331, 0.0
    %2373 = vadd.xlane.f32.xlu0 %v2372
    %v2374 = vpop.xlane.xlu0 %2373
    %v2375 = vsel %vm2245, %v2333, 0.0
    %2376 = vadd.xlane.f32.xlu0 %v2375
    %v2377 = vpop.xlane.xlu0 %2376
    %v2378 = vsel %vm2245, %v2335, 0.0
    %2379 = vadd.xlane.f32.xlu0 %v2378
    %v2380 = vpop.xlane.xlu0 %2379
    %v2381 = vsel %vm2245, %v2337, 0.0
    %2382 = vadd.xlane.f32.xlu0 %v2381
    %v2383 = vpop.xlane.xlu0 %2382
    %v2384 = vsel %vm2245, %v2339, 0.0
    %2385 = vadd.xlane.f32.xlu0 %v2384
    %v2386 = vpop.xlane.xlu0 %2385
    %v2387 = vsel %vm2245, %v2341, 0.0
    %2388 = vadd.xlane.f32.xlu0 %v2387
    %v2389 = vpop.xlane.xlu0 %2388
    %v2390 = vrcp.pop %v2344
    %v2391 = vrcp.pop %v2347
    %v2392 = vrcp.pop %v2350
    %v2393 = vrcp.pop %v2353
    %v2394 = vrcp.pop %v2356
    %v2395 = vrcp.pop %v2359
    %v2396 = vrcp.pop %v2362
    %v2397 = vrcp.pop %v2365
    %v2398 = vrcp.pop %v2368
    %v2399 = vrcp.pop %v2371
    %v2400 = vrcp.pop %v2374
    %v2401 = vrcp.pop %v2377
    %v2402 = vrcp.pop %v2380
    %v2403 = vrcp.pop %v2383
    %v2404 = vrcp.pop %v2386
    %v2405 = vrcp.pop %v2389
    %v2406 = vmul.f32 %v2311, %v2390
    %v2407 = vmul.f32 %v2313, %v2391
    %v2408 = vmul.f32 %v2315, %v2392
    %v2409 = vmul.f32 %v2317, %v2393
    %v2410 = vmul.f32 %v2319, %v2394
    %v2411 = vmul.f32 %v2321, %v2395
    %v2412 = vmul.f32 %v2323, %v2396
    %v2413 = vmul.f32 %v2325, %v2397
    %v2414 = vmul.f32 %v2327, %v2398
    %v2415 = vmul.f32 %v2329, %v2399
    %v2416 = vmul.f32 %v2331, %v2400
    %v2417 = vmul.f32 %v2333, %v2401
    %v2418 = vmul.f32 %v2335, %v2402
    %v2419 = vmul.f32 %v2337, %v2403
    %v2420 = vmul.f32 %v2339, %v2404
    %v2421 = vmul.f32 %v2341, %v2405
    %v2422 = vpack.c.bf16 %v2406, %v2406
    %v2423 = vpack.c.bf16 %v2407, %v2407
    %v2424 = vpack.c.bf16 %v2408, %v2408
    %v2425 = vpack.c.bf16 %v2409, %v2409
    %v2426 = vpack.c.bf16 %v2410, %v2410
    %v2427 = vpack.c.bf16 %v2411, %v2411
    %v2428 = vpack.c.bf16 %v2412, %v2412
    %v2429 = vpack.c.bf16 %v2413, %v2413
    %v2430 = vpack.c.bf16 %v2414, %v2414
    %v2431 = vpack.c.bf16 %v2415, %v2415
    %v2432 = vpack.c.bf16 %v2416, %v2416
    %v2433 = vpack.c.bf16 %v2417, %v2417
    %v2434 = vpack.c.bf16 %v2418, %v2418
    %v2435 = vpack.c.bf16 %v2419, %v2419
    %v2436 = vpack.c.bf16 %v2420, %v2420
    %v2437 = vpack.c.bf16 %v2421, %v2421
    %v2440 = vunpack.c.l.b16 %v2422
    %v2441 = vunpack.c.l.b16 %v2423
    %v2442 = vpack.c.b16 %v2441, %v2440
    %v2445 = vunpack.c.l.b16 %v1972
    %v2446 = vunpack.c.l.b16 %v1973
    %v2447 = vpack.c.b16 %v2446, %v2445
    %v2450 = vsel %vm2245, %v2442, 0
    %2452 = vmatpush.bf16.msra.mxu0 0
    %2453 = vmatpush.bf16.msra.mxu0 0
    %2454 = vmatpush.bf16.msra.mxu0 0
    %2455 = vmatpush.bf16.msra.mxu0 0
    %2456 = vmatpush.bf16.msra.mxu0 0
    %2457 = vmatpush.bf16.msra.mxu0 0
    %2458 = vmatpush.bf16.msra.mxu0 0
    %2459 = vmatpush.bf16.msra.mxu0 %v2447
    %2460 = vmatmul.bf16.gmra.mxu0 %v2450
    %v2461 = vpop.f32.mrf.mxu0
    %v2462 = vadd.f32 0.0, %v2461
    %v2463 = vpop.f32.mrf.mxu0
    %v2464 = vadd.f32 0.0, %v2463
    %2465 = vdwg.mxu0
    %v2468 = vunpack.c.l.b16 %v2424
    %v2469 = vunpack.c.l.b16 %v2425
    %v2470 = vpack.c.b16 %v2469, %v2468
    %v2473 = vunpack.c.l.b16 %v1974
    %v2474 = vunpack.c.l.b16 %v1975
    %v2475 = vpack.c.b16 %v2474, %v2473
    %v2478 = vsel %vm2245, %v2470, 0
    %2480 = vmatpush.bf16.msra.mxu0 0
    %2481 = vmatpush.bf16.msra.mxu0 0
    %2482 = vmatpush.bf16.msra.mxu0 0
    %2483 = vmatpush.bf16.msra.mxu0 0
    %2484 = vmatpush.bf16.msra.mxu0 0
    %2485 = vmatpush.bf16.msra.mxu0 0
    %2486 = vmatpush.bf16.msra.mxu0 0
    %2487 = vmatpush.bf16.msra.mxu0 %v2475
    %2488 = vmatmul.bf16.gmra.mxu0 %v2478
    %v2489 = vpop.f32.mrf.mxu0
    %v2490 = vadd.f32 0.0, %v2489
    %v2491 = vpop.f32.mrf.mxu0
    %v2492 = vadd.f32 0.0, %v2491
    %2493 = vdwg.mxu0
    %v2496 = vunpack.c.l.b16 %v2426
    %v2497 = vunpack.c.l.b16 %v2427
    %v2498 = vpack.c.b16 %v2497, %v2496
    %v2501 = vunpack.c.l.b16 %v1976
    %v2502 = vunpack.c.l.b16 %v1977
    %v2503 = vpack.c.b16 %v2502, %v2501
    %v2506 = vsel %vm2245, %v2498, 0
    %2508 = vmatpush.bf16.msra.mxu0 0
    %2509 = vmatpush.bf16.msra.mxu0 0
    %2510 = vmatpush.bf16.msra.mxu0 0
    %2511 = vmatpush.bf16.msra.mxu0 0
    %2512 = vmatpush.bf16.msra.mxu0 0
    %2513 = vmatpush.bf16.msra.mxu0 0
    %2514 = vmatpush.bf16.msra.mxu0 0
    %2515 = vmatpush.bf16.msra.mxu0 %v2503
    %2516 = vmatmul.bf16.gmra.mxu0 %v2506
    %v2517 = vpop.f32.mrf.mxu0
    %v2518 = vadd.f32 0.0, %v2517
    %v2519 = vpop.f32.mrf.mxu0
    %v2520 = vadd.f32 0.0, %v2519
    %2521 = vdwg.mxu0
    %v2524 = vunpack.c.l.b16 %v2428
    %v2525 = vunpack.c.l.b16 %v2429
    %v2526 = vpack.c.b16 %v2525, %v2524
    %v2529 = vunpack.c.l.b16 %v1978
    %v2530 = vunpack.c.l.b16 %v1979
    %v2531 = vpack.c.b16 %v2530, %v2529
    %v2534 = vsel %vm2245, %v2526, 0
    %2536 = vmatpush.bf16.msra.mxu0 0
    %2537 = vmatpush.bf16.msra.mxu0 0
    %2538 = vmatpush.bf16.msra.mxu0 0
    %2539 = vmatpush.bf16.msra.mxu0 0
    %2540 = vmatpush.bf16.msra.mxu0 0
    %2541 = vmatpush.bf16.msra.mxu0 0
    %2542 = vmatpush.bf16.msra.mxu0 0
    %2543 = vmatpush.bf16.msra.mxu0 %v2531
    %2544 = vmatmul.bf16.gmra.mxu0 %v2534
    %v2545 = vpop.f32.mrf.mxu0
    %v2546 = vadd.f32 0.0, %v2545
    %v2547 = vpop.f32.mrf.mxu0
    %v2548 = vadd.f32 0.0, %v2547
    %2549 = vdwg.mxu0
    %v2552 = vunpack.c.l.b16 %v2430
    %v2553 = vunpack.c.l.b16 %v2431
    %v2554 = vpack.c.b16 %v2553, %v2552
    %v2557 = vunpack.c.l.b16 %v1980
    %v2558 = vunpack.c.l.b16 %v1981
    %v2559 = vpack.c.b16 %v2558, %v2557
    %v2562 = vsel %vm2245, %v2554, 0
    %2564 = vmatpush.bf16.msra.mxu0 0
    %2565 = vmatpush.bf16.msra.mxu0 0
    %2566 = vmatpush.bf16.msra.mxu0 0
    %2567 = vmatpush.bf16.msra.mxu0 0
    %2568 = vmatpush.bf16.msra.mxu0 0
    %2569 = vmatpush.bf16.msra.mxu0 0
    %2570 = vmatpush.bf16.msra.mxu0 0
    %2571 = vmatpush.bf16.msra.mxu0 %v2559
    %2572 = vmatmul.bf16.gmra.mxu0 %v2562
    %v2573 = vpop.f32.mrf.mxu0
    %v2574 = vadd.f32 0.0, %v2573
    %v2575 = vpop.f32.mrf.mxu0
    %v2576 = vadd.f32 0.0, %v2575
    %2577 = vdwg.mxu0
    %v2580 = vunpack.c.l.b16 %v2432
    %v2581 = vunpack.c.l.b16 %v2433
    %v2582 = vpack.c.b16 %v2581, %v2580
    %v2585 = vunpack.c.l.b16 %v1982
    %v2586 = vunpack.c.l.b16 %v1983
    %v2587 = vpack.c.b16 %v2586, %v2585
    %v2590 = vsel %vm2245, %v2582, 0
    %2592 = vmatpush.bf16.msra.mxu0 0
    %2593 = vmatpush.bf16.msra.mxu0 0
    %2594 = vmatpush.bf16.msra.mxu0 0
    %2595 = vmatpush.bf16.msra.mxu0 0
    %2596 = vmatpush.bf16.msra.mxu0 0
    %2597 = vmatpush.bf16.msra.mxu0 0
    %2598 = vmatpush.bf16.msra.mxu0 0
    %2599 = vmatpush.bf16.msra.mxu0 %v2587
    %2600 = vmatmul.bf16.gmra.mxu0 %v2590
    %v2601 = vpop.f32.mrf.mxu0
    %v2602 = vadd.f32 0.0, %v2601
    %v2603 = vpop.f32.mrf.mxu0
    %v2604 = vadd.f32 0.0, %v2603
    %2605 = vdwg.mxu0
    %v2608 = vunpack.c.l.b16 %v2434
    %v2609 = vunpack.c.l.b16 %v2435
    %v2610 = vpack.c.b16 %v2609, %v2608
    %v2613 = vunpack.c.l.b16 %v1984
    %v2614 = vunpack.c.l.b16 %v1985
    %v2615 = vpack.c.b16 %v2614, %v2613
    %v2618 = vsel %vm2245, %v2610, 0
    %2620 = vmatpush.bf16.msra.mxu0 0
    %2621 = vmatpush.bf16.msra.mxu0 0
    %2622 = vmatpush.bf16.msra.mxu0 0
    %2623 = vmatpush.bf16.msra.mxu0 0
    %2624 = vmatpush.bf16.msra.mxu0 0
    %2625 = vmatpush.bf16.msra.mxu0 0
    %2626 = vmatpush.bf16.msra.mxu0 0
    %2627 = vmatpush.bf16.msra.mxu0 %v2615
    %2628 = vmatmul.bf16.gmra.mxu0 %v2618
    %v2629 = vpop.f32.mrf.mxu0
    %v2630 = vadd.f32 0.0, %v2629
    %v2631 = vpop.f32.mrf.mxu0
    %v2632 = vadd.f32 0.0, %v2631
    %2633 = vdwg.mxu0
    %v2636 = vunpack.c.l.b16 %v2436
    %v2637 = vunpack.c.l.b16 %v2437
    %v2638 = vpack.c.b16 %v2637, %v2636
    %v2641 = vunpack.c.l.b16 %v1986
    %v2642 = vunpack.c.l.b16 %v1987
    %v2643 = vpack.c.b16 %v2642, %v2641
    %v2646 = vsel %vm2245, %v2638, 0
    %2648 = vmatpush.bf16.msra.mxu0 0
    %2649 = vmatpush.bf16.msra.mxu0 0
    %2650 = vmatpush.bf16.msra.mxu0 0
    %2651 = vmatpush.bf16.msra.mxu0 0
    %2652 = vmatpush.bf16.msra.mxu0 0
    %2653 = vmatpush.bf16.msra.mxu0 0
    %2654 = vmatpush.bf16.msra.mxu0 0
    %2655 = vmatpush.bf16.msra.mxu0 %v2643
    %2656 = vmatmul.bf16.gmra.mxu0 %v2646
    %v2657 = vpop.f32.mrf.mxu0
    %v2658 = vadd.f32 0.0, %v2657
    %v2659 = vpop.f32.mrf.mxu0
    %v2660 = vadd.f32 0.0, %v2659
    %2661 = vdwg.mxu0
    %v2662 = vrot.slane %v2518, 4
    %v2663 = vsel %vm540, %v2662, %v2462
    %v2664 = vrot.slane %v2462, 4
    %v2665 = vsel %vm540, %v2518, %v2664
    %v2667 = vunpack.c.l.s4 1983009808
    %v2668 = vunpack.c.0.s8 %v2667
    %v2669 = vperm.slane %v2663, %v2668
    %v2671 = vunpack.c.l.s4 1983009808
    %v2672 = vunpack.c.0.s8 %v2671
    %v2673 = vperm.slane %v2665, %v2672
    %v2674 = vrot.slane %v2546, 4
    %v2675 = vsel %vm540, %v2674, %v2490
    %v2676 = vrot.slane %v2490, 4
    %v2677 = vsel %vm540, %v2546, %v2676
    %v2679 = vunpack.c.l.s4 1983009808
    %v2680 = vunpack.c.0.s8 %v2679
    %v2681 = vperm.slane %v2675, %v2680
    %v2683 = vunpack.c.l.s4 1983009808
    %v2684 = vunpack.c.0.s8 %v2683
    %v2685 = vperm.slane %v2677, %v2684
    %v2686 = vrot.slane %v2681, 4
    %v2687 = vsel %vm540, %v2686, %v2669
    %v2688 = vrot.slane %v2669, 4
    %v2689 = vsel %vm540, %v2681, %v2688
    %v2691 = vunpack.c.l.s4 1934713408
    %v2692 = vunpack.c.0.s8 %v2691
    %v2693 = vperm.slane %v2687, %v2692
    %v2695 = vunpack.c.l.s4 1934713408
    %v2696 = vunpack.c.0.s8 %v2695
    %v2697 = vperm.slane %v2689, %v2696
    %v2698 = vrot.slane %v2685, 4
    %v2699 = vsel %vm540, %v2698, %v2673
    %v2700 = vrot.slane %v2673, 4
    %v2701 = vsel %vm540, %v2685, %v2700
    %v2703 = vunpack.c.l.s4 1934713408
    %v2704 = vunpack.c.0.s8 %v2703
    %v2705 = vperm.slane %v2699, %v2704
    %v2707 = vunpack.c.l.s4 1934713408
    %v2708 = vunpack.c.0.s8 %v2707
    %v2709 = vperm.slane %v2701, %v2708
    %v2710 = vrot.slane %v2693, 4
    %v2711 = vsel %vm540, 0.0, %v2710
    %v2712 = vrot.slane %v2697, 4
    %v2713 = vsel %vm540, 0.0, %v2712
    %v2714 = vrot.slane %v2705, 4
    %v2715 = vsel %vm540, 0.0, %v2714
    %v2716 = vrot.slane %v2709, 4
    %v2717 = vsel %vm540, 0.0, %v2716
    %v2718 = vrot.slane %v2520, 4
    %v2719 = vsel %vm540, %v2718, %v2464
    %v2720 = vrot.slane %v2464, 4
    %v2721 = vsel %vm540, %v2520, %v2720
    %v2723 = vunpack.c.l.s4 1983009808
    %v2724 = vunpack.c.0.s8 %v2723
    %v2725 = vperm.slane %v2719, %v2724
    %v2727 = vunpack.c.l.s4 1983009808
    %v2728 = vunpack.c.0.s8 %v2727
    %v2729 = vperm.slane %v2721, %v2728
    %v2730 = vrot.slane %v2548, 4
    %v2731 = vsel %vm540, %v2730, %v2492
    %v2732 = vrot.slane %v2492, 4
    %v2733 = vsel %vm540, %v2548, %v2732
    %v2735 = vunpack.c.l.s4 1983009808
    %v2736 = vunpack.c.0.s8 %v2735
    %v2737 = vperm.slane %v2731, %v2736
    %v2739 = vunpack.c.l.s4 1983009808
    %v2740 = vunpack.c.0.s8 %v2739
    %v2741 = vperm.slane %v2733, %v2740
    %v2742 = vrot.slane %v2737, 4
    %v2743 = vsel %vm540, %v2742, %v2725
    %v2744 = vrot.slane %v2725, 4
    %v2745 = vsel %vm540, %v2737, %v2744
    %v2747 = vunpack.c.l.s4 1934713408
    %v2748 = vunpack.c.0.s8 %v2747
    %v2749 = vperm.slane %v2743, %v2748
    %v2751 = vunpack.c.l.s4 1934713408
    %v2752 = vunpack.c.0.s8 %v2751
    %v2753 = vperm.slane %v2745, %v2752
    %v2754 = vrot.slane %v2741, 4
    %v2755 = vsel %vm540, %v2754, %v2729
    %v2756 = vrot.slane %v2729, 4
    %v2757 = vsel %vm540, %v2741, %v2756
    %v2759 = vunpack.c.l.s4 1934713408
    %v2760 = vunpack.c.0.s8 %v2759
    %v2761 = vperm.slane %v2755, %v2760
    %v2763 = vunpack.c.l.s4 1934713408
    %v2764 = vunpack.c.0.s8 %v2763
    %v2765 = vperm.slane %v2757, %v2764
    %v2766 = vrot.slane %v2749, 4
    %v2767 = vsel %vm540, 0.0, %v2766
    %v2768 = vrot.slane %v2753, 4
    %v2769 = vsel %vm540, 0.0, %v2768
    %v2770 = vrot.slane %v2761, 4
    %v2771 = vsel %vm540, 0.0, %v2770
    %v2772 = vrot.slane %v2765, 4
    %v2773 = vsel %vm540, 0.0, %v2772
    %v2774 = vrot.slane %v2630, 4
    %v2775 = vsel %vm540, %v2774, %v2574
    %v2776 = vrot.slane %v2574, 4
    %v2777 = vsel %vm540, %v2630, %v2776
    %v2779 = vunpack.c.l.s4 1983009808
    %v2780 = vunpack.c.0.s8 %v2779
    %v2781 = vperm.slane %v2775, %v2780
    %v2783 = vunpack.c.l.s4 1983009808
    %v2784 = vunpack.c.0.s8 %v2783
    %v2785 = vperm.slane %v2777, %v2784
    %v2786 = vrot.slane %v2658, 4
    %v2787 = vsel %vm540, %v2786, %v2602
    %v2788 = vrot.slane %v2602, 4
    %v2789 = vsel %vm540, %v2658, %v2788
    %v2791 = vunpack.c.l.s4 1983009808
    %v2792 = vunpack.c.0.s8 %v2791
    %v2793 = vperm.slane %v2787, %v2792
    %v2795 = vunpack.c.l.s4 1983009808
    %v2796 = vunpack.c.0.s8 %v2795
    %v2797 = vperm.slane %v2789, %v2796
    %v2798 = vrot.slane %v2793, 4
    %v2799 = vsel %vm540, %v2798, %v2781
    %v2800 = vrot.slane %v2781, 4
    %v2801 = vsel %vm540, %v2793, %v2800
    %v2803 = vunpack.c.l.s4 1934713408
    %v2804 = vunpack.c.0.s8 %v2803
    %v2805 = vperm.slane %v2799, %v2804
    %v2807 = vunpack.c.l.s4 1934713408
    %v2808 = vunpack.c.0.s8 %v2807
    %v2809 = vperm.slane %v2801, %v2808
    %v2810 = vrot.slane %v2797, 4
    %v2811 = vsel %vm540, %v2810, %v2785
    %v2812 = vrot.slane %v2785, 4
    %v2813 = vsel %vm540, %v2797, %v2812
    %v2815 = vunpack.c.l.s4 1934713408
    %v2816 = vunpack.c.0.s8 %v2815
    %v2817 = vperm.slane %v2811, %v2816
    %v2819 = vunpack.c.l.s4 1934713408
    %v2820 = vunpack.c.0.s8 %v2819
    %v2821 = vperm.slane %v2813, %v2820
    %v2822 = vrot.slane %v2805, 4
    %v2823 = vsel %vm540, 0.0, %v2822
    %v2824 = vrot.slane %v2809, 4
    %v2825 = vsel %vm540, 0.0, %v2824
    %v2826 = vrot.slane %v2817, 4
    %v2827 = vsel %vm540, 0.0, %v2826
    %v2828 = vrot.slane %v2821, 4
    %v2829 = vsel %vm540, 0.0, %v2828
    %v2830 = vrot.slane %v2632, 4
    %v2831 = vsel %vm540, %v2830, %v2576
    %v2832 = vrot.slane %v2576, 4
    %v2833 = vsel %vm540, %v2632, %v2832
    %v2835 = vunpack.c.l.s4 1983009808
    %v2836 = vunpack.c.0.s8 %v2835
    %v2837 = vperm.slane %v2831, %v2836
    %v2839 = vunpack.c.l.s4 1983009808
    %v2840 = vunpack.c.0.s8 %v2839
    %v2841 = vperm.slane %v2833, %v2840
    %v2842 = vrot.slane %v2660, 4
    %v2843 = vsel %vm540, %v2842, %v2604
    %v2844 = vrot.slane %v2604, 4
    %v2845 = vsel %vm540, %v2660, %v2844
    %v2847 = vunpack.c.l.s4 1983009808
    %v2848 = vunpack.c.0.s8 %v2847
    %v2849 = vperm.slane %v2843, %v2848
    %v2851 = vunpack.c.l.s4 1983009808
    %v2852 = vunpack.c.0.s8 %v2851
    %v2853 = vperm.slane %v2845, %v2852
    %v2854 = vrot.slane %v2849, 4
    %v2855 = vsel %vm540, %v2854, %v2837
    %v2856 = vrot.slane %v2837, 4
    %v2857 = vsel %vm540, %v2849, %v2856
    %v2859 = vunpack.c.l.s4 1934713408
    %v2860 = vunpack.c.0.s8 %v2859
    %v2861 = vperm.slane %v2855, %v2860
    %v2863 = vunpack.c.l.s4 1934713408
    %v2864 = vunpack.c.0.s8 %v2863
    %v2865 = vperm.slane %v2857, %v2864
    %v2866 = vrot.slane %v2853, 4
    %v2867 = vsel %vm540, %v2866, %v2841
    %v2868 = vrot.slane %v2841, 4
    %v2869 = vsel %vm540, %v2853, %v2868
    %v2871 = vunpack.c.l.s4 1934713408
    %v2872 = vunpack.c.0.s8 %v2871
    %v2873 = vperm.slane %v2867, %v2872
    %v2875 = vunpack.c.l.s4 1934713408
    %v2876 = vunpack.c.0.s8 %v2875
    %v2877 = vperm.slane %v2869, %v2876
    %v2878 = vrot.slane %v2861, 4
    %v2879 = vsel %vm540, 0.0, %v2878
    %v2880 = vrot.slane %v2865, 4
    %v2881 = vsel %vm540, 0.0, %v2880
    %v2882 = vrot.slane %v2873, 4
    %v2883 = vsel %vm540, 0.0, %v2882
    %v2884 = vrot.slane %v2877, 4
    %v2885 = vsel %vm540, 0.0, %v2884
    %v2886 = vsel %vm540, %v2712, %v2693
    %v2888 = vunpack.c.l.s4 1983009808
    %v2889 = vunpack.c.0.s8 %v2888
    %v2890 = vperm.slane %v2886, %v2889
    %v2891 = vrot.slane %v2713, 4
    %v2892 = vsel %vm540, %v2891, %v2711
    %v2894 = vunpack.c.l.s4 1983009808
    %v2895 = vunpack.c.0.s8 %v2894
    %v2896 = vperm.slane %v2892, %v2895
    %v2897 = vsel %vm540, %v2716, %v2705
    %v2899 = vunpack.c.l.s4 1983009808
    %v2900 = vunpack.c.0.s8 %v2899
    %v2901 = vperm.slane %v2897, %v2900
    %v2902 = vrot.slane %v2717, 4
    %v2903 = vsel %vm540, %v2902, %v2715
    %v2905 = vunpack.c.l.s4 1983009808
    %v2906 = vunpack.c.0.s8 %v2905
    %v2907 = vperm.slane %v2903, %v2906
    %v2908 = vrot.slane %v2896, 4
    %v2909 = vsel %vm540, %v2908, %v2890
    %v2910 = vrot.slane %v2890, 4
    %v2911 = vsel %vm540, %v2896, %v2910
    %v2913 = vunpack.c.l.s4 1934713408
    %v2914 = vunpack.c.0.s8 %v2913
    %v2915 = vperm.slane %v2909, %v2914
    %v2917 = vunpack.c.l.s4 1934713408
    %v2918 = vunpack.c.0.s8 %v2917
    %v2919 = vperm.slane %v2911, %v2918
    %v2920 = vrot.slane %v2907, 4
    %v2921 = vsel %vm540, %v2920, %v2901
    %v2922 = vrot.slane %v2901, 4
    %v2923 = vsel %vm540, %v2907, %v2922
    %v2925 = vunpack.c.l.s4 1934713408
    %v2926 = vunpack.c.0.s8 %v2925
    %v2927 = vperm.slane %v2921, %v2926
    %v2929 = vunpack.c.l.s4 1934713408
    %v2930 = vunpack.c.0.s8 %v2929
    %v2931 = vperm.slane %v2923, %v2930
    %v2932 = vrot.slane %v2927, 4
    %v2933 = vsel %vm540, %v2932, %v2915
    %v2934 = vrot.slane %v2915, 4
    %v2935 = vsel %vm540, %v2927, %v2934
    %v2936 = vrot.slane %v2931, 4
    %v2937 = vsel %vm540, %v2936, %v2919
    %v2938 = vrot.slane %v2919, 4
    %v2939 = vsel %vm540, %v2931, %v2938
    %v2940 = vsel %vm540, %v2768, %v2749
    %v2942 = vunpack.c.l.s4 1983009808
    %v2943 = vunpack.c.0.s8 %v2942
    %v2944 = vperm.slane %v2940, %v2943
    %v2945 = vrot.slane %v2769, 4
    %v2946 = vsel %vm540, %v2945, %v2767
    %v2948 = vunpack.c.l.s4 1983009808
    %v2949 = vunpack.c.0.s8 %v2948
    %v2950 = vperm.slane %v2946, %v2949
    %v2951 = vsel %vm540, %v2772, %v2761
    %v2953 = vunpack.c.l.s4 1983009808
    %v2954 = vunpack.c.0.s8 %v2953
    %v2955 = vperm.slane %v2951, %v2954
    %v2956 = vrot.slane %v2773, 4
    %v2957 = vsel %vm540, %v2956, %v2771
    %v2959 = vunpack.c.l.s4 1983009808
    %v2960 = vunpack.c.0.s8 %v2959
    %v2961 = vperm.slane %v2957, %v2960
    %v2962 = vrot.slane %v2950, 4
    %v2963 = vsel %vm540, %v2962, %v2944
    %v2964 = vrot.slane %v2944, 4
    %v2965 = vsel %vm540, %v2950, %v2964
    %v2967 = vunpack.c.l.s4 1934713408
    %v2968 = vunpack.c.0.s8 %v2967
    %v2969 = vperm.slane %v2963, %v2968
    %v2971 = vunpack.c.l.s4 1934713408
    %v2972 = vunpack.c.0.s8 %v2971
    %v2973 = vperm.slane %v2965, %v2972
    %v2974 = vrot.slane %v2961, 4
    %v2975 = vsel %vm540, %v2974, %v2955
    %v2976 = vrot.slane %v2955, 4
    %v2977 = vsel %vm540, %v2961, %v2976
    %v2979 = vunpack.c.l.s4 1934713408
    %v2980 = vunpack.c.0.s8 %v2979
    %v2981 = vperm.slane %v2975, %v2980
    %v2983 = vunpack.c.l.s4 1934713408
    %v2984 = vunpack.c.0.s8 %v2983
    %v2985 = vperm.slane %v2977, %v2984
    %v2986 = vrot.slane %v2981, 4
    %v2987 = vsel %vm540, %v2986, %v2969
    %v2988 = vrot.slane %v2969, 4
    %v2989 = vsel %vm540, %v2981, %v2988
    %v2990 = vrot.slane %v2985, 4
    %v2991 = vsel %vm540, %v2990, %v2973
    %v2992 = vrot.slane %v2973, 4
    %v2993 = vsel %vm540, %v2985, %v2992
    %v2994 = vsel %vm540, %v2824, %v2805
    %v2996 = vunpack.c.l.s4 1983009808
    %v2997 = vunpack.c.0.s8 %v2996
    %v2998 = vperm.slane %v2994, %v2997
    %v2999 = vrot.slane %v2825, 4
    %v3000 = vsel %vm540, %v2999, %v2823
    %v3002 = vunpack.c.l.s4 1983009808
    %v3003 = vunpack.c.0.s8 %v3002
    %v3004 = vperm.slane %v3000, %v3003
    %v3005 = vsel %vm540, %v2828, %v2817
    %v3007 = vunpack.c.l.s4 1983009808
    %v3008 = vunpack.c.0.s8 %v3007
    %v3009 = vperm.slane %v3005, %v3008
    %v3010 = vrot.slane %v2829, 4
    %v3011 = vsel %vm540, %v3010, %v2827
    %v3013 = vunpack.c.l.s4 1983009808
    %v3014 = vunpack.c.0.s8 %v3013
    %v3015 = vperm.slane %v3011, %v3014
    %v3016 = vrot.slane %v3004, 4
    %v3017 = vsel %vm540, %v3016, %v2998
    %v3018 = vrot.slane %v2998, 4
    %v3019 = vsel %vm540, %v3004, %v3018
    %v3021 = vunpack.c.l.s4 1934713408
    %v3022 = vunpack.c.0.s8 %v3021
    %v3023 = vperm.slane %v3017, %v3022
    %v3025 = vunpack.c.l.s4 1934713408
    %v3026 = vunpack.c.0.s8 %v3025
    %v3027 = vperm.slane %v3019, %v3026
    %v3028 = vrot.slane %v3015, 4
    %v3029 = vsel %vm540, %v3028, %v3009
    %v3030 = vrot.slane %v3009, 4
    %v3031 = vsel %vm540, %v3015, %v3030
    %v3033 = vunpack.c.l.s4 1934713408
    %v3034 = vunpack.c.0.s8 %v3033
    %v3035 = vperm.slane %v3029, %v3034
    %v3037 = vunpack.c.l.s4 1934713408
    %v3038 = vunpack.c.0.s8 %v3037
    %v3039 = vperm.slane %v3031, %v3038
    %v3040 = vrot.slane %v3035, 4
    %v3041 = vsel %vm540, %v3040, %v3023
    %v3042 = vrot.slane %v3023, 4
    %v3043 = vsel %vm540, %v3035, %v3042
    %v3044 = vrot.slane %v3039, 4
    %v3045 = vsel %vm540, %v3044, %v3027
    %v3046 = vrot.slane %v3027, 4
    %v3047 = vsel %vm540, %v3039, %v3046
    %v3048 = vsel %vm540, %v2880, %v2861
    %v3050 = vunpack.c.l.s4 1983009808
    %v3051 = vunpack.c.0.s8 %v3050
    %v3052 = vperm.slane %v3048, %v3051
    %v3053 = vrot.slane %v2881, 4
    %v3054 = vsel %vm540, %v3053, %v2879
    %v3056 = vunpack.c.l.s4 1983009808
    %v3057 = vunpack.c.0.s8 %v3056
    %v3058 = vperm.slane %v3054, %v3057
    %v3059 = vsel %vm540, %v2884, %v2873
    %v3061 = vunpack.c.l.s4 1983009808
    %v3062 = vunpack.c.0.s8 %v3061
    %v3063 = vperm.slane %v3059, %v3062
    %v3064 = vrot.slane %v2885, 4
    %v3065 = vsel %vm540, %v3064, %v2883
    %v3067 = vunpack.c.l.s4 1983009808
    %v3068 = vunpack.c.0.s8 %v3067
    %v3069 = vperm.slane %v3065, %v3068
    %v3070 = vrot.slane %v3058, 4
    %v3071 = vsel %vm540, %v3070, %v3052
    %v3072 = vrot.slane %v3052, 4
    %v3073 = vsel %vm540, %v3058, %v3072
    %v3075 = vunpack.c.l.s4 1934713408
    %v3076 = vunpack.c.0.s8 %v3075
    %v3077 = vperm.slane %v3071, %v3076
    %v3079 = vunpack.c.l.s4 1934713408
    %v3080 = vunpack.c.0.s8 %v3079
    %v3081 = vperm.slane %v3073, %v3080
    %v3082 = vrot.slane %v3069, 4
    %v3083 = vsel %vm540, %v3082, %v3063
    %v3084 = vrot.slane %v3063, 4
    %v3085 = vsel %vm540, %v3069, %v3084
    %v3087 = vunpack.c.l.s4 1934713408
    %v3088 = vunpack.c.0.s8 %v3087
    %v3089 = vperm.slane %v3083, %v3088
    %v3091 = vunpack.c.l.s4 1934713408
    %v3092 = vunpack.c.0.s8 %v3091
    %v3093 = vperm.slane %v3085, %v3092
    %v3094 = vrot.slane %v3089, 4
    %v3095 = vsel %vm540, %v3094, %v3077
    %v3096 = vrot.slane %v3077, 4
    %v3097 = vsel %vm540, %v3089, %v3096
    %v3098 = vrot.slane %v3093, 4
    %v3099 = vsel %vm540, %v3098, %v3081
    %v3100 = vrot.slane %v3081, 4
    %v3101 = vsel %vm540, %v3093, %v3100
    %3106 = vrot.lane.b32.xlu0 %v2935, 32
    %v3107 = vpop.permute.xlu0 %3106
    %3108 = vrot.lane.b32.xlu0 %v2989, 32
    %v3109 = vpop.permute.xlu0 %3108
    %3110 = vrot.lane.b32.xlu0 %v3043, 32
    %v3111 = vpop.permute.xlu0 %3110
    %3112 = vrot.lane.b32.xlu0 %v3097, 32
    %v3113 = vpop.permute.xlu0 %3112
    %3122 = vrot.lane.b32.xlu0 %v2937, 64
    %v3123 = vpop.permute.xlu0 %3122
    %3124 = vrot.lane.b32.xlu0 %v2991, 64
    %v3125 = vpop.permute.xlu0 %3124
    %3126 = vrot.lane.b32.xlu0 %v3045, 64
    %v3127 = vpop.permute.xlu0 %3126
    %3128 = vrot.lane.b32.xlu0 %v3099, 64
    %v3129 = vpop.permute.xlu0 %3128
    %3138 = vrot.lane.b32.xlu0 %v2939, 96
    %v3139 = vpop.permute.xlu0 %3138
    %3140 = vrot.lane.b32.xlu0 %v2993, 96
    %v3141 = vpop.permute.xlu0 %3140
    %3142 = vrot.lane.b32.xlu0 %v3047, 96
    %v3143 = vpop.permute.xlu0 %3142
    %3144 = vrot.lane.b32.xlu0 %v3101, 96
    %v3145 = vpop.permute.xlu0 %3144
    %v3150 = vsel %vm1998, %v2933, %v3107
    %v3151 = vsel %vm1998, %v2987, %v3109
    %v3152 = vsel %vm1998, %v3041, %v3111
    %v3153 = vsel %vm1998, %v3095, %v3113
    %vm3154 = vcmask 523264
    %v3155 = vsel %vm3154, %v3150, %v3123
    %v3156 = vsel %vm3154, %v3151, %v3125
    %v3157 = vsel %vm3154, %v3152, %v3127
    %v3158 = vsel %vm3154, %v3153, %v3129
    %vm3159 = vcmask 785408
    %v3160 = vsel %vm3159, %v3155, %v3139
    %v3161 = vsel %vm3159, %v3156, %v3141
    %v3162 = vsel %vm3159, %v3157, %v3143
    %v3163 = vsel %vm3159, %v3158, %v3145
    %v3164 = vpack.c.bf16 %v3161, %v3160
    %v3165 = vpack.c.bf16 %v3163, %v3162
    %v3166 = vld [vmem:[#allocation10] sm:$0xf]
    %v3167 = vld [vmem:[#allocation10 + $0x4] sm:$0xf]
    %v3168 = vld [vmem:[#allocation10 + $0x8] sm:$0xf]
    %v3169 = vld [vmem:[#allocation10 + $0xc] sm:$0xf]
    %v3170 = vld [vmem:[#allocation10 + $0x10] sm:$0xf]
    %v3171 = vld [vmem:[#allocation10 + $0x14] sm:$0xf]
    %v3172 = vld [vmem:[#allocation10 + $0x18] sm:$0xf]
    %v3173 = vld [vmem:[#allocation10 + $0x1c] sm:$0xf]
    %v3174 = vld [vmem:[#allocation10 + $0x20] sm:$0xf]
    %v3175 = vld [vmem:[#allocation10 + $0x24] sm:$0xf]
    %v3176 = vld [vmem:[#allocation10 + $0x28] sm:$0xf]
    %v3177 = vld [vmem:[#allocation10 + $0x2c] sm:$0xf]
    %v3178 = vld [vmem:[#allocation10 + $0x30] sm:$0xf]
    %v3179 = vld [vmem:[#allocation10 + $0x34] sm:$0xf]
    %v3180 = vld [vmem:[#allocation10 + $0x38] sm:$0xf]
    %v3181 = vld [vmem:[#allocation10 + $0x3c] sm:$0xf]
    %v3182 = vld [vmem:[#allocation11] sm:$0x1]
    %v3184 = vperm.slane %v3182, 0
    %v3202 = vunpack.c.l.b16 %v3166
    %v3203 = vunpack.c.l.b16 %v3167
    %v3204 = vunpack.c.l.b16 %v3168
    %v3205 = vunpack.c.l.b16 %v3169
    %v3206 = vunpack.c.l.b16 %v3170
    %v3207 = vunpack.c.l.b16 %v3171
    %v3208 = vunpack.c.l.b16 %v3172
    %v3209 = vunpack.c.l.b16 %v3173
    %v3210 = vunpack.c.l.b16 %v3174
    %v3211 = vunpack.c.l.b16 %v3175
    %v3212 = vunpack.c.l.b16 %v3176
    %v3213 = vunpack.c.l.b16 %v3177
    %v3214 = vunpack.c.l.b16 %v3178
    %v3215 = vunpack.c.l.b16 %v3179
    %v3216 = vunpack.c.l.b16 %v3180
    %v3217 = vunpack.c.l.b16 %v3181
    %v3218 = vpack.c.b16 %v3203, %v3202
    %v3219 = vpack.c.b16 %v3205, %v3204
    %v3220 = vpack.c.b16 %v3207, %v3206
    %v3221 = vpack.c.b16 %v3209, %v3208
    %v3222 = vpack.c.b16 %v3211, %v3210
    %v3223 = vpack.c.b16 %v3213, %v3212
    %v3224 = vpack.c.b16 %v3215, %v3214
    %v3225 = vpack.c.b16 %v3217, %v3216
    %3234 = vmatpush.bf16.msra.mxu0 %v3225
    %3235 = vmatpush.bf16.msra.mxu0 %v3224
    %3236 = vmatpush.bf16.msra.mxu0 %v3223
    %3237 = vmatpush.bf16.msra.mxu0 %v3222
    %3238 = vmatpush.bf16.msra.mxu0 %v3221
    %3239 = vmatpush.bf16.msra.mxu0 %v3220
    %3240 = vmatpush.bf16.msra.mxu0 %v3219
    %3241 = vmatpush.bf16.msra.mxu0 %v3218
    %3242 = vmatmul.bf16.gmra.mxu0 %v3164
    %v3243 = vpop.f32.mrf.mxu0
    %v3244 = vadd.f32 %v3184, %v3243
    %v3245 = vpop.f32.mrf.mxu0
    %v3246 = vadd.f32 %v3184, %v3245
    %3247 = vmatmul.bf16.gmra.mxu0 %v3165
    %v3248 = vpop.f32.mrf.mxu0
    %v3249 = vadd.f32 %v3184, %v3248
    %v3250 = vpop.f32.mrf.mxu0
    %v3251 = vadd.f32 %v3184, %v3250
    %3252 = vdwg.mxu0
    %v3253 = vadd.f32 %v165, %v3244
    %v3254 = vadd.f32 %v166, %v3246
    %v3255 = vadd.f32 %v167, %v3249
    %v3256 = vadd.f32 %v168, %v3251
    %v3257 = vld [vmem:[%s7] sm:$0x1]
    %v3258 = vld [vmem:[%s8] sm:$0x1]
    %3259 = vadd.xlane.f32.xlu0 %v3253
    %v3260 = vpop.xlane.xlu0 %3259
    %3261 = vadd.xlane.f32.xlu0 %v3254
    %v3262 = vpop.xlane.xlu0 %3261
    %3263 = vadd.xlane.f32.xlu0 %v3255
    %v3264 = vpop.xlane.xlu0 %3263
    %3265 = vadd.xlane.f32.xlu0 %v3256
    %v3266 = vpop.xlane.xlu0 %3265
    %v3267 = vmul.f32 %v3260, %v185
    %v3268 = vmul.f32 %v3262, %v185
    %v3269 = vmul.f32 %v3264, %v185
    %v3270 = vmul.f32 %v3266, %v185
    %v3271 = vsub.f32 %v3253, %v3267
    %v3272 = vsub.f32 %v3254, %v3268
    %v3273 = vsub.f32 %v3255, %v3269
    %v3274 = vsub.f32 %v3256, %v3270
    %v3275 = vmul.f32 %v3271, %v3271
    %v3276 = vmul.f32 %v3272, %v3272
    %v3277 = vmul.f32 %v3273, %v3273
    %v3278 = vmul.f32 %v3274, %v3274
    %3279 = vadd.xlane.f32.xlu0 %v3275
    %v3280 = vpop.xlane.xlu0 %3279
    %3281 = vadd.xlane.f32.xlu0 %v3276
    %v3282 = vpop.xlane.xlu0 %3281
    %3283 = vadd.xlane.f32.xlu0 %v3277
    %v3284 = vpop.xlane.xlu0 %3283
    %3285 = vadd.xlane.f32.xlu0 %v3278
    %v3286 = vpop.xlane.xlu0 %3285
    %v3287 = vmul.f32 %v3280, %v185
    %v3288 = vmul.f32 %v3282, %v185
    %v3289 = vmul.f32 %v3284, %v185
    %v3290 = vmul.f32 %v3286, %v185
    %v3291 = vadd.f32 %v3287, 1e-05
    %v3292 = vadd.f32 %v3288, 1e-05
    %v3293 = vadd.f32 %v3289, 1e-05
    %v3294 = vadd.f32 %v3290, 1e-05
    %v3295 = vrsqrt.pop %v3291
    %v3296 = vmul.f32 %v3295, %v3291
    %v3297 = vmul.f32 %v3296, %v3295
    %v3298 = vmul.f32 0.5, %v3297
    %v3299 = vsub.f32 1.5, %v3298
    %v3300 = vmul.f32 %v3295, %v3299
    %vm3301 = vweird.f32 %v3291
    %vm3302 = vweird.f32 %v3295
    %vm3303 = vmor %vm3301, %vm3302
    %v3304 = vsel %vm3303, %v3295, %v3300
    %v3305 = vrsqrt.pop %v3292
    %v3306 = vmul.f32 %v3305, %v3292
    %v3307 = vmul.f32 %v3306, %v3305
    %v3308 = vmul.f32 0.5, %v3307
    %v3309 = vsub.f32 1.5, %v3308
    %v3310 = vmul.f32 %v3305, %v3309
    %vm3311 = vweird.f32 %v3292
    %vm3312 = vweird.f32 %v3305
    %vm3313 = vmor %vm3311, %vm3312
    %v3314 = vsel %vm3313, %v3305, %v3310
    %v3315 = vrsqrt.pop %v3293
    %v3316 = vmul.f32 %v3315, %v3293
    %v3317 = vmul.f32 %v3316, %v3315
    %v3318 = vmul.f32 0.5, %v3317
    %v3319 = vsub.f32 1.5, %v3318
    %v3320 = vmul.f32 %v3315, %v3319
    %vm3321 = vweird.f32 %v3293
    %vm3322 = vweird.f32 %v3315
    %vm3323 = vmor %vm3321, %vm3322
    %v3324 = vsel %vm3323, %v3315, %v3320
    %v3325 = vrsqrt.pop %v3294
    %v3326 = vmul.f32 %v3325, %v3294
    %v3327 = vmul.f32 %v3326, %v3325
    %v3328 = vmul.f32 0.5, %v3327
    %v3329 = vsub.f32 1.5, %v3328
    %v3330 = vmul.f32 %v3325, %v3329
    %vm3331 = vweird.f32 %v3294
    %vm3332 = vweird.f32 %v3325
    %vm3333 = vmor %vm3331, %vm3332
    %v3334 = vsel %vm3333, %v3325, %v3330
    %v3335 = vmul.f32 %v3271, %v3304
    %v3336 = vmul.f32 %v3272, %v3314
    %v3337 = vmul.f32 %v3273, %v3324
    %v3338 = vmul.f32 %v3274, %v3334
    %v3340 = vperm.slane %v3257, 0
    %v3342 = vmul.f32 %v3335, %v3340
    %v3343 = vmul.f32 %v3336, %v3340
    %v3344 = vmul.f32 %v3337, %v3340
    %v3345 = vmul.f32 %v3338, %v3340
    %v3347 = vperm.slane %v3258, 0
    %v3349 = vadd.f32 %v3342, %v3347
    %v3350 = vadd.f32 %v3343, %v3347
    %v3351 = vadd.f32 %v3344, %v3347
    %v3352 = vadd.f32 %v3345, %v3347
    %v3353 = vpack.c.bf16 %v3350, %v3349
    %v3354 = vpack.c.bf16 %v3352, %v3351
    %v3355 = vld [vmem:[#allocation13] sm:$0xff]
    %v3356 = vld [vmem:[#allocation13 + $0x8] sm:$0xff]
    %v3357 = vld [vmem:[#allocation13 + $0x10] sm:$0xff]
    %v3358 = vld [vmem:[#allocation13 + $0x18] sm:$0xff]
    %v3359 = vld [vmem:[#allocation13 + $0x20] sm:$0xff]
    %v3360 = vld [vmem:[#allocation13 + $0x28] sm:$0xff]
    %v3361 = vld [vmem:[#allocation13 + $0x30] sm:$0xff]
    %v3362 = vld [vmem:[#allocation13 + $0x38] sm:$0xff]
    %v3363 = vld [vmem:[#allocation13 + $0x40] sm:$0xff]
    %v3364 = vld [vmem:[#allocation13 + $0x48] sm:$0xff]
    %v3365 = vld [vmem:[#allocation13 + $0x50] sm:$0xff]
    %v3366 = vld [vmem:[#allocation13 + $0x58] sm:$0xff]
    %v3367 = vld [vmem:[#allocation13 + $0x60] sm:$0xff]
    %v3368 = vld [vmem:[#allocation13 + $0x68] sm:$0xff]
    %v3369 = vld [vmem:[#allocation13 + $0x70] sm:$0xff]
    %v3370 = vld [vmem:[#allocation13 + $0x78] sm:$0xff]
    %v3371 = vld [vmem:[%s10] sm:$0x3]
    %v3373 = vperm.slane %v3371, 0
    %v3374 = vperm.slane %v3371, 1
    %v3393 = vunpack.c.l.b16 %v3355
    %v3394 = vunpack.c.h.b16 %v3355
    %v3395 = vunpack.c.l.b16 %v3356
    %v3396 = vunpack.c.h.b16 %v3356
    %v3397 = vunpack.c.l.b16 %v3357
    %v3398 = vunpack.c.h.b16 %v3357
    %v3399 = vunpack.c.l.b16 %v3358
    %v3400 = vunpack.c.h.b16 %v3358
    %v3401 = vunpack.c.l.b16 %v3359
    %v3402 = vunpack.c.h.b16 %v3359
    %v3403 = vunpack.c.l.b16 %v3360
    %v3404 = vunpack.c.h.b16 %v3360
    %v3405 = vunpack.c.l.b16 %v3361
    %v3406 = vunpack.c.h.b16 %v3361
    %v3407 = vunpack.c.l.b16 %v3362
    %v3408 = vunpack.c.h.b16 %v3362
    %v3409 = vunpack.c.l.b16 %v3363
    %v3410 = vunpack.c.h.b16 %v3363
    %v3411 = vunpack.c.l.b16 %v3364
    %v3412 = vunpack.c.h.b16 %v3364
    %v3413 = vunpack.c.l.b16 %v3365
    %v3414 = vunpack.c.h.b16 %v3365
    %v3415 = vunpack.c.l.b16 %v3366
    %v3416 = vunpack.c.h.b16 %v3366
    %v3417 = vunpack.c.l.b16 %v3367
    %v3418 = vunpack.c.h.b16 %v3367
    %v3419 = vunpack.c.l.b16 %v3368
    %v3420 = vunpack.c.h.b16 %v3368
    %v3421 = vunpack.c.l.b16 %v3369
    %v3422 = vunpack.c.h.b16 %v3369
    %v3423 = vunpack.c.l.b16 %v3370
    %v3424 = vunpack.c.h.b16 %v3370
    %v3425 = vpack.c.b16 %v3395, %v3393
    %v3426 = vpack.c.b16 %v3396, %v3394
    %v3427 = vpack.c.b16 %v3399, %v3397
    %v3428 = vpack.c.b16 %v3400, %v3398
    %v3429 = vpack.c.b16 %v3403, %v3401
    %v3430 = vpack.c.b16 %v3404, %v3402
    %v3431 = vpack.c.b16 %v3407, %v3405
    %v3432 = vpack.c.b16 %v3408, %v3406
    %v3433 = vpack.c.b16 %v3411, %v3409
    %v3434 = vpack.c.b16 %v3412, %v3410
    %v3435 = vpack.c.b16 %v3415, %v3413
    %v3436 = vpack.c.b16 %v3416, %v3414
    %v3437 = vpack.c.b16 %v3419, %v3417
    %v3438 = vpack.c.b16 %v3420, %v3418
    %v3439 = vpack.c.b16 %v3423, %v3421
    %v3440 = vpack.c.b16 %v3424, %v3422
    %3457 = vmatpush.bf16.msra.mxu0 %v3439
    %3458 = vmatpush.bf16.msra.mxu0 %v3437
    %3459 = vmatpush.bf16.msra.mxu0 %v3435
    %3460 = vmatpush.bf16.msra.mxu0 %v3433
    %3461 = vmatpush.bf16.msra.mxu0 %v3431
    %3462 = vmatpush.bf16.msra.mxu0 %v3429
    %3463 = vmatpush.bf16.msra.mxu0 %v3427
    %3464 = vmatpush.bf16.msra.mxu0 %v3425
    %3465 = vmatmul.bf16.gmra.mxu0 %v3353
    %v3466 = vpop.f32.mrf.mxu0
    %v3467 = vadd.f32 %v3373, %v3466
    %v3468 = vpop.f32.mrf.mxu0
    %v3469 = vadd.f32 %v3373, %v3468
    %3470 = vmatmul.bf16.gmra.mxu0 %v3354
    %v3471 = vpop.f32.mrf.mxu0
    %v3472 = vadd.f32 %v3373, %v3471
    %v3473 = vpop.f32.mrf.mxu0
    %v3474 = vadd.f32 %v3373, %v3473
    %3475 = vdwg.mxu0
    %3476 = vmatpush.bf16.msra.mxu0 %v3440
    %3477 = vmatpush.bf16.msra.mxu0 %v3438
    %3478 = vmatpush.bf16.msra.mxu0 %v3436
    %3479 = vmatpush.bf16.msra.mxu0 %v3434
    %3480 = vmatpush.bf16.msra.mxu0 %v3432
    %3481 = vmatpush.bf16.msra.mxu0 %v3430
    %3482 = vmatpush.bf16.msra.mxu0 %v3428
    %3483 = vmatpush.bf16.msra.mxu0 %v3426
    %3484 = vmatmul.bf16.gmra.mxu0 %v3353
    %v3485 = vpop.f32.mrf.mxu0
    %v3486 = vadd.f32 %v3374, %v3485
    %v3487 = vpop.f32.mrf.mxu0
    %v3488 = vadd.f32 %v3374, %v3487
    %3489 = vmatmul.bf16.gmra.mxu0 %v3354
    %v3490 = vpop.f32.mrf.mxu0
    %v3491 = vadd.f32 %v3374, %v3490
    %v3492 = vpop.f32.mrf.mxu0
    %v3493 = vadd.f32 %v3374, %v3492
    %3494 = vdwg.mxu0
    %v3495 = vmul.f32 %v3467, 0.5
    %v3496 = vmul.f32 %v3486, 0.5
    %v3497 = vmul.f32 %v3469, 0.5
    %v3498 = vmul.f32 %v3488, 0.5
    %v3499 = vmul.f32 %v3472, 0.5
    %v3500 = vmul.f32 %v3491, 0.5
    %v3501 = vmul.f32 %v3474, 0.5
    %v3502 = vmul.f32 %v3493, 0.5
    %v3503 = vmul.f32 %v3467, 0.044715
    %v3504 = vmul.f32 %v3486, 0.044715
    %v3505 = vmul.f32 %v3469, 0.044715
    %v3506 = vmul.f32 %v3488, 0.044715
    %v3507 = vmul.f32 %v3472, 0.044715
    %v3508 = vmul.f32 %v3491, 0.044715
    %v3509 = vmul.f32 %v3474, 0.044715
    %v3510 = vmul.f32 %v3493, 0.044715
    %v3511 = vmul.f32 %v3503, %v3467
    %v3512 = vmul.f32 %v3504, %v3486
    %v3513 = vmul.f32 %v3505, %v3469
    %v3514 = vmul.f32 %v3506, %v3488
    %v3515 = vmul.f32 %v3507, %v3472
    %v3516 = vmul.f32 %v3508, %v3491
    %v3517 = vmul.f32 %v3509, %v3474
    %v3518 = vmul.f32 %v3510, %v3493
    %v3519 = vmul.f32 %v3511, %v3467
    %v3520 = vmul.f32 %v3512, %v3486
    %v3521 = vmul.f32 %v3513, %v3469
    %v3522 = vmul.f32 %v3514, %v3488
    %v3523 = vmul.f32 %v3515, %v3472
    %v3524 = vmul.f32 %v3516, %v3491
    %v3525 = vmul.f32 %v3517, %v3474
    %v3526 = vmul.f32 %v3518, %v3493
    %v3527 = vadd.f32 %v3467, %v3519
    %v3528 = vadd.f32 %v3486, %v3520
    %v3529 = vadd.f32 %v3469, %v3521
    %v3530 = vadd.f32 %v3488, %v3522
    %v3531 = vadd.f32 %v3472, %v3523
    %v3532 = vadd.f32 %v3491, %v3524
    %v3533 = vadd.f32 %v3474, %v3525
    %v3534 = vadd.f32 %v3493, %v3526
    %v3535 = vmul.f32 %v3527, 0.7978846
    %v3536 = vmul.f32 %v3528, 0.7978846
    %v3537 = vmul.f32 %v3529, 0.7978846
    %v3538 = vmul.f32 %v3530, 0.7978846
    %v3539 = vmul.f32 %v3531, 0.7978846
    %v3540 = vmul.f32 %v3532, 0.7978846
    %v3541 = vmul.f32 %v3533, 0.7978846
    %v3542 = vmul.f32 %v3534, 0.7978846
    %v3543 = vtanh.pop %v3535
    %v3544 = vtanh.pop %v3536
    %v3545 = vtanh.pop %v3537
    %v3546 = vtanh.pop %v3538
    %v3547 = vtanh.pop %v3539
    %v3548 = vtanh.pop %v3540
    %v3549 = vtanh.pop %v3541
    %v3550 = vtanh.pop %v3542
    %v3551 = vadd.f32 %v3543, 1.0
    %v3552 = vadd.f32 %v3544, 1.0
    %v3553 = vadd.f32 %v3545, 1.0
    %v3554 = vadd.f32 %v3546, 1.0
    %v3555 = vadd.f32 %v3547, 1.0
    %v3556 = vadd.f32 %v3548, 1.0
    %v3557 = vadd.f32 %v3549, 1.0
    %v3558 = vadd.f32 %v3550, 1.0
    %v3559 = vmul.f32 %v3495, %v3551
    %v3560 = vmul.f32 %v3496, %v3552
    %v3561 = vmul.f32 %v3497, %v3553
    %v3562 = vmul.f32 %v3498, %v3554
    %v3563 = vmul.f32 %v3499, %v3555
    %v3564 = vmul.f32 %v3500, %v3556
    %v3565 = vmul.f32 %v3501, %v3557
    %v3566 = vmul.f32 %v3502, %v3558
    %v3567 = vpack.c.bf16 %v3561, %v3559
    %v3568 = vpack.c.bf16 %v3562, %v3560
    %v3569 = vpack.c.bf16 %v3565, %v3563
    %v3570 = vpack.c.bf16 %v3566, %v3564
    %v3571 = vld [vmem:[#allocation14] sm:$0xf]
    %v3572 = vld [vmem:[#allocation14 + $0x4] sm:$0xf]
    %v3573 = vld [vmem:[#allocation14 + $0x8] sm:$0xf]
    %v3574 = vld [vmem:[#allocation14 + $0xc] sm:$0xf]
    %v3575 = vld [vmem:[#allocation14 + $0x10] sm:$0xf]
    %v3576 = vld [vmem:[#allocation14 + $0x14] sm:$0xf]
    %v3577 = vld [vmem:[#allocation14 + $0x18] sm:$0xf]
    %v3578 = vld [vmem:[#allocation14 + $0x1c] sm:$0xf]
    %v3579 = vld [vmem:[#allocation14 + $0x20] sm:$0xf]
    %v3580 = vld [vmem:[#allocation14 + $0x24] sm:$0xf]
    %v3581 = vld [vmem:[#allocation14 + $0x28] sm:$0xf]
    %v3582 = vld [vmem:[#allocation14 + $0x2c] sm:$0xf]
    %v3583 = vld [vmem:[#allocation14 + $0x30] sm:$0xf]
    %v3584 = vld [vmem:[#allocation14 + $0x34] sm:$0xf]
    %v3585 = vld [vmem:[#allocation14 + $0x38] sm:$0xf]
    %v3586 = vld [vmem:[#allocation14 + $0x3c] sm:$0xf]
    %v3587 = vld [vmem:[#allocation14 + $0x40] sm:$0xf]
    %v3588 = vld [vmem:[#allocation14 + $0x44] sm:$0xf]
    %v3589 = vld [vmem:[#allocation14 + $0x48] sm:$0xf]
    %v3590 = vld [vmem:[#allocation14 + $0x4c] sm:$0xf]
    %v3591 = vld [vmem:[#allocation14 + $0x50] sm:$0xf]
    %v3592 = vld [vmem:[#allocation14 + $0x54] sm:$0xf]
    %v3593 = vld [vmem:[#allocation14 + $0x58] sm:$0xf]
    %v3594 = vld [vmem:[#allocation14 + $0x5c] sm:$0xf]
    %v3595 = vld [vmem:[#allocation14 + $0x60] sm:$0xf]
    %v3596 = vld [vmem:[#allocation14 + $0x64] sm:$0xf]
    %v3597 = vld [vmem:[#allocation14 + $0x68] sm:$0xf]
    %v3598 = vld [vmem:[#allocation14 + $0x6c] sm:$0xf]
    %v3599 = vld [vmem:[#allocation14 + $0x70] sm:$0xf]
    %v3600 = vld [vmem:[#allocation14 + $0x74] sm:$0xf]
    %v3601 = vld [vmem:[#allocation14 + $0x78] sm:$0xf]
    %v3602 = vld [vmem:[#allocation14 + $0x7c] sm:$0xf]
    %v3603 = vld [vmem:[%s12] sm:$0x1]
    %v3605 = vperm.slane %v3603, 0
    %v3639 = vunpack.c.l.b16 %v3571
    %v3640 = vunpack.c.l.b16 %v3572
    %v3641 = vunpack.c.l.b16 %v3573
    %v3642 = vunpack.c.l.b16 %v3574
    %v3643 = vunpack.c.l.b16 %v3575
    %v3644 = vunpack.c.l.b16 %v3576
    %v3645 = vunpack.c.l.b16 %v3577
    %v3646 = vunpack.c.l.b16 %v3578
    %v3647 = vunpack.c.l.b16 %v3579
    %v3648 = vunpack.c.l.b16 %v3580
    %v3649 = vunpack.c.l.b16 %v3581
    %v3650 = vunpack.c.l.b16 %v3582
    %v3651 = vunpack.c.l.b16 %v3583
    %v3652 = vunpack.c.l.b16 %v3584
    %v3653 = vunpack.c.l.b16 %v3585
    %v3654 = vunpack.c.l.b16 %v3586
    %v3655 = vunpack.c.l.b16 %v3587
    %v3656 = vunpack.c.l.b16 %v3588
    %v3657 = vunpack.c.l.b16 %v3589
    %v3658 = vunpack.c.l.b16 %v3590
    %v3659 = vunpack.c.l.b16 %v3591
    %v3660 = vunpack.c.l.b16 %v3592
    %v3661 = vunpack.c.l.b16 %v3593
    %v3662 = vunpack.c.l.b16 %v3594
    %v3663 = vunpack.c.l.b16 %v3595
    %v3664 = vunpack.c.l.b16 %v3596
    %v3665 = vunpack.c.l.b16 %v3597
    %v3666 = vunpack.c.l.b16 %v3598
    %v3667 = vunpack.c.l.b16 %v3599
    %v3668 = vunpack.c.l.b16 %v3600
    %v3669 = vunpack.c.l.b16 %v3601
    %v3670 = vunpack.c.l.b16 %v3602
    %v3671 = vpack.c.b16 %v3640, %v3639
    %v3672 = vpack.c.b16 %v3642, %v3641
    %v3673 = vpack.c.b16 %v3644, %v3643
    %v3674 = vpack.c.b16 %v3646, %v3645
    %v3675 = vpack.c.b16 %v3648, %v3647
    %v3676 = vpack.c.b16 %v3650, %v3649
    %v3677 = vpack.c.b16 %v3652, %v3651
    %v3678 = vpack.c.b16 %v3654, %v3653
    %v3679 = vpack.c.b16 %v3656, %v3655
    %v3680 = vpack.c.b16 %v3658, %v3657
    %v3681 = vpack.c.b16 %v3660, %v3659
    %v3682 = vpack.c.b16 %v3662, %v3661
    %v3683 = vpack.c.b16 %v3664, %v3663
    %v3684 = vpack.c.b16 %v3666, %v3665
    %v3685 = vpack.c.b16 %v3668, %v3667
    %v3686 = vpack.c.b16 %v3670, %v3669
    %3703 = vmatpush.bf16.msra.mxu0 %v3678
    %3704 = vmatpush.bf16.msra.mxu0 %v3677
    %3705 = vmatpush.bf16.msra.mxu0 %v3676
    %3706 = vmatpush.bf16.msra.mxu0 %v3675
    %3707 = vmatpush.bf16.msra.mxu0 %v3674
    %3708 = vmatpush.bf16.msra.mxu0 %v3673
    %3709 = vmatpush.bf16.msra.mxu0 %v3672
    %3710 = vmatpush.bf16.msra.mxu0 %v3671
    %3711 = vmatmul.bf16.gmra.mxu0 %v3567
    %v3712 = vpop.f32.mrf.mxu0
    %v3713 = vadd.f32 %v3605, %v3712
    %v3714 = vpop.f32.mrf.mxu0
    %v3715 = vadd.f32 %v3605, %v3714
    %3716 = vmatmul.bf16.gmra.mxu0 %v3569
    %v3717 = vpop.f32.mrf.mxu0
    %v3718 = vadd.f32 %v3605, %v3717
    %v3719 = vpop.f32.mrf.mxu0
    %v3720 = vadd.f32 %v3605, %v3719
    %3721 = vdwg.mxu0
    %3722 = vmatpush.bf16.msra.mxu0 %v3686
    %3723 = vmatpush.bf16.msra.mxu0 %v3685
    %3724 = vmatpush.bf16.msra.mxu0 %v3684
    %3725 = vmatpush.bf16.msra.mxu0 %v3683
    %3726 = vmatpush.bf16.msra.mxu0 %v3682
    %3727 = vmatpush.bf16.msra.mxu0 %v3681
    %3728 = vmatpush.bf16.msra.mxu0 %v3680
    %3729 = vmatpush.bf16.msra.mxu0 %v3679
    %3730 = vmatmul.bf16.gmra.mxu0 %v3568
    %v3731 = vpop.f32.mrf.mxu0
    %v3732 = vadd.f32 %v3713, %v3731
    %v3733 = vpop.f32.mrf.mxu0
    %v3734 = vadd.f32 %v3715, %v3733
    %3735 = vmatmul.bf16.gmra.mxu0 %v3570
    %v3736 = vpop.f32.mrf.mxu0
    %v3737 = vadd.f32 %v3718, %v3736
    %v3738 = vpop.f32.mrf.mxu0
    %v3739 = vadd.f32 %v3720, %v3738
    %3740 = vdwg.mxu0
    %v3741 = vadd.f32 %v3253, %v3732
    %v3742 = vadd.f32 %v3254, %v3734
    %v3743 = vadd.f32 %v3255, %v3737
    %v3744 = vadd.f32 %v3256, %v3739
    %3745 = vst [vmem:[#allocation16] sm:$0xff] %v3741
    %3746 = vst [vmem:[#allocation16 + $0x8] sm:$0xff] %v3742
    %3747 = vst [vmem:[#allocation16 + $0x10] sm:$0xff] %v3743
    %3748 = vst [vmem:[#allocation16 + $0x18] sm:$0xff] %v3744
    // Predicated region
    $region86: #{tpu_custom_call.1} parent=1 // pred_check
      _
    $region87: #{tpu_custom_call.1} parent=1 // pred_check_branch
      %3750 = sbr.rel (0) target = $region89
    $region88: #{tpu_custom_call.1} parent=1 // pred_region
      %3752 = vsyncadd [#allocation4], 0
      %s3753 = sshll.u32 [#allocation16], 4
      %s3754 = int_to_ptr.vmem [resolvable:$true] %s3753
      %s3755 = sshll.u32 %s13, 4
      %s3756 = int_to_ptr.hbm [resolvable:$true] %s3755
      %3761 = dma.vmem_to_hbm [thread:$0]  %s3754, 512, %s3756, [#allocation4], 128, 128, 8
    $region89: #{tpu_custom_call.1} parent=1 // pred_fallthru
      _
    // Predicated region
    $region90: #{tpu_custom_call.1} parent=1 // pred_check
      _
    $region91: #{tpu_custom_call.1} parent=1 // pred_check_branch
      %3763 = sbr.rel (0) target = $region93
    $region92: #{tpu_custom_call.1} parent=1 // pred_region
      %3765 = dma.done [#allocation4], 512
    $region93: #{tpu_custom_call.1} parent=1 // pred_fallthru
      _
    %3766 = vsyncpa [#allocation3], 1
    %3767 = vsyncpa [#allocation6], 1
    %3768 = vsyncpa [#allocation9], 1
    %3769 = vsyncpa [#allocation12], 1
    %3770 = vsyncpa [#allocation15], 1
    %3771 = vsyncpa [#allocation4], 1

</llo_original>
